<compile_context>
chip_gen: v7x
topology: tpu7x:2x2x1
jax: 0.10.0
libtpu: 0.0.40
codegen_flags: <defaults>
</compile_context>

<pallas_src>
from functools import partial
import random

import jax
import jax.numpy as jnp
from jax.experimental import pallas as pl
from jax.experimental.pallas import tpu as pltpu


def _sigmoid_fast(v):
    # sigmoid(v) == 0.5 * tanh(0.5 * v) + 0.5  (single EUP transcendental)
    return 0.5 * jnp.tanh(0.5 * v) + 0.5


# ----------------------------------------------------------------------------
# Pallas kernel: encoder GRU + autoregressive decoder GRU + linear head, all
# resident in VMEM for one batch block.
# ----------------------------------------------------------------------------
def seq2seq_gru_kernel(L, M, W, D,
                       tf_ref,                                  # SMEM (M,) i32
                       x_ref, y_ref,
                       wir_e_ref, wiz_e_ref, win_e_ref,
                       whr_e_ref, whz_e_ref, whn_e_ref,
                       br_e_ref, bz_e_ref, bin_e_ref, bhn_e_ref,
                       wir_d_ref, wiz_d_ref, win_d_ref,
                       whr_d_ref, whz_d_ref, whn_d_ref,
                       br_d_ref, bz_d_ref, bin_d_ref, bhn_d_ref,
                       wlp_ref, blp_ref,
                       out_ref):
    f32 = jnp.float32
    BB = x_ref.shape[0]

    x = x_ref[...].astype(f32)                                  # (BB, L, C)
    C = x.shape[-1]

    # ---------------- encoder GRU over L steps ----------------
    # Hoisted input projections: one large matmul per gate; only h-dependent
    # matmuls remain inside the serial loop.
    xf = x.reshape(BB * L, C)
    xr = (jnp.dot(xf, wir_e_ref[...], preferred_element_type=f32)
          + br_e_ref[...]).reshape(BB, L, D)
    xz = (jnp.dot(xf, wiz_e_ref[...], preferred_element_type=f32)
          + bz_e_ref[...]).reshape(BB, L, D)
    xn = (jnp.dot(xf, win_e_ref[...], preferred_element_type=f32)
          + bin_e_ref[...]).reshape(BB, L, D)

    whr_e = whr_e_ref[...]
    whz_e = whz_e_ref[...]
    whn_e = whn_e_ref[...]
    bhn_e = bhn_e_ref[...]

    h = jnp.zeros((BB, D), f32)
    for t in range(L):                                          # serial recurrence
        r = _sigmoid_fast(xr[:, t, :]
                          + jnp.dot(h, whr_e, preferred_element_type=f32))
        z = _sigmoid_fast(xz[:, t, :]
                          + jnp.dot(h, whz_e, preferred_element_type=f32))
        n = jnp.tanh(xn[:, t, :]
                     + r * (jnp.dot(h, whn_e, preferred_element_type=f32) + bhn_e))
        h = n + z * (h - n)                                     # PyTorch-exact update

    # ---------------- autoregressive decoder (M steps) ----------------
    wir_d = wir_d_ref[...]; wiz_d = wiz_d_ref[...]; win_d = win_d_ref[...]
    whr_d = whr_d_ref[...]; whz_d = whz_d_ref[...]; whn_d = whn_d_ref[...]
    br_d = br_d_ref[...]; bz_d = bz_d_ref[...]
    bin_d = bin_d_ref[...]; bhn_d = bhn_d_ref[...]
    wlp = wlp_ref[...]; blp = blp_ref[...]
    y = y_ref[...].astype(f32)                                  # (BB, pred_len)

    window = x[:, :, 0]                                         # (BB, L), channel 0
    preds = []
    for m in range(M):
        r = _sigmoid_fast(jnp.dot(window, wir_d, preferred_element_type=f32)
                          + jnp.dot(h, whr_d, preferred_element_type=f32) + br_d)
        z = _sigmoid_fast(jnp.dot(window, wiz_d, preferred_element_type=f32)
                          + jnp.dot(h, whz_d, preferred_element_type=f32) + bz_d)
        n = jnp.tanh(jnp.dot(window, win_d, preferred_element_type=f32) + bin_d
                     + r * (jnp.dot(h, whn_d, preferred_element_type=f32) + bhn_d))
        h = n + z * (h - n)

        pred = jnp.maximum(jnp.dot(h, wlp, preferred_element_type=f32) + blp, 0.0)
        preds.append(pred)                                      # (BB, W)

        # teacher forcing (host coin flip per step) vs. model output
        tf = (tf_ref[m] > 0).astype(f32)
        app = tf * y[:, m * W:(m + 1) * W] + (1.0 - tf) * pred
        window = jnp.concatenate([window[:, W:], app], axis=1)  # slide window

    # single lane-dense store of all M patches at once
    out_ref[...] = jnp.concatenate(preds, axis=1)               # (BB, pred_len)


# ----------------------------------------------------------------------------
# Wrapper: parameter layout glue + batch-blocked pallas_call
# ----------------------------------------------------------------------------
def seq2seq_gru_pallas(params, x, y, tf_mask, cfg, block_b=None):
    B, L, C = x.shape
    D = cfg['d_model']
    W = cfg['patch_len']
    P = cfg['pred_len']
    M = P // W
    assert L == cfg['seq_len'] and C == cfg['enc_in']

    # batch block: full batch when small, else a sublane-friendly tile of 256
    if block_b is None:
        block_b = B if B <= 256 else 256
    n_blk = pl.cdiv(B, block_b)
    Bp = n_blk * block_b
    if Bp != B:
        x = jnp.pad(x, ((0, Bp - B), (0, 0), (0, 0)))
        y = jnp.pad(y, ((0, Bp - B), (0, 0)))

    f32 = jnp.float32
    x = x.astype(f32)
    y = y.astype(f32)

    def split_gates(w_ih, w_hh, b_ih, b_hh):
        # PyTorch GRU packs gates as [r; z; n] along dim 0; pre-transpose to (in, D)
        wir, wiz, win_ = w_ih[:D].T, w_ih[D:2 * D].T, w_ih[2 * D:].T
        whr, whz, whn = w_hh[:D].T, w_hh[D:2 * D].T, w_hh[2 * D:].T
        br = (b_ih[:D] + b_hh[:D]).reshape(1, D)
        bz = (b_ih[D:2 * D] + b_hh[D:2 * D]).reshape(1, D)
        bin_ = b_ih[2 * D:].reshape(1, D)
        bhn = b_hh[2 * D:].reshape(1, D)
        return tuple(a.astype(f32) for a in
                     (wir, wiz, win_, whr, whz, whn, br, bz, bin_, bhn))

    enc_w = split_gates(params['w_ih_e'], params['w_hh_e'],
                        params['b_ih_e'], params['b_hh_e'])
    dec_w = split_gates(params['w_ih_d'], params['w_hh_d'],
                        params['b_ih_d'], params['b_hh_d'])
    wlp = params['w_lp'].T.astype(f32)                          # (D, W)
    blp = params['b_lp'].reshape(1, W).astype(f32)

    weights = (*enc_w, *dec_w, wlp, blp)

    x_spec = pl.BlockSpec((block_b, L, C), lambda b, tf: (b, 0, 0))
    y_spec = pl.BlockSpec((block_b, P), lambda b, tf: (b, 0))
    # constant index_map -> weights stay VMEM-resident across grid steps
    w_specs = [pl.BlockSpec(w.shape, lambda b, tf: (0, 0)) for w in weights]
    out_spec = pl.BlockSpec((block_b, P), lambda b, tf: (b, 0))

    grid_spec = pltpu.PrefetchScalarGridSpec(
        num_scalar_prefetch=1,
        grid=(n_blk,),
        in_specs=[x_spec, y_spec] + w_specs,
        out_specs=out_spec,
    )

    out = pl.pallas_call(
        partial(seq2seq_gru_kernel, L, M, W, D),
        out_shape=jax.ShapeDtypeStruct((Bp, P), f32),
        grid_spec=grid_spec,
        compiler_params=pltpu.CompilerParams(
            dimension_semantics=("parallel",)),
    )(tf_mask.astype(jnp.int32), x, y, *weights)

    return out[:B]


# ----------------------------------------------------------------------------
# Pure-JAX reference mirroring the PyTorch Seq2SeqGRU.forward
# ----------------------------------------------------------------------------
def _gru_cell_ref(x_t, h, w_ih, w_hh, b_ih, b_hh, D):
    gi = x_t @ w_ih.T + b_ih
    gh = h @ w_hh.T + b_hh
    r = jax.nn.sigmoid(gi[:, :D] + gh[:, :D])
    z = jax.nn.sigmoid(gi[:, D:2 * D] + gh[:, D:2 * D])
    n = jnp.tanh(gi[:, 2 * D:] + r * gh[:, 2 * D:])
    return n + z * (h - n)


def seq2seq_gru_ref(p, x, y, tf_mask, cfg):
    B, L, C = x.shape
    D = cfg['d_model']
    W = cfg['patch_len']
    M = cfg['pred_len'] // W

    h = jnp.zeros((B, D), jnp.float32)
    for t in range(L):                                          # EncoderGRU -> h_n
        h = _gru_cell_ref(x[:, t, :], h, p['w_ih_e'], p['w_hh_e'],
                          p['b_ih_e'], p['b_hh_e'], D)

    window = x[:, :, 0]                                         # x[:, :, :1] squeezed
    outs = []
    for m in range(M):                                          # DecoderGRU, 1 step each
        h = _gru_cell_ref(window, h, p['w_ih_d'], p['w_hh_d'],
                          p['b_ih_d'], p['b_hh_d'], D)
        pred = jnp.maximum(h @ p['w_lp'].T + p['b_lp'], 0.0)
        outs.append(pred)
        app = jnp.where(tf_mask[m] > 0, y[:, m * W:(m + 1) * W], pred)
        window = jnp.concatenate([window[:, W:], app], axis=1)
    return jnp.concatenate(outs, axis=1)


# ----------------------------------------------------------------------------
# Deterministic parameter init (PyTorch GRU / Linear shapes)
# ----------------------------------------------------------------------------
def init_params(key, cfg):
    D = cfg['d_model']; C = cfg['enc_in']; L = cfg['seq_len']; W = cfg['patch_len']
    ks = jax.random.split(key, 10)
    k = D ** -0.5

    def u(kk, shape):
        return jax.random.uniform(kk, shape, jnp.float32, -k, k)

    return dict(
        w_ih_e=u(ks[0], (3 * D, C)), w_hh_e=u(ks[1], (3 * D, D)),
        b_ih_e=u(ks[2], (3 * D,)),   b_hh_e=u(ks[3], (3 * D,)),
        w_ih_d=u(ks[4], (3 * D, L)), w_hh_d=u(ks[5], (3 * D, D)),
        b_ih_d=u(ks[6], (3 * D,)),   b_hh_d=u(ks[7], (3 * D,)),
        w_lp=u(ks[8], (W, D)),       b_lp=u(ks[9], (W,)),
    )


if __name__ == "__main__":
    cfg = dict(seq_len=8, pred_len=8, enc_in=4, patch_len=2, d_model=32)
    B = 2
    M = cfg['pred_len'] // cfg['patch_len']
    teacher_forcing_ratio = 0.5

    key = jax.random.PRNGKey(0)
    kp, kx, ky = jax.random.split(key, 3)
    params = init_params(kp, cfg)
    x = jax.random.normal(kx, (B, cfg['seq_len'], cfg['enc_in']), jnp.float32)
    y = jax.random.normal(ky, (B, cfg['pred_len']), jnp.float32)

    # Host-side teacher-forcing coin flips (same control flow as the PyTorch
    # module's `random.random() < teacher_forcing_ratio`), deterministic seed.
    random.seed(0)
    tf_mask = jnp.array(
        [1 if random.random() < teacher_forcing_ratio else 0 for _ in range(M)],
        jnp.int32)

    out = seq2seq_gru_pallas(params, x, y, tf_mask, cfg)
    out = jax.block_until_ready(out)

    ref = seq2seq_gru_ref(params, x, y, tf_mask, cfg)
    assert out.shape == (B, cfg['pred_len']), out.shape
    if not jnp.allclose(out, ref, atol=1e-4, rtol=1e-4):
        raise AssertionError(
            f"mismatch: max abs err {jnp.max(jnp.abs(out - ref))}")

    print("KERNEL_OK")
</pallas_src>

<mosaic_0001>
module attributes {stable_mosaic.version = 11 : i64} {
  func.func @seq2seq_gru_kernel(%arg0: i32, %arg1: memref<4xi32, #tpu.memory_space<smem>>, %arg2: memref<2x8x4xf32, #tpu.memory_space<vmem>>, %arg3: memref<2x8xf32, #tpu.memory_space<vmem>>, %arg4: memref<4x32xf32, #tpu.memory_space<vmem>>, %arg5: memref<4x32xf32, #tpu.memory_space<vmem>>, %arg6: memref<4x32xf32, #tpu.memory_space<vmem>>, %arg7: memref<32x32xf32, #tpu.memory_space<vmem>>, %arg8: memref<32x32xf32, #tpu.memory_space<vmem>>, %arg9: memref<32x32xf32, #tpu.memory_space<vmem>>, %arg10: memref<1x32xf32, #tpu.memory_space<vmem>>, %arg11: memref<1x32xf32, #tpu.memory_space<vmem>>, %arg12: memref<1x32xf32, #tpu.memory_space<vmem>>, %arg13: memref<1x32xf32, #tpu.memory_space<vmem>>, %arg14: memref<8x32xf32, #tpu.memory_space<vmem>>, %arg15: memref<8x32xf32, #tpu.memory_space<vmem>>, %arg16: memref<8x32xf32, #tpu.memory_space<vmem>>, %arg17: memref<32x32xf32, #tpu.memory_space<vmem>>, %arg18: memref<32x32xf32, #tpu.memory_space<vmem>>, %arg19: memref<32x32xf32, #tpu.memory_space<vmem>>, %arg20: memref<1x32xf32, #tpu.memory_space<vmem>>, %arg21: memref<1x32xf32, #tpu.memory_space<vmem>>, %arg22: memref<1x32xf32, #tpu.memory_space<vmem>>, %arg23: memref<1x32xf32, #tpu.memory_space<vmem>>, %arg24: memref<32x2xf32, #tpu.memory_space<vmem>>, %arg25: memref<1x2xf32, #tpu.memory_space<vmem>>, %arg26: memref<2x8xf32, #tpu.memory_space<vmem>>) attributes {dimension_semantics = [#tpu.dimension_semantics<parallel>], iteration_bounds = array<i64: 1>, scalar_prefetch = 1 : i64, scratch_operands = 0 : i64, tpu.core_type = #tpu.core_type<tc>, window_params = [{transform_indices = @transform_0, window_bounds = array<i64: 2, 8, 4>}, {transform_indices = @transform_1, window_bounds = array<i64: 2, 8>}, {pipeline_mode = #tpu.pipeline_mode<synchronous>, transform_indices = @transform_2, window_bounds = array<i64: 4, 32>}, {pipeline_mode = #tpu.pipeline_mode<synchronous>, transform_indices = @transform_3, window_bounds = array<i64: 4, 32>}, {pipeline_mode = #tpu.pipeline_mode<synchronous>, transform_indices = @transform_4, window_bounds = array<i64: 4, 32>}, {pipeline_mode = #tpu.pipeline_mode<synchronous>, transform_indices = @transform_5, window_bounds = array<i64: 32, 32>}, {pipeline_mode = #tpu.pipeline_mode<synchronous>, transform_indices = @transform_6, window_bounds = array<i64: 32, 32>}, {pipeline_mode = #tpu.pipeline_mode<synchronous>, transform_indices = @transform_7, window_bounds = array<i64: 32, 32>}, {pipeline_mode = #tpu.pipeline_mode<synchronous>, transform_indices = @transform_8, window_bounds = array<i64: 1, 32>}, {pipeline_mode = #tpu.pipeline_mode<synchronous>, transform_indices = @transform_9, window_bounds = array<i64: 1, 32>}, {pipeline_mode = #tpu.pipeline_mode<synchronous>, transform_indices = @transform_10, window_bounds = array<i64: 1, 32>}, {pipeline_mode = #tpu.pipeline_mode<synchronous>, transform_indices = @transform_11, window_bounds = array<i64: 1, 32>}, {pipeline_mode = #tpu.pipeline_mode<synchronous>, transform_indices = @transform_12, window_bounds = array<i64: 8, 32>}, {pipeline_mode = #tpu.pipeline_mode<synchronous>, transform_indices = @transform_13, window_bounds = array<i64: 8, 32>}, {pipeline_mode = #tpu.pipeline_mode<synchronous>, transform_indices = @transform_14, window_bounds = array<i64: 8, 32>}, {pipeline_mode = #tpu.pipeline_mode<synchronous>, transform_indices = @transform_15, window_bounds = array<i64: 32, 32>}, {pipeline_mode = #tpu.pipeline_mode<synchronous>, transform_indices = @transform_16, window_bounds = array<i64: 32, 32>}, {pipeline_mode = #tpu.pipeline_mode<synchronous>, transform_indices = @transform_17, window_bounds = array<i64: 32, 32>}, {pipeline_mode = #tpu.pipeline_mode<synchronous>, transform_indices = @transform_18, window_bounds = array<i64: 1, 32>}, {pipeline_mode = #tpu.pipeline_mode<synchronous>, transform_indices = @transform_19, window_bounds = array<i64: 1, 32>}, {pipeline_mode = #tpu.pipeline_mode<synchronous>, transform_indices = @transform_20, window_bounds = array<i64: 1, 32>}, {pipeline_mode = #tpu.pipeline_mode<synchronous>, transform_indices = @transform_21, window_bounds = array<i64: 1, 32>}, {pipeline_mode = #tpu.pipeline_mode<synchronous>, transform_indices = @transform_22, window_bounds = array<i64: 32, 2>}, {pipeline_mode = #tpu.pipeline_mode<synchronous>, transform_indices = @transform_23, window_bounds = array<i64: 1, 2>}, {transform_indices = @transform_24, window_bounds = array<i64: 2, 8>}]} {
    %c0 = arith.constant 0 : index
    %c0_0 = arith.constant 0 : index
    %c0_1 = arith.constant 0 : index
    %0 = vector.load %arg2[%c0, %c0_0, %c0_1] : memref<2x8x4xf32, #tpu.memory_space<vmem>>, vector<2x8x4xf32>
    %1 = vector.shape_cast %0 : vector<2x8x4xf32> to vector<16x4xf32>
    %c0_2 = arith.constant 0 : index
    %c0_3 = arith.constant 0 : index
    %2 = vector.load %arg4[%c0_2, %c0_3] : memref<4x32xf32, #tpu.memory_space<vmem>>, vector<4x32xf32>
    %cst = arith.constant dense<0.000000e+00> : vector<16x32xf32>
    %3 = tpu.matmul %1, %2, %cst {dimension_numbers = #tpu.dot_dimension_numbers<[1], [0], [0], [1], [0, 0, 1, 1], [], []>} : vector<16x4xf32>, vector<4x32xf32>, vector<16x32xf32> -> vector<16x32xf32>
    %c0_4 = arith.constant 0 : index
    %c0_5 = arith.constant 0 : index
    %4 = vector.load %arg10[%c0_4, %c0_5] : memref<1x32xf32, #tpu.memory_space<vmem>>, vector<1x32xf32>
    %5 = vector.broadcast %4 : vector<1x32xf32> to vector<16x32xf32>
    %6 = arith.addf %3, %5 : vector<16x32xf32>
    %7 = vector.shape_cast %6 : vector<16x32xf32> to vector<2x8x32xf32>
    %c0_6 = arith.constant 0 : index
    %c0_7 = arith.constant 0 : index
    %8 = vector.load %arg5[%c0_6, %c0_7] : memref<4x32xf32, #tpu.memory_space<vmem>>, vector<4x32xf32>
    %cst_8 = arith.constant dense<0.000000e+00> : vector<16x32xf32>
    %9 = tpu.matmul %1, %8, %cst_8 {dimension_numbers = #tpu.dot_dimension_numbers<[1], [0], [0], [1], [0, 0, 1, 1], [], []>} : vector<16x4xf32>, vector<4x32xf32>, vector<16x32xf32> -> vector<16x32xf32>
    %c0_9 = arith.constant 0 : index
    %c0_10 = arith.constant 0 : index
    %10 = vector.load %arg11[%c0_9, %c0_10] : memref<1x32xf32, #tpu.memory_space<vmem>>, vector<1x32xf32>
    %11 = vector.broadcast %10 : vector<1x32xf32> to vector<16x32xf32>
    %12 = arith.addf %9, %11 : vector<16x32xf32>
    %13 = vector.shape_cast %12 : vector<16x32xf32> to vector<2x8x32xf32>
    %c0_11 = arith.constant 0 : index
    %c0_12 = arith.constant 0 : index
    %14 = vector.load %arg6[%c0_11, %c0_12] : memref<4x32xf32, #tpu.memory_space<vmem>>, vector<4x32xf32>
    %cst_13 = arith.constant dense<0.000000e+00> : vector<16x32xf32>
    %15 = tpu.matmul %1, %14, %cst_13 {dimension_numbers = #tpu.dot_dimension_numbers<[1], [0], [0], [1], [0, 0, 1, 1], [], []>} : vector<16x4xf32>, vector<4x32xf32>, vector<16x32xf32> -> vector<16x32xf32>
    %c0_14 = arith.constant 0 : index
    %c0_15 = arith.constant 0 : index
    %16 = vector.load %arg12[%c0_14, %c0_15] : memref<1x32xf32, #tpu.memory_space<vmem>>, vector<1x32xf32>
    %17 = vector.broadcast %16 : vector<1x32xf32> to vector<16x32xf32>
    %18 = arith.addf %15, %17 : vector<16x32xf32>
    %19 = vector.shape_cast %18 : vector<16x32xf32> to vector<2x8x32xf32>
    %c0_16 = arith.constant 0 : index
    %c0_17 = arith.constant 0 : index
    %20 = vector.load %arg7[%c0_16, %c0_17] : memref<32x32xf32, #tpu.memory_space<vmem>>, vector<32x32xf32>
    %c0_18 = arith.constant 0 : index
    %c0_19 = arith.constant 0 : index
    %21 = vector.load %arg8[%c0_18, %c0_19] : memref<32x32xf32, #tpu.memory_space<vmem>>, vector<32x32xf32>
    %c0_20 = arith.constant 0 : index
    %c0_21 = arith.constant 0 : index
    %22 = vector.load %arg9[%c0_20, %c0_21] : memref<32x32xf32, #tpu.memory_space<vmem>>, vector<32x32xf32>
    %c0_22 = arith.constant 0 : index
    %c0_23 = arith.constant 0 : index
    %23 = vector.load %arg13[%c0_22, %c0_23] : memref<1x32xf32, #tpu.memory_space<vmem>>, vector<1x32xf32>
    %cst_24 = arith.constant 0.000000e+00 : f32
    %24 = vector.broadcast %cst_24 : f32 to vector<2x32xf32>
    %25 = vector.extract_strided_slice %7 {offsets = [0, 0, 0], sizes = [2, 1, 32], strides = [1, 1, 1]} : vector<2x8x32xf32> to vector<2x1x32xf32>
    %26 = vector.shape_cast %25 : vector<2x1x32xf32> to vector<2x32xf32>
    %cst_25 = arith.constant dense<0.000000e+00> : vector<2x32xf32>
    %27 = tpu.matmul %24, %20, %cst_25 {dimension_numbers = #tpu.dot_dimension_numbers<[1], [0], [0], [1], [0, 0, 1, 1], [], []>} : vector<2x32xf32>, vector<32x32xf32>, vector<2x32xf32> -> vector<2x32xf32>
    %28 = arith.addf %26, %27 : vector<2x32xf32>
    %cst_26 = arith.constant 5.000000e-01 : f32
    %29 = vector.broadcast %cst_26 : f32 to vector<2x32xf32>
    %30 = arith.mulf %29, %28 : vector<2x32xf32>
    %31 = math.tanh %30 : vector<2x32xf32>
    %cst_27 = arith.constant 5.000000e-01 : f32
    %32 = vector.broadcast %cst_27 : f32 to vector<2x32xf32>
    %33 = arith.mulf %32, %31 : vector<2x32xf32>
    %cst_28 = arith.constant 5.000000e-01 : f32
    %34 = vector.broadcast %cst_28 : f32 to vector<2x32xf32>
    %35 = arith.addf %33, %34 : vector<2x32xf32>
    %36 = vector.extract_strided_slice %13 {offsets = [0, 0, 0], sizes = [2, 1, 32], strides = [1, 1, 1]} : vector<2x8x32xf32> to vector<2x1x32xf32>
    %37 = vector.shape_cast %36 : vector<2x1x32xf32> to vector<2x32xf32>
    %cst_29 = arith.constant dense<0.000000e+00> : vector<2x32xf32>
    %38 = tpu.matmul %24, %21, %cst_29 {dimension_numbers = #tpu.dot_dimension_numbers<[1], [0], [0], [1], [0, 0, 1, 1], [], []>} : vector<2x32xf32>, vector<32x32xf32>, vector<2x32xf32> -> vector<2x32xf32>
    %39 = arith.addf %37, %38 : vector<2x32xf32>
    %cst_30 = arith.constant 5.000000e-01 : f32
    %40 = vector.broadcast %cst_30 : f32 to vector<2x32xf32>
    %41 = arith.mulf %40, %39 : vector<2x32xf32>
    %42 = math.tanh %41 : vector<2x32xf32>
    %cst_31 = arith.constant 5.000000e-01 : f32
    %43 = vector.broadcast %cst_31 : f32 to vector<2x32xf32>
    %44 = arith.mulf %43, %42 : vector<2x32xf32>
    %cst_32 = arith.constant 5.000000e-01 : f32
    %45 = vector.broadcast %cst_32 : f32 to vector<2x32xf32>
    %46 = arith.addf %44, %45 : vector<2x32xf32>
    %47 = vector.extract_strided_slice %19 {offsets = [0, 0, 0], sizes = [2, 1, 32], strides = [1, 1, 1]} : vector<2x8x32xf32> to vector<2x1x32xf32>
    %48 = vector.shape_cast %47 : vector<2x1x32xf32> to vector<2x32xf32>
    %cst_33 = arith.constant dense<0.000000e+00> : vector<2x32xf32>
    %49 = tpu.matmul %24, %22, %cst_33 {dimension_numbers = #tpu.dot_dimension_numbers<[1], [0], [0], [1], [0, 0, 1, 1], [], []>} : vector<2x32xf32>, vector<32x32xf32>, vector<2x32xf32> -> vector<2x32xf32>
    %50 = vector.broadcast %23 : vector<1x32xf32> to vector<2x32xf32>
    %51 = arith.addf %49, %50 : vector<2x32xf32>
    %52 = arith.mulf %35, %51 : vector<2x32xf32>
    %53 = arith.addf %48, %52 : vector<2x32xf32>
    %54 = math.tanh %53 : vector<2x32xf32>
    %55 = arith.subf %24, %54 : vector<2x32xf32>
    %56 = arith.mulf %46, %55 : vector<2x32xf32>
    %57 = arith.addf %54, %56 : vector<2x32xf32>
    %58 = vector.extract_strided_slice %7 {offsets = [0, 1, 0], sizes = [2, 1, 32], strides = [1, 1, 1]} : vector<2x8x32xf32> to vector<2x1x32xf32>
    %59 = vector.shape_cast %58 : vector<2x1x32xf32> to vector<2x32xf32>
    %cst_34 = arith.constant dense<0.000000e+00> : vector<2x32xf32>
    %60 = tpu.matmul %57, %20, %cst_34 {dimension_numbers = #tpu.dot_dimension_numbers<[1], [0], [0], [1], [0, 0, 1, 1], [], []>} : vector<2x32xf32>, vector<32x32xf32>, vector<2x32xf32> -> vector<2x32xf32>
    %61 = arith.addf %59, %60 : vector<2x32xf32>
    %cst_35 = arith.constant 5.000000e-01 : f32
    %62 = vector.broadcast %cst_35 : f32 to vector<2x32xf32>
    %63 = arith.mulf %62, %61 : vector<2x32xf32>
    %64 = math.tanh %63 : vector<2x32xf32>
    %cst_36 = arith.constant 5.000000e-01 : f32
    %65 = vector.broadcast %cst_36 : f32 to vector<2x32xf32>
    %66 = arith.mulf %65, %64 : vector<2x32xf32>
    %cst_37 = arith.constant 5.000000e-01 : f32
    %67 = vector.broadcast %cst_37 : f32 to vector<2x32xf32>
    %68 = arith.addf %66, %67 : vector<2x32xf32>
    %69 = vector.extract_strided_slice %13 {offsets = [0, 1, 0], sizes = [2, 1, 32], strides = [1, 1, 1]} : vector<2x8x32xf32> to vector<2x1x32xf32>
    %70 = vector.shape_cast %69 : vector<2x1x32xf32> to vector<2x32xf32>
    %cst_38 = arith.constant dense<0.000000e+00> : vector<2x32xf32>
    %71 = tpu.matmul %57, %21, %cst_38 {dimension_numbers = #tpu.dot_dimension_numbers<[1], [0], [0], [1], [0, 0, 1, 1], [], []>} : vector<2x32xf32>, vector<32x32xf32>, vector<2x32xf32> -> vector<2x32xf32>
    %72 = arith.addf %70, %71 : vector<2x32xf32>
    %cst_39 = arith.constant 5.000000e-01 : f32
    %73 = vector.broadcast %cst_39 : f32 to vector<2x32xf32>
    %74 = arith.mulf %73, %72 : vector<2x32xf32>
    %75 = math.tanh %74 : vector<2x32xf32>
    %cst_40 = arith.constant 5.000000e-01 : f32
    %76 = vector.broadcast %cst_40 : f32 to vector<2x32xf32>
    %77 = arith.mulf %76, %75 : vector<2x32xf32>
    %cst_41 = arith.constant 5.000000e-01 : f32
    %78 = vector.broadcast %cst_41 : f32 to vector<2x32xf32>
    %79 = arith.addf %77, %78 : vector<2x32xf32>
    %80 = vector.extract_strided_slice %19 {offsets = [0, 1, 0], sizes = [2, 1, 32], strides = [1, 1, 1]} : vector<2x8x32xf32> to vector<2x1x32xf32>
    %81 = vector.shape_cast %80 : vector<2x1x32xf32> to vector<2x32xf32>
    %cst_42 = arith.constant dense<0.000000e+00> : vector<2x32xf32>
    %82 = tpu.matmul %57, %22, %cst_42 {dimension_numbers = #tpu.dot_dimension_numbers<[1], [0], [0], [1], [0, 0, 1, 1], [], []>} : vector<2x32xf32>, vector<32x32xf32>, vector<2x32xf32> -> vector<2x32xf32>
    %83 = vector.broadcast %23 : vector<1x32xf32> to vector<2x32xf32>
    %84 = arith.addf %82, %83 : vector<2x32xf32>
    %85 = arith.mulf %68, %84 : vector<2x32xf32>
    %86 = arith.addf %81, %85 : vector<2x32xf32>
    %87 = math.tanh %86 : vector<2x32xf32>
    %88 = arith.subf %57, %87 : vector<2x32xf32>
    %89 = arith.mulf %79, %88 : vector<2x32xf32>
    %90 = arith.addf %87, %89 : vector<2x32xf32>
    %91 = vector.extract_strided_slice %7 {offsets = [0, 2, 0], sizes = [2, 1, 32], strides = [1, 1, 1]} : vector<2x8x32xf32> to vector<2x1x32xf32>
    %92 = vector.shape_cast %91 : vector<2x1x32xf32> to vector<2x32xf32>
    %cst_43 = arith.constant dense<0.000000e+00> : vector<2x32xf32>
    %93 = tpu.matmul %90, %20, %cst_43 {dimension_numbers = #tpu.dot_dimension_numbers<[1], [0], [0], [1], [0, 0, 1, 1], [], []>} : vector<2x32xf32>, vector<32x32xf32>, vector<2x32xf32> -> vector<2x32xf32>
    %94 = arith.addf %92, %93 : vector<2x32xf32>
    %cst_44 = arith.constant 5.000000e-01 : f32
    %95 = vector.broadcast %cst_44 : f32 to vector<2x32xf32>
    %96 = arith.mulf %95, %94 : vector<2x32xf32>
    %97 = math.tanh %96 : vector<2x32xf32>
    %cst_45 = arith.constant 5.000000e-01 : f32
    %98 = vector.broadcast %cst_45 : f32 to vector<2x32xf32>
    %99 = arith.mulf %98, %97 : vector<2x32xf32>
    %cst_46 = arith.constant 5.000000e-01 : f32
    %100 = vector.broadcast %cst_46 : f32 to vector<2x32xf32>
    %101 = arith.addf %99, %100 : vector<2x32xf32>
    %102 = vector.extract_strided_slice %13 {offsets = [0, 2, 0], sizes = [2, 1, 32], strides = [1, 1, 1]} : vector<2x8x32xf32> to vector<2x1x32xf32>
    %103 = vector.shape_cast %102 : vector<2x1x32xf32> to vector<2x32xf32>
    %cst_47 = arith.constant dense<0.000000e+00> : vector<2x32xf32>
    %104 = tpu.matmul %90, %21, %cst_47 {dimension_numbers = #tpu.dot_dimension_numbers<[1], [0], [0], [1], [0, 0, 1, 1], [], []>} : vector<2x32xf32>, vector<32x32xf32>, vector<2x32xf32> -> vector<2x32xf32>
    %105 = arith.addf %103, %104 : vector<2x32xf32>
    %cst_48 = arith.constant 5.000000e-01 : f32
    %106 = vector.broadcast %cst_48 : f32 to vector<2x32xf32>
    %107 = arith.mulf %106, %105 : vector<2x32xf32>
    %108 = math.tanh %107 : vector<2x32xf32>
    %cst_49 = arith.constant 5.000000e-01 : f32
    %109 = vector.broadcast %cst_49 : f32 to vector<2x32xf32>
    %110 = arith.mulf %109, %108 : vector<2x32xf32>
    %cst_50 = arith.constant 5.000000e-01 : f32
    %111 = vector.broadcast %cst_50 : f32 to vector<2x32xf32>
    %112 = arith.addf %110, %111 : vector<2x32xf32>
    %113 = vector.extract_strided_slice %19 {offsets = [0, 2, 0], sizes = [2, 1, 32], strides = [1, 1, 1]} : vector<2x8x32xf32> to vector<2x1x32xf32>
    %114 = vector.shape_cast %113 : vector<2x1x32xf32> to vector<2x32xf32>
    %cst_51 = arith.constant dense<0.000000e+00> : vector<2x32xf32>
    %115 = tpu.matmul %90, %22, %cst_51 {dimension_numbers = #tpu.dot_dimension_numbers<[1], [0], [0], [1], [0, 0, 1, 1], [], []>} : vector<2x32xf32>, vector<32x32xf32>, vector<2x32xf32> -> vector<2x32xf32>
    %116 = vector.broadcast %23 : vector<1x32xf32> to vector<2x32xf32>
    %117 = arith.addf %115, %116 : vector<2x32xf32>
    %118 = arith.mulf %101, %117 : vector<2x32xf32>
    %119 = arith.addf %114, %118 : vector<2x32xf32>
    %120 = math.tanh %119 : vector<2x32xf32>
    %121 = arith.subf %90, %120 : vector<2x32xf32>
    %122 = arith.mulf %112, %121 : vector<2x32xf32>
    %123 = arith.addf %120, %122 : vector<2x32xf32>
    %124 = vector.extract_strided_slice %7 {offsets = [0, 3, 0], sizes = [2, 1, 32], strides = [1, 1, 1]} : vector<2x8x32xf32> to vector<2x1x32xf32>
    %125 = vector.shape_cast %124 : vector<2x1x32xf32> to vector<2x32xf32>
    %cst_52 = arith.constant dense<0.000000e+00> : vector<2x32xf32>
    %126 = tpu.matmul %123, %20, %cst_52 {dimension_numbers = #tpu.dot_dimension_numbers<[1], [0], [0], [1], [0, 0, 1, 1], [], []>} : vector<2x32xf32>, vector<32x32xf32>, vector<2x32xf32> -> vector<2x32xf32>
    %127 = arith.addf %125, %126 : vector<2x32xf32>
    %cst_53 = arith.constant 5.000000e-01 : f32
    %128 = vector.broadcast %cst_53 : f32 to vector<2x32xf32>
    %129 = arith.mulf %128, %127 : vector<2x32xf32>
    %130 = math.tanh %129 : vector<2x32xf32>
    %cst_54 = arith.constant 5.000000e-01 : f32
    %131 = vector.broadcast %cst_54 : f32 to vector<2x32xf32>
    %132 = arith.mulf %131, %130 : vector<2x32xf32>
    %cst_55 = arith.constant 5.000000e-01 : f32
    %133 = vector.broadcast %cst_55 : f32 to vector<2x32xf32>
    %134 = arith.addf %132, %133 : vector<2x32xf32>
    %135 = vector.extract_strided_slice %13 {offsets = [0, 3, 0], sizes = [2, 1, 32], strides = [1, 1, 1]} : vector<2x8x32xf32> to vector<2x1x32xf32>
    %136 = vector.shape_cast %135 : vector<2x1x32xf32> to vector<2x32xf32>
    %cst_56 = arith.constant dense<0.000000e+00> : vector<2x32xf32>
    %137 = tpu.matmul %123, %21, %cst_56 {dimension_numbers = #tpu.dot_dimension_numbers<[1], [0], [0], [1], [0, 0, 1, 1], [], []>} : vector<2x32xf32>, vector<32x32xf32>, vector<2x32xf32> -> vector<2x32xf32>
    %138 = arith.addf %136, %137 : vector<2x32xf32>
    %cst_57 = arith.constant 5.000000e-01 : f32
    %139 = vector.broadcast %cst_57 : f32 to vector<2x32xf32>
    %140 = arith.mulf %139, %138 : vector<2x32xf32>
    %141 = math.tanh %140 : vector<2x32xf32>
    %cst_58 = arith.constant 5.000000e-01 : f32
    %142 = vector.broadcast %cst_58 : f32 to vector<2x32xf32>
    %143 = arith.mulf %142, %141 : vector<2x32xf32>
    %cst_59 = arith.constant 5.000000e-01 : f32
    %144 = vector.broadcast %cst_59 : f32 to vector<2x32xf32>
    %145 = arith.addf %143, %144 : vector<2x32xf32>
    %146 = vector.extract_strided_slice %19 {offsets = [0, 3, 0], sizes = [2, 1, 32], strides = [1, 1, 1]} : vector<2x8x32xf32> to vector<2x1x32xf32>
    %147 = vector.shape_cast %146 : vector<2x1x32xf32> to vector<2x32xf32>
    %cst_60 = arith.constant dense<0.000000e+00> : vector<2x32xf32>
    %148 = tpu.matmul %123, %22, %cst_60 {dimension_numbers = #tpu.dot_dimension_numbers<[1], [0], [0], [1], [0, 0, 1, 1], [], []>} : vector<2x32xf32>, vector<32x32xf32>, vector<2x32xf32> -> vector<2x32xf32>
    %149 = vector.broadcast %23 : vector<1x32xf32> to vector<2x32xf32>
    %150 = arith.addf %148, %149 : vector<2x32xf32>
    %151 = arith.mulf %134, %150 : vector<2x32xf32>
    %152 = arith.addf %147, %151 : vector<2x32xf32>
    %153 = math.tanh %152 : vector<2x32xf32>
    %154 = arith.subf %123, %153 : vector<2x32xf32>
    %155 = arith.mulf %145, %154 : vector<2x32xf32>
    %156 = arith.addf %153, %155 : vector<2x32xf32>
    %157 = vector.extract_strided_slice %7 {offsets = [0, 4, 0], sizes = [2, 1, 32], strides = [1, 1, 1]} : vector<2x8x32xf32> to vector<2x1x32xf32>
    %158 = vector.shape_cast %157 : vector<2x1x32xf32> to vector<2x32xf32>
    %cst_61 = arith.constant dense<0.000000e+00> : vector<2x32xf32>
    %159 = tpu.matmul %156, %20, %cst_61 {dimension_numbers = #tpu.dot_dimension_numbers<[1], [0], [0], [1], [0, 0, 1, 1], [], []>} : vector<2x32xf32>, vector<32x32xf32>, vector<2x32xf32> -> vector<2x32xf32>
    %160 = arith.addf %158, %159 : vector<2x32xf32>
    %cst_62 = arith.constant 5.000000e-01 : f32
    %161 = vector.broadcast %cst_62 : f32 to vector<2x32xf32>
    %162 = arith.mulf %161, %160 : vector<2x32xf32>
    %163 = math.tanh %162 : vector<2x32xf32>
    %cst_63 = arith.constant 5.000000e-01 : f32
    %164 = vector.broadcast %cst_63 : f32 to vector<2x32xf32>
    %165 = arith.mulf %164, %163 : vector<2x32xf32>
    %cst_64 = arith.constant 5.000000e-01 : f32
    %166 = vector.broadcast %cst_64 : f32 to vector<2x32xf32>
    %167 = arith.addf %165, %166 : vector<2x32xf32>
    %168 = vector.extract_strided_slice %13 {offsets = [0, 4, 0], sizes = [2, 1, 32], strides = [1, 1, 1]} : vector<2x8x32xf32> to vector<2x1x32xf32>
    %169 = vector.shape_cast %168 : vector<2x1x32xf32> to vector<2x32xf32>
    %cst_65 = arith.constant dense<0.000000e+00> : vector<2x32xf32>
    %170 = tpu.matmul %156, %21, %cst_65 {dimension_numbers = #tpu.dot_dimension_numbers<[1], [0], [0], [1], [0, 0, 1, 1], [], []>} : vector<2x32xf32>, vector<32x32xf32>, vector<2x32xf32> -> vector<2x32xf32>
    %171 = arith.addf %169, %170 : vector<2x32xf32>
    %cst_66 = arith.constant 5.000000e-01 : f32
    %172 = vector.broadcast %cst_66 : f32 to vector<2x32xf32>
    %173 = arith.mulf %172, %171 : vector<2x32xf32>
    %174 = math.tanh %173 : vector<2x32xf32>
    %cst_67 = arith.constant 5.000000e-01 : f32
    %175 = vector.broadcast %cst_67 : f32 to vector<2x32xf32>
    %176 = arith.mulf %175, %174 : vector<2x32xf32>
    %cst_68 = arith.constant 5.000000e-01 : f32
    %177 = vector.broadcast %cst_68 : f32 to vector<2x32xf32>
    %178 = arith.addf %176, %177 : vector<2x32xf32>
    %179 = vector.extract_strided_slice %19 {offsets = [0, 4, 0], sizes = [2, 1, 32], strides = [1, 1, 1]} : vector<2x8x32xf32> to vector<2x1x32xf32>
    %180 = vector.shape_cast %179 : vector<2x1x32xf32> to vector<2x32xf32>
    %cst_69 = arith.constant dense<0.000000e+00> : vector<2x32xf32>
    %181 = tpu.matmul %156, %22, %cst_69 {dimension_numbers = #tpu.dot_dimension_numbers<[1], [0], [0], [1], [0, 0, 1, 1], [], []>} : vector<2x32xf32>, vector<32x32xf32>, vector<2x32xf32> -> vector<2x32xf32>
    %182 = vector.broadcast %23 : vector<1x32xf32> to vector<2x32xf32>
    %183 = arith.addf %181, %182 : vector<2x32xf32>
    %184 = arith.mulf %167, %183 : vector<2x32xf32>
    %185 = arith.addf %180, %184 : vector<2x32xf32>
    %186 = math.tanh %185 : vector<2x32xf32>
    %187 = arith.subf %156, %186 : vector<2x32xf32>
    %188 = arith.mulf %178, %187 : vector<2x32xf32>
    %189 = arith.addf %186, %188 : vector<2x32xf32>
    %190 = vector.extract_strided_slice %7 {offsets = [0, 5, 0], sizes = [2, 1, 32], strides = [1, 1, 1]} : vector<2x8x32xf32> to vector<2x1x32xf32>
    %191 = vector.shape_cast %190 : vector<2x1x32xf32> to vector<2x32xf32>
    %cst_70 = arith.constant dense<0.000000e+00> : vector<2x32xf32>
    %192 = tpu.matmul %189, %20, %cst_70 {dimension_numbers = #tpu.dot_dimension_numbers<[1], [0], [0], [1], [0, 0, 1, 1], [], []>} : vector<2x32xf32>, vector<32x32xf32>, vector<2x32xf32> -> vector<2x32xf32>
    %193 = arith.addf %191, %192 : vector<2x32xf32>
    %cst_71 = arith.constant 5.000000e-01 : f32
    %194 = vector.broadcast %cst_71 : f32 to vector<2x32xf32>
    %195 = arith.mulf %194, %193 : vector<2x32xf32>
    %196 = math.tanh %195 : vector<2x32xf32>
    %cst_72 = arith.constant 5.000000e-01 : f32
    %197 = vector.broadcast %cst_72 : f32 to vector<2x32xf32>
    %198 = arith.mulf %197, %196 : vector<2x32xf32>
    %cst_73 = arith.constant 5.000000e-01 : f32
    %199 = vector.broadcast %cst_73 : f32 to vector<2x32xf32>
    %200 = arith.addf %198, %199 : vector<2x32xf32>
    %201 = vector.extract_strided_slice %13 {offsets = [0, 5, 0], sizes = [2, 1, 32], strides = [1, 1, 1]} : vector<2x8x32xf32> to vector<2x1x32xf32>
    %202 = vector.shape_cast %201 : vector<2x1x32xf32> to vector<2x32xf32>
    %cst_74 = arith.constant dense<0.000000e+00> : vector<2x32xf32>
    %203 = tpu.matmul %189, %21, %cst_74 {dimension_numbers = #tpu.dot_dimension_numbers<[1], [0], [0], [1], [0, 0, 1, 1], [], []>} : vector<2x32xf32>, vector<32x32xf32>, vector<2x32xf32> -> vector<2x32xf32>
    %204 = arith.addf %202, %203 : vector<2x32xf32>
    %cst_75 = arith.constant 5.000000e-01 : f32
    %205 = vector.broadcast %cst_75 : f32 to vector<2x32xf32>
    %206 = arith.mulf %205, %204 : vector<2x32xf32>
    %207 = math.tanh %206 : vector<2x32xf32>
    %cst_76 = arith.constant 5.000000e-01 : f32
    %208 = vector.broadcast %cst_76 : f32 to vector<2x32xf32>
    %209 = arith.mulf %208, %207 : vector<2x32xf32>
    %cst_77 = arith.constant 5.000000e-01 : f32
    %210 = vector.broadcast %cst_77 : f32 to vector<2x32xf32>
    %211 = arith.addf %209, %210 : vector<2x32xf32>
    %212 = vector.extract_strided_slice %19 {offsets = [0, 5, 0], sizes = [2, 1, 32], strides = [1, 1, 1]} : vector<2x8x32xf32> to vector<2x1x32xf32>
    %213 = vector.shape_cast %212 : vector<2x1x32xf32> to vector<2x32xf32>
    %cst_78 = arith.constant dense<0.000000e+00> : vector<2x32xf32>
    %214 = tpu.matmul %189, %22, %cst_78 {dimension_numbers = #tpu.dot_dimension_numbers<[1], [0], [0], [1], [0, 0, 1, 1], [], []>} : vector<2x32xf32>, vector<32x32xf32>, vector<2x32xf32> -> vector<2x32xf32>
    %215 = vector.broadcast %23 : vector<1x32xf32> to vector<2x32xf32>
    %216 = arith.addf %214, %215 : vector<2x32xf32>
    %217 = arith.mulf %200, %216 : vector<2x32xf32>
    %218 = arith.addf %213, %217 : vector<2x32xf32>
    %219 = math.tanh %218 : vector<2x32xf32>
    %220 = arith.subf %189, %219 : vector<2x32xf32>
    %221 = arith.mulf %211, %220 : vector<2x32xf32>
    %222 = arith.addf %219, %221 : vector<2x32xf32>
    %223 = vector.extract_strided_slice %7 {offsets = [0, 6, 0], sizes = [2, 1, 32], strides = [1, 1, 1]} : vector<2x8x32xf32> to vector<2x1x32xf32>
    %224 = vector.shape_cast %223 : vector<2x1x32xf32> to vector<2x32xf32>
    %cst_79 = arith.constant dense<0.000000e+00> : vector<2x32xf32>
    %225 = tpu.matmul %222, %20, %cst_79 {dimension_numbers = #tpu.dot_dimension_numbers<[1], [0], [0], [1], [0, 0, 1, 1], [], []>} : vector<2x32xf32>, vector<32x32xf32>, vector<2x32xf32> -> vector<2x32xf32>
    %226 = arith.addf %224, %225 : vector<2x32xf32>
    %cst_80 = arith.constant 5.000000e-01 : f32
    %227 = vector.broadcast %cst_80 : f32 to vector<2x32xf32>
    %228 = arith.mulf %227, %226 : vector<2x32xf32>
    %229 = math.tanh %228 : vector<2x32xf32>
    %cst_81 = arith.constant 5.000000e-01 : f32
    %230 = vector.broadcast %cst_81 : f32 to vector<2x32xf32>
    %231 = arith.mulf %230, %229 : vector<2x32xf32>
    %cst_82 = arith.constant 5.000000e-01 : f32
    %232 = vector.broadcast %cst_82 : f32 to vector<2x32xf32>
    %233 = arith.addf %231, %232 : vector<2x32xf32>
    %234 = vector.extract_strided_slice %13 {offsets = [0, 6, 0], sizes = [2, 1, 32], strides = [1, 1, 1]} : vector<2x8x32xf32> to vector<2x1x32xf32>
    %235 = vector.shape_cast %234 : vector<2x1x32xf32> to vector<2x32xf32>
    %cst_83 = arith.constant dense<0.000000e+00> : vector<2x32xf32>
    %236 = tpu.matmul %222, %21, %cst_83 {dimension_numbers = #tpu.dot_dimension_numbers<[1], [0], [0], [1], [0, 0, 1, 1], [], []>} : vector<2x32xf32>, vector<32x32xf32>, vector<2x32xf32> -> vector<2x32xf32>
    %237 = arith.addf %235, %236 : vector<2x32xf32>
    %cst_84 = arith.constant 5.000000e-01 : f32
    %238 = vector.broadcast %cst_84 : f32 to vector<2x32xf32>
    %239 = arith.mulf %238, %237 : vector<2x32xf32>
    %240 = math.tanh %239 : vector<2x32xf32>
    %cst_85 = arith.constant 5.000000e-01 : f32
    %241 = vector.broadcast %cst_85 : f32 to vector<2x32xf32>
    %242 = arith.mulf %241, %240 : vector<2x32xf32>
    %cst_86 = arith.constant 5.000000e-01 : f32
    %243 = vector.broadcast %cst_86 : f32 to vector<2x32xf32>
    %244 = arith.addf %242, %243 : vector<2x32xf32>
    %245 = vector.extract_strided_slice %19 {offsets = [0, 6, 0], sizes = [2, 1, 32], strides = [1, 1, 1]} : vector<2x8x32xf32> to vector<2x1x32xf32>
    %246 = vector.shape_cast %245 : vector<2x1x32xf32> to vector<2x32xf32>
    %cst_87 = arith.constant dense<0.000000e+00> : vector<2x32xf32>
    %247 = tpu.matmul %222, %22, %cst_87 {dimension_numbers = #tpu.dot_dimension_numbers<[1], [0], [0], [1], [0, 0, 1, 1], [], []>} : vector<2x32xf32>, vector<32x32xf32>, vector<2x32xf32> -> vector<2x32xf32>
    %248 = vector.broadcast %23 : vector<1x32xf32> to vector<2x32xf32>
    %249 = arith.addf %247, %248 : vector<2x32xf32>
    %250 = arith.mulf %233, %249 : vector<2x32xf32>
    %251 = arith.addf %246, %250 : vector<2x32xf32>
    %252 = math.tanh %251 : vector<2x32xf32>
    %253 = arith.subf %222, %252 : vector<2x32xf32>
    %254 = arith.mulf %244, %253 : vector<2x32xf32>
    %255 = arith.addf %252, %254 : vector<2x32xf32>
    %256 = vector.extract_strided_slice %7 {offsets = [0, 7, 0], sizes = [2, 1, 32], strides = [1, 1, 1]} : vector<2x8x32xf32> to vector<2x1x32xf32>
    %257 = vector.shape_cast %256 : vector<2x1x32xf32> to vector<2x32xf32>
    %cst_88 = arith.constant dense<0.000000e+00> : vector<2x32xf32>
    %258 = tpu.matmul %255, %20, %cst_88 {dimension_numbers = #tpu.dot_dimension_numbers<[1], [0], [0], [1], [0, 0, 1, 1], [], []>} : vector<2x32xf32>, vector<32x32xf32>, vector<2x32xf32> -> vector<2x32xf32>
    %259 = arith.addf %257, %258 : vector<2x32xf32>
    %cst_89 = arith.constant 5.000000e-01 : f32
    %260 = vector.broadcast %cst_89 : f32 to vector<2x32xf32>
    %261 = arith.mulf %260, %259 : vector<2x32xf32>
    %262 = math.tanh %261 : vector<2x32xf32>
    %cst_90 = arith.constant 5.000000e-01 : f32
    %263 = vector.broadcast %cst_90 : f32 to vector<2x32xf32>
    %264 = arith.mulf %263, %262 : vector<2x32xf32>
    %cst_91 = arith.constant 5.000000e-01 : f32
    %265 = vector.broadcast %cst_91 : f32 to vector<2x32xf32>
    %266 = arith.addf %264, %265 : vector<2x32xf32>
    %267 = vector.extract_strided_slice %13 {offsets = [0, 7, 0], sizes = [2, 1, 32], strides = [1, 1, 1]} : vector<2x8x32xf32> to vector<2x1x32xf32>
    %268 = vector.shape_cast %267 : vector<2x1x32xf32> to vector<2x32xf32>
    %cst_92 = arith.constant dense<0.000000e+00> : vector<2x32xf32>
    %269 = tpu.matmul %255, %21, %cst_92 {dimension_numbers = #tpu.dot_dimension_numbers<[1], [0], [0], [1], [0, 0, 1, 1], [], []>} : vector<2x32xf32>, vector<32x32xf32>, vector<2x32xf32> -> vector<2x32xf32>
    %270 = arith.addf %268, %269 : vector<2x32xf32>
    %cst_93 = arith.constant 5.000000e-01 : f32
    %271 = vector.broadcast %cst_93 : f32 to vector<2x32xf32>
    %272 = arith.mulf %271, %270 : vector<2x32xf32>
    %273 = math.tanh %272 : vector<2x32xf32>
    %cst_94 = arith.constant 5.000000e-01 : f32
    %274 = vector.broadcast %cst_94 : f32 to vector<2x32xf32>
    %275 = arith.mulf %274, %273 : vector<2x32xf32>
    %cst_95 = arith.constant 5.000000e-01 : f32
    %276 = vector.broadcast %cst_95 : f32 to vector<2x32xf32>
    %277 = arith.addf %275, %276 : vector<2x32xf32>
    %278 = vector.extract_strided_slice %19 {offsets = [0, 7, 0], sizes = [2, 1, 32], strides = [1, 1, 1]} : vector<2x8x32xf32> to vector<2x1x32xf32>
    %279 = vector.shape_cast %278 : vector<2x1x32xf32> to vector<2x32xf32>
    %cst_96 = arith.constant dense<0.000000e+00> : vector<2x32xf32>
    %280 = tpu.matmul %255, %22, %cst_96 {dimension_numbers = #tpu.dot_dimension_numbers<[1], [0], [0], [1], [0, 0, 1, 1], [], []>} : vector<2x32xf32>, vector<32x32xf32>, vector<2x32xf32> -> vector<2x32xf32>
    %281 = vector.broadcast %23 : vector<1x32xf32> to vector<2x32xf32>
    %282 = arith.addf %280, %281 : vector<2x32xf32>
    %283 = arith.mulf %266, %282 : vector<2x32xf32>
    %284 = arith.addf %279, %283 : vector<2x32xf32>
    %285 = math.tanh %284 : vector<2x32xf32>
    %286 = arith.subf %255, %285 : vector<2x32xf32>
    %287 = arith.mulf %277, %286 : vector<2x32xf32>
    %288 = arith.addf %285, %287 : vector<2x32xf32>
    %c0_97 = arith.constant 0 : index
    %c0_98 = arith.constant 0 : index
    %289 = vector.load %arg14[%c0_97, %c0_98] : memref<8x32xf32, #tpu.memory_space<vmem>>, vector<8x32xf32>
    %c0_99 = arith.constant 0 : index
    %c0_100 = arith.constant 0 : index
    %290 = vector.load %arg15[%c0_99, %c0_100] : memref<8x32xf32, #tpu.memory_space<vmem>>, vector<8x32xf32>
    %c0_101 = arith.constant 0 : index
    %c0_102 = arith.constant 0 : index
    %291 = vector.load %arg16[%c0_101, %c0_102] : memref<8x32xf32, #tpu.memory_space<vmem>>, vector<8x32xf32>
    %c0_103 = arith.constant 0 : index
    %c0_104 = arith.constant 0 : index
    %292 = vector.load %arg17[%c0_103, %c0_104] : memref<32x32xf32, #tpu.memory_space<vmem>>, vector<32x32xf32>
    %c0_105 = arith.constant 0 : index
    %c0_106 = arith.constant 0 : index
    %293 = vector.load %arg18[%c0_105, %c0_106] : memref<32x32xf32, #tpu.memory_space<vmem>>, vector<32x32xf32>
    %c0_107 = arith.constant 0 : index
    %c0_108 = arith.constant 0 : index
    %294 = vector.load %arg19[%c0_107, %c0_108] : memref<32x32xf32, #tpu.memory_space<vmem>>, vector<32x32xf32>
    %c0_109 = arith.constant 0 : index
    %c0_110 = arith.constant 0 : index
    %295 = vector.load %arg20[%c0_109, %c0_110] : memref<1x32xf32, #tpu.memory_space<vmem>>, vector<1x32xf32>
    %c0_111 = arith.constant 0 : index
    %c0_112 = arith.constant 0 : index
    %296 = vector.load %arg21[%c0_111, %c0_112] : memref<1x32xf32, #tpu.memory_space<vmem>>, vector<1x32xf32>
    %c0_113 = arith.constant 0 : index
    %c0_114 = arith.constant 0 : index
    %297 = vector.load %arg22[%c0_113, %c0_114] : memref<1x32xf32, #tpu.memory_space<vmem>>, vector<1x32xf32>
    %c0_115 = arith.constant 0 : index
    %c0_116 = arith.constant 0 : index
    %298 = vector.load %arg23[%c0_115, %c0_116] : memref<1x32xf32, #tpu.memory_space<vmem>>, vector<1x32xf32>
    %c0_117 = arith.constant 0 : index
    %c0_118 = arith.constant 0 : index
    %299 = vector.load %arg24[%c0_117, %c0_118] : memref<32x2xf32, #tpu.memory_space<vmem>>, vector<32x2xf32>
    %c0_119 = arith.constant 0 : index
    %c0_120 = arith.constant 0 : index
    %300 = vector.load %arg25[%c0_119, %c0_120] : memref<1x2xf32, #tpu.memory_space<vmem>>, vector<1x2xf32>
    %c0_121 = arith.constant 0 : index
    %c0_122 = arith.constant 0 : index
    %301 = vector.load %arg3[%c0_121, %c0_122] : memref<2x8xf32, #tpu.memory_space<vmem>>, vector<2x8xf32>
    %302 = vector.extract_strided_slice %0 {offsets = [0, 0, 0], sizes = [2, 8, 1], strides = [1, 1, 1]} : vector<2x8x4xf32> to vector<2x8x1xf32>
    %303 = vector.shape_cast %302 : vector<2x8x1xf32> to vector<2x8xf32>
    %cst_123 = arith.constant dense<0.000000e+00> : vector<2x32xf32>
    %304 = tpu.matmul %303, %289, %cst_123 {dimension_numbers = #tpu.dot_dimension_numbers<[1], [0], [0], [1], [0, 0, 1, 1], [], []>} : vector<2x8xf32>, vector<8x32xf32>, vector<2x32xf32> -> vector<2x32xf32>
    %cst_124 = arith.constant dense<0.000000e+00> : vector<2x32xf32>
    %305 = tpu.matmul %288, %292, %cst_124 {dimension_numbers = #tpu.dot_dimension_numbers<[1], [0], [0], [1], [0, 0, 1, 1], [], []>} : vector<2x32xf32>, vector<32x32xf32>, vector<2x32xf32> -> vector<2x32xf32>
    %306 = arith.addf %304, %305 : vector<2x32xf32>
    %307 = vector.broadcast %295 : vector<1x32xf32> to vector<2x32xf32>
    %308 = arith.addf %306, %307 : vector<2x32xf32>
    %cst_125 = arith.constant 5.000000e-01 : f32
    %309 = vector.broadcast %cst_125 : f32 to vector<2x32xf32>
    %310 = arith.mulf %309, %308 : vector<2x32xf32>
    %311 = math.tanh %310 : vector<2x32xf32>
    %cst_126 = arith.constant 5.000000e-01 : f32
    %312 = vector.broadcast %cst_126 : f32 to vector<2x32xf32>
    %313 = arith.mulf %312, %311 : vector<2x32xf32>
    %cst_127 = arith.constant 5.000000e-01 : f32
    %314 = vector.broadcast %cst_127 : f32 to vector<2x32xf32>
    %315 = arith.addf %313, %314 : vector<2x32xf32>
    %cst_128 = arith.constant dense<0.000000e+00> : vector<2x32xf32>
    %316 = tpu.matmul %303, %290, %cst_128 {dimension_numbers = #tpu.dot_dimension_numbers<[1], [0], [0], [1], [0, 0, 1, 1], [], []>} : vector<2x8xf32>, vector<8x32xf32>, vector<2x32xf32> -> vector<2x32xf32>
    %cst_129 = arith.constant dense<0.000000e+00> : vector<2x32xf32>
    %317 = tpu.matmul %288, %293, %cst_129 {dimension_numbers = #tpu.dot_dimension_numbers<[1], [0], [0], [1], [0, 0, 1, 1], [], []>} : vector<2x32xf32>, vector<32x32xf32>, vector<2x32xf32> -> vector<2x32xf32>
    %318 = arith.addf %316, %317 : vector<2x32xf32>
    %319 = vector.broadcast %296 : vector<1x32xf32> to vector<2x32xf32>
    %320 = arith.addf %318, %319 : vector<2x32xf32>
    %cst_130 = arith.constant 5.000000e-01 : f32
    %321 = vector.broadcast %cst_130 : f32 to vector<2x32xf32>
    %322 = arith.mulf %321, %320 : vector<2x32xf32>
    %323 = math.tanh %322 : vector<2x32xf32>
    %cst_131 = arith.constant 5.000000e-01 : f32
    %324 = vector.broadcast %cst_131 : f32 to vector<2x32xf32>
    %325 = arith.mulf %324, %323 : vector<2x32xf32>
    %cst_132 = arith.constant 5.000000e-01 : f32
    %326 = vector.broadcast %cst_132 : f32 to vector<2x32xf32>
    %327 = arith.addf %325, %326 : vector<2x32xf32>
    %cst_133 = arith.constant dense<0.000000e+00> : vector<2x32xf32>
    %328 = tpu.matmul %303, %291, %cst_133 {dimension_numbers = #tpu.dot_dimension_numbers<[1], [0], [0], [1], [0, 0, 1, 1], [], []>} : vector<2x8xf32>, vector<8x32xf32>, vector<2x32xf32> -> vector<2x32xf32>
    %329 = vector.broadcast %297 : vector<1x32xf32> to vector<2x32xf32>
    %330 = arith.addf %328, %329 : vector<2x32xf32>
    %cst_134 = arith.constant dense<0.000000e+00> : vector<2x32xf32>
    %331 = tpu.matmul %288, %294, %cst_134 {dimension_numbers = #tpu.dot_dimension_numbers<[1], [0], [0], [1], [0, 0, 1, 1], [], []>} : vector<2x32xf32>, vector<32x32xf32>, vector<2x32xf32> -> vector<2x32xf32>
    %332 = vector.broadcast %298 : vector<1x32xf32> to vector<2x32xf32>
    %333 = arith.addf %331, %332 : vector<2x32xf32>
    %334 = arith.mulf %315, %333 : vector<2x32xf32>
    %335 = arith.addf %330, %334 : vector<2x32xf32>
    %336 = math.tanh %335 : vector<2x32xf32>
    %337 = arith.subf %288, %336 : vector<2x32xf32>
    %338 = arith.mulf %327, %337 : vector<2x32xf32>
    %339 = arith.addf %336, %338 : vector<2x32xf32>
    %cst_135 = arith.constant dense<0.000000e+00> : vector<2x2xf32>
    %340 = tpu.matmul %339, %299, %cst_135 {dimension_numbers = #tpu.dot_dimension_numbers<[1], [0], [0], [1], [0, 0, 1, 1], [], []>} : vector<2x32xf32>, vector<32x2xf32>, vector<2x2xf32> -> vector<2x2xf32>
    %341 = vector.broadcast %300 : vector<1x2xf32> to vector<2x2xf32>
    %342 = arith.addf %340, %341 : vector<2x2xf32>
    %cst_136 = arith.constant 0.000000e+00 : f32
    %343 = vector.broadcast %cst_136 : f32 to vector<2x2xf32>
    %344 = arith.maximumf %342, %343 : vector<2x2xf32>
    %c0_137 = arith.constant 0 : index
    %345 = memref.load %arg1[%c0_137] : memref<4xi32, #tpu.memory_space<smem>>
    %c0_i32 = arith.constant 0 : i32
    %346 = arith.cmpi sgt, %345, %c0_i32 : i32
    %347 = arith.extui %346 : i1 to i32
    %348 = arith.sitofp %347 : i32 to f32
    %349 = vector.extract_strided_slice %301 {offsets = [0, 0], sizes = [2, 2], strides = [1, 1]} : vector<2x8xf32> to vector<2x2xf32>
    %350 = vector.broadcast %348 : f32 to vector<2x2xf32>
    %351 = arith.mulf %350, %349 : vector<2x2xf32>
    %cst_138 = arith.constant 1.000000e+00 : f32
    %352 = arith.subf %cst_138, %348 : f32
    %353 = vector.broadcast %352 : f32 to vector<2x2xf32>
    %354 = arith.mulf %353, %344 : vector<2x2xf32>
    %355 = arith.addf %351, %354 : vector<2x2xf32>
    %356 = vector.extract_strided_slice %303 {offsets = [0, 2], sizes = [2, 6], strides = [1, 1]} : vector<2x8xf32> to vector<2x6xf32>
    %357 = tpu.concatenate %356, %355 in 1 : vector<2x6xf32>, vector<2x2xf32> -> vector<2x8xf32>
    %cst_139 = arith.constant dense<0.000000e+00> : vector<2x32xf32>
    %358 = tpu.matmul %357, %289, %cst_139 {dimension_numbers = #tpu.dot_dimension_numbers<[1], [0], [0], [1], [0, 0, 1, 1], [], []>} : vector<2x8xf32>, vector<8x32xf32>, vector<2x32xf32> -> vector<2x32xf32>
    %cst_140 = arith.constant dense<0.000000e+00> : vector<2x32xf32>
    %359 = tpu.matmul %339, %292, %cst_140 {dimension_numbers = #tpu.dot_dimension_numbers<[1], [0], [0], [1], [0, 0, 1, 1], [], []>} : vector<2x32xf32>, vector<32x32xf32>, vector<2x32xf32> -> vector<2x32xf32>
    %360 = arith.addf %358, %359 : vector<2x32xf32>
    %361 = vector.broadcast %295 : vector<1x32xf32> to vector<2x32xf32>
    %362 = arith.addf %360, %361 : vector<2x32xf32>
    %cst_141 = arith.constant 5.000000e-01 : f32
    %363 = vector.broadcast %cst_141 : f32 to vector<2x32xf32>
    %364 = arith.mulf %363, %362 : vector<2x32xf32>
    %365 = math.tanh %364 : vector<2x32xf32>
    %cst_142 = arith.constant 5.000000e-01 : f32
    %366 = vector.broadcast %cst_142 : f32 to vector<2x32xf32>
    %367 = arith.mulf %366, %365 : vector<2x32xf32>
    %cst_143 = arith.constant 5.000000e-01 : f32
    %368 = vector.broadcast %cst_143 : f32 to vector<2x32xf32>
    %369 = arith.addf %367, %368 : vector<2x32xf32>
    %cst_144 = arith.constant dense<0.000000e+00> : vector<2x32xf32>
    %370 = tpu.matmul %357, %290, %cst_144 {dimension_numbers = #tpu.dot_dimension_numbers<[1], [0], [0], [1], [0, 0, 1, 1], [], []>} : vector<2x8xf32>, vector<8x32xf32>, vector<2x32xf32> -> vector<2x32xf32>
    %cst_145 = arith.constant dense<0.000000e+00> : vector<2x32xf32>
    %371 = tpu.matmul %339, %293, %cst_145 {dimension_numbers = #tpu.dot_dimension_numbers<[1], [0], [0], [1], [0, 0, 1, 1], [], []>} : vector<2x32xf32>, vector<32x32xf32>, vector<2x32xf32> -> vector<2x32xf32>
    %372 = arith.addf %370, %371 : vector<2x32xf32>
    %373 = vector.broadcast %296 : vector<1x32xf32> to vector<2x32xf32>
    %374 = arith.addf %372, %373 : vector<2x32xf32>
    %cst_146 = arith.constant 5.000000e-01 : f32
    %375 = vector.broadcast %cst_146 : f32 to vector<2x32xf32>
    %376 = arith.mulf %375, %374 : vector<2x32xf32>
    %377 = math.tanh %376 : vector<2x32xf32>
    %cst_147 = arith.constant 5.000000e-01 : f32
    %378 = vector.broadcast %cst_147 : f32 to vector<2x32xf32>
    %379 = arith.mulf %378, %377 : vector<2x32xf32>
    %cst_148 = arith.constant 5.000000e-01 : f32
    %380 = vector.broadcast %cst_148 : f32 to vector<2x32xf32>
    %381 = arith.addf %379, %380 : vector<2x32xf32>
    %cst_149 = arith.constant dense<0.000000e+00> : vector<2x32xf32>
    %382 = tpu.matmul %357, %291, %cst_149 {dimension_numbers = #tpu.dot_dimension_numbers<[1], [0], [0], [1], [0, 0, 1, 1], [], []>} : vector<2x8xf32>, vector<8x32xf32>, vector<2x32xf32> -> vector<2x32xf32>
    %383 = vector.broadcast %297 : vector<1x32xf32> to vector<2x32xf32>
    %384 = arith.addf %382, %383 : vector<2x32xf32>
    %cst_150 = arith.constant dense<0.000000e+00> : vector<2x32xf32>
    %385 = tpu.matmul %339, %294, %cst_150 {dimension_numbers = #tpu.dot_dimension_numbers<[1], [0], [0], [1], [0, 0, 1, 1], [], []>} : vector<2x32xf32>, vector<32x32xf32>, vector<2x32xf32> -> vector<2x32xf32>
    %386 = vector.broadcast %298 : vector<1x32xf32> to vector<2x32xf32>
    %387 = arith.addf %385, %386 : vector<2x32xf32>
    %388 = arith.mulf %369, %387 : vector<2x32xf32>
    %389 = arith.addf %384, %388 : vector<2x32xf32>
    %390 = math.tanh %389 : vector<2x32xf32>
    %391 = arith.subf %339, %390 : vector<2x32xf32>
    %392 = arith.mulf %381, %391 : vector<2x32xf32>
    %393 = arith.addf %390, %392 : vector<2x32xf32>
    %cst_151 = arith.constant dense<0.000000e+00> : vector<2x2xf32>
    %394 = tpu.matmul %393, %299, %cst_151 {dimension_numbers = #tpu.dot_dimension_numbers<[1], [0], [0], [1], [0, 0, 1, 1], [], []>} : vector<2x32xf32>, vector<32x2xf32>, vector<2x2xf32> -> vector<2x2xf32>
    %395 = vector.broadcast %300 : vector<1x2xf32> to vector<2x2xf32>
    %396 = arith.addf %394, %395 : vector<2x2xf32>
    %cst_152 = arith.constant 0.000000e+00 : f32
    %397 = vector.broadcast %cst_152 : f32 to vector<2x2xf32>
    %398 = arith.maximumf %396, %397 : vector<2x2xf32>
    %c1 = arith.constant 1 : index
    %399 = memref.load %arg1[%c1] : memref<4xi32, #tpu.memory_space<smem>>
    %c0_i32_153 = arith.constant 0 : i32
    %400 = arith.cmpi sgt, %399, %c0_i32_153 : i32
    %401 = arith.extui %400 : i1 to i32
    %402 = arith.sitofp %401 : i32 to f32
    %403 = vector.extract_strided_slice %301 {offsets = [0, 2], sizes = [2, 2], strides = [1, 1]} : vector<2x8xf32> to vector<2x2xf32>
    %404 = vector.broadcast %402 : f32 to vector<2x2xf32>
    %405 = arith.mulf %404, %403 : vector<2x2xf32>
    %cst_154 = arith.constant 1.000000e+00 : f32
    %406 = arith.subf %cst_154, %402 : f32
    %407 = vector.broadcast %406 : f32 to vector<2x2xf32>
    %408 = arith.mulf %407, %398 : vector<2x2xf32>
    %409 = arith.addf %405, %408 : vector<2x2xf32>
    %410 = vector.extract_strided_slice %357 {offsets = [0, 2], sizes = [2, 6], strides = [1, 1]} : vector<2x8xf32> to vector<2x6xf32>
    %411 = tpu.concatenate %410, %409 in 1 : vector<2x6xf32>, vector<2x2xf32> -> vector<2x8xf32>
    %cst_155 = arith.constant dense<0.000000e+00> : vector<2x32xf32>
    %412 = tpu.matmul %411, %289, %cst_155 {dimension_numbers = #tpu.dot_dimension_numbers<[1], [0], [0], [1], [0, 0, 1, 1], [], []>} : vector<2x8xf32>, vector<8x32xf32>, vector<2x32xf32> -> vector<2x32xf32>
    %cst_156 = arith.constant dense<0.000000e+00> : vector<2x32xf32>
    %413 = tpu.matmul %393, %292, %cst_156 {dimension_numbers = #tpu.dot_dimension_numbers<[1], [0], [0], [1], [0, 0, 1, 1], [], []>} : vector<2x32xf32>, vector<32x32xf32>, vector<2x32xf32> -> vector<2x32xf32>
    %414 = arith.addf %412, %413 : vector<2x32xf32>
    %415 = vector.broadcast %295 : vector<1x32xf32> to vector<2x32xf32>
    %416 = arith.addf %414, %415 : vector<2x32xf32>
    %cst_157 = arith.constant 5.000000e-01 : f32
    %417 = vector.broadcast %cst_157 : f32 to vector<2x32xf32>
    %418 = arith.mulf %417, %416 : vector<2x32xf32>
    %419 = math.tanh %418 : vector<2x32xf32>
    %cst_158 = arith.constant 5.000000e-01 : f32
    %420 = vector.broadcast %cst_158 : f32 to vector<2x32xf32>
    %421 = arith.mulf %420, %419 : vector<2x32xf32>
    %cst_159 = arith.constant 5.000000e-01 : f32
    %422 = vector.broadcast %cst_159 : f32 to vector<2x32xf32>
    %423 = arith.addf %421, %422 : vector<2x32xf32>
    %cst_160 = arith.constant dense<0.000000e+00> : vector<2x32xf32>
    %424 = tpu.matmul %411, %290, %cst_160 {dimension_numbers = #tpu.dot_dimension_numbers<[1], [0], [0], [1], [0, 0, 1, 1], [], []>} : vector<2x8xf32>, vector<8x32xf32>, vector<2x32xf32> -> vector<2x32xf32>
    %cst_161 = arith.constant dense<0.000000e+00> : vector<2x32xf32>
    %425 = tpu.matmul %393, %293, %cst_161 {dimension_numbers = #tpu.dot_dimension_numbers<[1], [0], [0], [1], [0, 0, 1, 1], [], []>} : vector<2x32xf32>, vector<32x32xf32>, vector<2x32xf32> -> vector<2x32xf32>
    %426 = arith.addf %424, %425 : vector<2x32xf32>
    %427 = vector.broadcast %296 : vector<1x32xf32> to vector<2x32xf32>
    %428 = arith.addf %426, %427 : vector<2x32xf32>
    %cst_162 = arith.constant 5.000000e-01 : f32
    %429 = vector.broadcast %cst_162 : f32 to vector<2x32xf32>
    %430 = arith.mulf %429, %428 : vector<2x32xf32>
    %431 = math.tanh %430 : vector<2x32xf32>
    %cst_163 = arith.constant 5.000000e-01 : f32
    %432 = vector.broadcast %cst_163 : f32 to vector<2x32xf32>
    %433 = arith.mulf %432, %431 : vector<2x32xf32>
    %cst_164 = arith.constant 5.000000e-01 : f32
    %434 = vector.broadcast %cst_164 : f32 to vector<2x32xf32>
    %435 = arith.addf %433, %434 : vector<2x32xf32>
    %cst_165 = arith.constant dense<0.000000e+00> : vector<2x32xf32>
    %436 = tpu.matmul %411, %291, %cst_165 {dimension_numbers = #tpu.dot_dimension_numbers<[1], [0], [0], [1], [0, 0, 1, 1], [], []>} : vector<2x8xf32>, vector<8x32xf32>, vector<2x32xf32> -> vector<2x32xf32>
    %437 = vector.broadcast %297 : vector<1x32xf32> to vector<2x32xf32>
    %438 = arith.addf %436, %437 : vector<2x32xf32>
    %cst_166 = arith.constant dense<0.000000e+00> : vector<2x32xf32>
    %439 = tpu.matmul %393, %294, %cst_166 {dimension_numbers = #tpu.dot_dimension_numbers<[1], [0], [0], [1], [0, 0, 1, 1], [], []>} : vector<2x32xf32>, vector<32x32xf32>, vector<2x32xf32> -> vector<2x32xf32>
    %440 = vector.broadcast %298 : vector<1x32xf32> to vector<2x32xf32>
    %441 = arith.addf %439, %440 : vector<2x32xf32>
    %442 = arith.mulf %423, %441 : vector<2x32xf32>
    %443 = arith.addf %438, %442 : vector<2x32xf32>
    %444 = math.tanh %443 : vector<2x32xf32>
    %445 = arith.subf %393, %444 : vector<2x32xf32>
    %446 = arith.mulf %435, %445 : vector<2x32xf32>
    %447 = arith.addf %444, %446 : vector<2x32xf32>
    %cst_167 = arith.constant dense<0.000000e+00> : vector<2x2xf32>
    %448 = tpu.matmul %447, %299, %cst_167 {dimension_numbers = #tpu.dot_dimension_numbers<[1], [0], [0], [1], [0, 0, 1, 1], [], []>} : vector<2x32xf32>, vector<32x2xf32>, vector<2x2xf32> -> vector<2x2xf32>
    %449 = vector.broadcast %300 : vector<1x2xf32> to vector<2x2xf32>
    %450 = arith.addf %448, %449 : vector<2x2xf32>
    %cst_168 = arith.constant 0.000000e+00 : f32
    %451 = vector.broadcast %cst_168 : f32 to vector<2x2xf32>
    %452 = arith.maximumf %450, %451 : vector<2x2xf32>
    %c2 = arith.constant 2 : index
    %453 = memref.load %arg1[%c2] : memref<4xi32, #tpu.memory_space<smem>>
    %c0_i32_169 = arith.constant 0 : i32
    %454 = arith.cmpi sgt, %453, %c0_i32_169 : i32
    %455 = arith.extui %454 : i1 to i32
    %456 = arith.sitofp %455 : i32 to f32
    %457 = vector.extract_strided_slice %301 {offsets = [0, 4], sizes = [2, 2], strides = [1, 1]} : vector<2x8xf32> to vector<2x2xf32>
    %458 = vector.broadcast %456 : f32 to vector<2x2xf32>
    %459 = arith.mulf %458, %457 : vector<2x2xf32>
    %cst_170 = arith.constant 1.000000e+00 : f32
    %460 = arith.subf %cst_170, %456 : f32
    %461 = vector.broadcast %460 : f32 to vector<2x2xf32>
    %462 = arith.mulf %461, %452 : vector<2x2xf32>
    %463 = arith.addf %459, %462 : vector<2x2xf32>
    %464 = vector.extract_strided_slice %411 {offsets = [0, 2], sizes = [2, 6], strides = [1, 1]} : vector<2x8xf32> to vector<2x6xf32>
    %465 = tpu.concatenate %464, %463 in 1 : vector<2x6xf32>, vector<2x2xf32> -> vector<2x8xf32>
    %cst_171 = arith.constant dense<0.000000e+00> : vector<2x32xf32>
    %466 = tpu.matmul %465, %289, %cst_171 {dimension_numbers = #tpu.dot_dimension_numbers<[1], [0], [0], [1], [0, 0, 1, 1], [], []>} : vector<2x8xf32>, vector<8x32xf32>, vector<2x32xf32> -> vector<2x32xf32>
    %cst_172 = arith.constant dense<0.000000e+00> : vector<2x32xf32>
    %467 = tpu.matmul %447, %292, %cst_172 {dimension_numbers = #tpu.dot_dimension_numbers<[1], [0], [0], [1], [0, 0, 1, 1], [], []>} : vector<2x32xf32>, vector<32x32xf32>, vector<2x32xf32> -> vector<2x32xf32>
    %468 = arith.addf %466, %467 : vector<2x32xf32>
    %469 = vector.broadcast %295 : vector<1x32xf32> to vector<2x32xf32>
    %470 = arith.addf %468, %469 : vector<2x32xf32>
    %cst_173 = arith.constant 5.000000e-01 : f32
    %471 = vector.broadcast %cst_173 : f32 to vector<2x32xf32>
    %472 = arith.mulf %471, %470 : vector<2x32xf32>
    %473 = math.tanh %472 : vector<2x32xf32>
    %cst_174 = arith.constant 5.000000e-01 : f32
    %474 = vector.broadcast %cst_174 : f32 to vector<2x32xf32>
    %475 = arith.mulf %474, %473 : vector<2x32xf32>
    %cst_175 = arith.constant 5.000000e-01 : f32
    %476 = vector.broadcast %cst_175 : f32 to vector<2x32xf32>
    %477 = arith.addf %475, %476 : vector<2x32xf32>
    %cst_176 = arith.constant dense<0.000000e+00> : vector<2x32xf32>
    %478 = tpu.matmul %465, %290, %cst_176 {dimension_numbers = #tpu.dot_dimension_numbers<[1], [0], [0], [1], [0, 0, 1, 1], [], []>} : vector<2x8xf32>, vector<8x32xf32>, vector<2x32xf32> -> vector<2x32xf32>
    %cst_177 = arith.constant dense<0.000000e+00> : vector<2x32xf32>
    %479 = tpu.matmul %447, %293, %cst_177 {dimension_numbers = #tpu.dot_dimension_numbers<[1], [0], [0], [1], [0, 0, 1, 1], [], []>} : vector<2x32xf32>, vector<32x32xf32>, vector<2x32xf32> -> vector<2x32xf32>
    %480 = arith.addf %478, %479 : vector<2x32xf32>
    %481 = vector.broadcast %296 : vector<1x32xf32> to vector<2x32xf32>
    %482 = arith.addf %480, %481 : vector<2x32xf32>
    %cst_178 = arith.constant 5.000000e-01 : f32
    %483 = vector.broadcast %cst_178 : f32 to vector<2x32xf32>
    %484 = arith.mulf %483, %482 : vector<2x32xf32>
    %485 = math.tanh %484 : vector<2x32xf32>
    %cst_179 = arith.constant 5.000000e-01 : f32
    %486 = vector.broadcast %cst_179 : f32 to vector<2x32xf32>
    %487 = arith.mulf %486, %485 : vector<2x32xf32>
    %cst_180 = arith.constant 5.000000e-01 : f32
    %488 = vector.broadcast %cst_180 : f32 to vector<2x32xf32>
    %489 = arith.addf %487, %488 : vector<2x32xf32>
    %cst_181 = arith.constant dense<0.000000e+00> : vector<2x32xf32>
    %490 = tpu.matmul %465, %291, %cst_181 {dimension_numbers = #tpu.dot_dimension_numbers<[1], [0], [0], [1], [0, 0, 1, 1], [], []>} : vector<2x8xf32>, vector<8x32xf32>, vector<2x32xf32> -> vector<2x32xf32>
    %491 = vector.broadcast %297 : vector<1x32xf32> to vector<2x32xf32>
    %492 = arith.addf %490, %491 : vector<2x32xf32>
    %cst_182 = arith.constant dense<0.000000e+00> : vector<2x32xf32>
    %493 = tpu.matmul %447, %294, %cst_182 {dimension_numbers = #tpu.dot_dimension_numbers<[1], [0], [0], [1], [0, 0, 1, 1], [], []>} : vector<2x32xf32>, vector<32x32xf32>, vector<2x32xf32> -> vector<2x32xf32>
    %494 = vector.broadcast %298 : vector<1x32xf32> to vector<2x32xf32>
    %495 = arith.addf %493, %494 : vector<2x32xf32>
    %496 = arith.mulf %477, %495 : vector<2x32xf32>
    %497 = arith.addf %492, %496 : vector<2x32xf32>
    %498 = math.tanh %497 : vector<2x32xf32>
    %499 = arith.subf %447, %498 : vector<2x32xf32>
    %500 = arith.mulf %489, %499 : vector<2x32xf32>
    %501 = arith.addf %498, %500 : vector<2x32xf32>
    %cst_183 = arith.constant dense<0.000000e+00> : vector<2x2xf32>
    %502 = tpu.matmul %501, %299, %cst_183 {dimension_numbers = #tpu.dot_dimension_numbers<[1], [0], [0], [1], [0, 0, 1, 1], [], []>} : vector<2x32xf32>, vector<32x2xf32>, vector<2x2xf32> -> vector<2x2xf32>
    %503 = vector.broadcast %300 : vector<1x2xf32> to vector<2x2xf32>
    %504 = arith.addf %502, %503 : vector<2x2xf32>
    %cst_184 = arith.constant 0.000000e+00 : f32
    %505 = vector.broadcast %cst_184 : f32 to vector<2x2xf32>
    %506 = arith.maximumf %504, %505 : vector<2x2xf32>
    %507 = tpu.concatenate %344, %398, %452, %506 in 1 : vector<2x2xf32>, vector<2x2xf32>, vector<2x2xf32>, vector<2x2xf32> -> vector<2x8xf32>
    %c0_185 = arith.constant 0 : index
    %c0_186 = arith.constant 0 : index
    %508 = vector.load %arg26[%c0_185, %c0_186] : memref<2x8xf32, #tpu.memory_space<vmem>>, vector<2x8xf32>
    tpu.vector_store %arg26[%c0_185, %c0_186], %507 {strides = array<i32>} : memref<2x8xf32, #tpu.memory_space<vmem>>, vector<2x8xf32>,
    return
  }
  func.func @transform_0(%arg0: i32, %arg1: memref<4xi32, #tpu.memory_space<smem>>) -> (i32, i32, i32) {
    %c0_i32 = arith.constant 0 : i32
    %c0_i32_0 = arith.constant 0 : i32
    %c0_i32_1 = arith.constant 0 : i32
    return %arg0, %c0_i32, %c0_i32_0 : i32, i32, i32
  }
  func.func @transform_1(%arg0: i32, %arg1: memref<4xi32, #tpu.memory_space<smem>>) -> (i32, i32) {
    %c0_i32 = arith.constant 0 : i32
    %c0_i32_0 = arith.constant 0 : i32
    return %arg0, %c0_i32 : i32, i32
  }
  func.func @transform_2(%arg0: i32, %arg1: memref<4xi32, #tpu.memory_space<smem>>) -> (i32, i32) {
    %c0_i32 = arith.constant 0 : i32
    %c0_i32_0 = arith.constant 0 : i32
    %c0_i32_1 = arith.constant 0 : i32
    return %c0_i32, %c0_i32_0 : i32, i32
  }
  func.func @transform_3(%arg0: i32, %arg1: memref<4xi32, #tpu.memory_space<smem>>) -> (i32, i32) {
    %c0_i32 = arith.constant 0 : i32
    %c0_i32_0 = arith.constant 0 : i32
    %c0_i32_1 = arith.constant 0 : i32
    return %c0_i32, %c0_i32_0 : i32, i32
  }
  func.func @transform_4(%arg0: i32, %arg1: memref<4xi32, #tpu.memory_space<smem>>) -> (i32, i32) {
    %c0_i32 = arith.constant 0 : i32
    %c0_i32_0 = arith.constant 0 : i32
    %c0_i32_1 = arith.constant 0 : i32
    return %c0_i32, %c0_i32_0 : i32, i32
  }
  func.func @transform_5(%arg0: i32, %arg1: memref<4xi32, #tpu.memory_space<smem>>) -> (i32, i32) {
    %c0_i32 = arith.constant 0 : i32
    %c0_i32_0 = arith.constant 0 : i32
    %c0_i32_1 = arith.constant 0 : i32
    return %c0_i32, %c0_i32_0 : i32, i32
  }
  func.func @transform_6(%arg0: i32, %arg1: memref<4xi32, #tpu.memory_space<smem>>) -> (i32, i32) {
    %c0_i32 = arith.constant 0 : i32
    %c0_i32_0 = arith.constant 0 : i32
    %c0_i32_1 = arith.constant 0 : i32
    return %c0_i32, %c0_i32_0 : i32, i32
  }
  func.func @transform_7(%arg0: i32, %arg1: memref<4xi32, #tpu.memory_space<smem>>) -> (i32, i32) {
    %c0_i32 = arith.constant 0 : i32
    %c0_i32_0 = arith.constant 0 : i32
    %c0_i32_1 = arith.constant 0 : i32
    return %c0_i32, %c0_i32_0 : i32, i32
  }
  func.func @transform_8(%arg0: i32, %arg1: memref<4xi32, #tpu.memory_space<smem>>) -> (i32, i32) {
    %c0_i32 = arith.constant 0 : i32
    %c0_i32_0 = arith.constant 0 : i32
    %c0_i32_1 = arith.constant 0 : i32
    return %c0_i32, %c0_i32_0 : i32, i32
  }
  func.func @transform_9(%arg0: i32, %arg1: memref<4xi32, #tpu.memory_space<smem>>) -> (i32, i32) {
    %c0_i32 = arith.constant 0 : i32
    %c0_i32_0 = arith.constant 0 : i32
    %c0_i32_1 = arith.constant 0 : i32
    return %c0_i32, %c0_i32_0 : i32, i32
  }
  func.func @transform_10(%arg0: i32, %arg1: memref<4xi32, #tpu.memory_space<smem>>) -> (i32, i32) {
    %c0_i32 = arith.constant 0 : i32
    %c0_i32_0 = arith.constant 0 : i32
    %c0_i32_1 = arith.constant 0 : i32
    return %c0_i32, %c0_i32_0 : i32, i32
  }
  func.func @transform_11(%arg0: i32, %arg1: memref<4xi32, #tpu.memory_space<smem>>) -> (i32, i32) {
    %c0_i32 = arith.constant 0 : i32
    %c0_i32_0 = arith.constant 0 : i32
    %c0_i32_1 = arith.constant 0 : i32
    return %c0_i32, %c0_i32_0 : i32, i32
  }
  func.func @transform_12(%arg0: i32, %arg1: memref<4xi32, #tpu.memory_space<smem>>) -> (i32, i32) {
    %c0_i32 = arith.constant 0 : i32
    %c0_i32_0 = arith.constant 0 : i32
    %c0_i32_1 = arith.constant 0 : i32
    return %c0_i32, %c0_i32_0 : i32, i32
  }
  func.func @transform_13(%arg0: i32, %arg1: memref<4xi32, #tpu.memory_space<smem>>) -> (i32, i32) {
    %c0_i32 = arith.constant 0 : i32
    %c0_i32_0 = arith.constant 0 : i32
    %c0_i32_1 = arith.constant 0 : i32
    return %c0_i32, %c0_i32_0 : i32, i32
  }
  func.func @transform_14(%arg0: i32, %arg1: memref<4xi32, #tpu.memory_space<smem>>) -> (i32, i32) {
    %c0_i32 = arith.constant 0 : i32
    %c0_i32_0 = arith.constant 0 : i32
    %c0_i32_1 = arith.constant 0 : i32
    return %c0_i32, %c0_i32_0 : i32, i32
  }
  func.func @transform_15(%arg0: i32, %arg1: memref<4xi32, #tpu.memory_space<smem>>) -> (i32, i32) {
    %c0_i32 = arith.constant 0 : i32
    %c0_i32_0 = arith.constant 0 : i32
    %c0_i32_1 = arith.constant 0 : i32
    return %c0_i32, %c0_i32_0 : i32, i32
  }
  func.func @transform_16(%arg0: i32, %arg1: memref<4xi32, #tpu.memory_space<smem>>) -> (i32, i32) {
    %c0_i32 = arith.constant 0 : i32
    %c0_i32_0 = arith.constant 0 : i32
    %c0_i32_1 = arith.constant 0 : i32
    return %c0_i32, %c0_i32_0 : i32, i32
  }
  func.func @transform_17(%arg0: i32, %arg1: memref<4xi32, #tpu.memory_space<smem>>) -> (i32, i32) {
    %c0_i32 = arith.constant 0 : i32
    %c0_i32_0 = arith.constant 0 : i32
    %c0_i32_1 = arith.constant 0 : i32
    return %c0_i32, %c0_i32_0 : i32, i32
  }
  func.func @transform_18(%arg0: i32, %arg1: memref<4xi32, #tpu.memory_space<smem>>) -> (i32, i32) {
    %c0_i32 = arith.constant 0 : i32
    %c0_i32_0 = arith.constant 0 : i32
    %c0_i32_1 = arith.constant 0 : i32
    return %c0_i32, %c0_i32_0 : i32, i32
  }
  func.func @transform_19(%arg0: i32, %arg1: memref<4xi32, #tpu.memory_space<smem>>) -> (i32, i32) {
    %c0_i32 = arith.constant 0 : i32
    %c0_i32_0 = arith.constant 0 : i32
    %c0_i32_1 = arith.constant 0 : i32
    return %c0_i32, %c0_i32_0 : i32, i32
  }
  func.func @transform_20(%arg0: i32, %arg1: memref<4xi32, #tpu.memory_space<smem>>) -> (i32, i32) {
    %c0_i32 = arith.constant 0 : i32
    %c0_i32_0 = arith.constant 0 : i32
    %c0_i32_1 = arith.constant 0 : i32
    return %c0_i32, %c0_i32_0 : i32, i32
  }
  func.func @transform_21(%arg0: i32, %arg1: memref<4xi32, #tpu.memory_space<smem>>) -> (i32, i32) {
    %c0_i32 = arith.constant 0 : i32
    %c0_i32_0 = arith.constant 0 : i32
    %c0_i32_1 = arith.constant 0 : i32
    return %c0_i32, %c0_i32_0 : i32, i32
  }
  func.func @transform_22(%arg0: i32, %arg1: memref<4xi32, #tpu.memory_space<smem>>) -> (i32, i32) {
    %c0_i32 = arith.constant 0 : i32
    %c0_i32_0 = arith.constant 0 : i32
    %c0_i32_1 = arith.constant 0 : i32
    return %c0_i32, %c0_i32_0 : i32, i32
  }
  func.func @transform_23(%arg0: i32, %arg1: memref<4xi32, #tpu.memory_space<smem>>) -> (i32, i32) {
    %c0_i32 = arith.constant 0 : i32
    %c0_i32_0 = arith.constant 0 : i32
    %c0_i32_1 = arith.constant 0 : i32
    return %c0_i32, %c0_i32_0 : i32, i32
  }
  func.func @transform_24(%arg0: i32, %arg1: memref<4xi32, #tpu.memory_space<smem>>) -> (i32, i32) {
    %c0_i32 = arith.constant 0 : i32
    %c0_i32_0 = arith.constant 0 : i32
    return %arg0, %c0_i32 : i32, i32
  }
}

</mosaic_0001>

<llo_original>
// kernel: tpu_custom_call.1
$region0: #{tpu_custom_call.1}
  #allocation0 [shape = 'u32[]', space=smem, size = 0x4, offset = 0x4, fixed_abs, tag = 'smem constant byte address 0x4 - core index']
  #allocation1 [shape = 'u32[144,128]{1,0:T(1,128)}', space=vmem, size = 0x12000, scoped, tag = 'internal scratch']
  #allocation2 [shape = 's32[1]{0}', space=sflag, size = 0x4, scoped, tag = 'scoped memory for tpu_custom_call.1']
  #allocation3 [shape = 'u8[512]{0}', space=smem, size = 0x200, scoped, tag = 'prefetched SMEM operand 0']
  %s0 = inlined_call_operand.hbm [shape: s32[4], index: 0, kind: input, shape index: {}]
  %s1 = inlined_call_operand.vmem [shape: f32[2,8,4], index: 1, kind: input, shape index: {}]
  %s2 = inlined_call_operand.hbm [shape: f32[2,8], index: 2, kind: input, shape index: {}]
  %s3 = inlined_call_operand.hbm [shape: f32[4,32], index: 3, kind: input, shape index: {}]
  %s4 = inlined_call_operand.hbm [shape: f32[4,32], index: 4, kind: input, shape index: {}]
  %s5 = inlined_call_operand.hbm [shape: f32[4,32], index: 5, kind: input, shape index: {}]
  %s6 = inlined_call_operand.vmem [shape: f32[32,32], index: 6, kind: input, shape index: {}]
  %s7 = inlined_call_operand.vmem [shape: f32[32,32], index: 7, kind: input, shape index: {}]
  %s8 = inlined_call_operand.hbm [shape: f32[32,32], index: 8, kind: input, shape index: {}]
  %s9 = inlined_call_operand.hbm [shape: f32[1,32], index: 9, kind: input, shape index: {}]
  %s10 = inlined_call_operand.hbm [shape: f32[1,32], index: 10, kind: input, shape index: {}]
  %s11 = inlined_call_operand.hbm [shape: f32[1,32], index: 11, kind: input, shape index: {}]
  %s12 = inlined_call_operand.hbm [shape: f32[1,32], index: 12, kind: input, shape index: {}]
  %s13 = inlined_call_operand.vmem [shape: f32[8,32], index: 13, kind: input, shape index: {}]
  %s14 = inlined_call_operand.hbm [shape: f32[8,32], index: 14, kind: input, shape index: {}]
  %s15 = inlined_call_operand.vmem [shape: f32[8,32], index: 15, kind: input, shape index: {}]
  %s16 = inlined_call_operand.vmem [shape: f32[32,32], index: 16, kind: input, shape index: {}]
  %s17 = inlined_call_operand.hbm [shape: f32[32,32], index: 17, kind: input, shape index: {}]
  %s18 = inlined_call_operand.hbm [shape: f32[32,32], index: 18, kind: input, shape index: {}]
  %s19 = inlined_call_operand.vmem [shape: f32[1,32], index: 19, kind: input, shape index: {}]
  %s20 = inlined_call_operand.vmem [shape: f32[1,32], index: 20, kind: input, shape index: {}]
  %s21 = inlined_call_operand.vmem [shape: f32[1,32], index: 21, kind: input, shape index: {}]
  %s22 = inlined_call_operand.vmem [shape: f32[1,32], index: 22, kind: input, shape index: {}]
  %s23 = inlined_call_operand.vmem [shape: f32[32,2], index: 23, kind: input, shape index: {}]
  %s24 = inlined_call_operand.vmem [shape: f32[1,2], index: 24, kind: input, shape index: {}]
  %s25 = inlined_call_operand.hbm [shape: f32[2,8], index: 25, kind: output, shape index: {}]
  %s26 = sld [smem:[#allocation0]]
  $region154: #{tpu_custom_call.1} parent=0
    _
  %s28 = ssub.s32 1, %s26
  %s29 = scalar_select 0, %s28, %s26
  %31 = dma.hbm_to_smem %s0, 16, [#allocation3], [#allocation2]
  %32 = dma.done [#allocation2], 16
  %33 = sfence
  $region1: #{tpu_custom_call.1} parent=0
    #allocation4 [shape = 'u8[1024]{0}', space=vmem, size = 0x400, scoped, tag = 'input window, operand 2, single buffered']
    #allocation5 [shape = 's32[1]{0}', space=sflag, size = 0x4, scoped, tag = 'scoped memory for tpu_custom_call.1']
    #allocation6 [shape = 's32[1]{0}', space=sflag, size = 0x4, scoped, tag = 'scoped memory for tpu_custom_call.1']
    #allocation7 [shape = 'u8[2048]{0}', space=vmem, size = 0x800, scoped, tag = 'input window, operand 3, single buffered']
    #allocation8 [shape = 's32[1]{0}', space=sflag, size = 0x4, scoped, tag = 'scoped memory for tpu_custom_call.1']
    #allocation9 [shape = 'u8[2048]{0}', space=vmem, size = 0x800, scoped, tag = 'input window, operand 4, single buffered']
    #allocation10 [shape = 'u8[2048]{0}', space=vmem, size = 0x800, scoped, tag = 'input window, operand 5, single buffered']
    #allocation11 [shape = 's32[1]{0}', space=sflag, size = 0x4, scoped, tag = 'scoped memory for tpu_custom_call.1']
    #allocation12 [shape = 'u8[16384]{0}', space=vmem, size = 0x4000, scoped, tag = 'input window, operand 8, single buffered']
    #allocation13 [shape = 'u8[512]{0}', space=vmem, size = 0x400, scoped, tag = 'input window, operand 9, single buffered']
    #allocation14 [shape = 's32[1]{0}', space=sflag, size = 0x4, scoped, tag = 'scoped memory for tpu_custom_call.1']
    #allocation15 [shape = 'u8[512]{0}', space=vmem, size = 0x400, scoped, tag = 'input window, operand 10, single buffered']
    #allocation16 [shape = 'u8[512]{0}', space=vmem, size = 0x400, scoped, tag = 'input window, operand 11, single buffered']
    #allocation17 [shape = 's32[1]{0}', space=sflag, size = 0x4, scoped, tag = 'scoped memory for tpu_custom_call.1']
    #allocation18 [shape = 'u8[512]{0}', space=vmem, size = 0x400, scoped, tag = 'input window, operand 12, single buffered']
    #allocation19 [shape = 'u8[4096]{0}', space=vmem, size = 0x1000, scoped, tag = 'input window, operand 14, single buffered']
    #allocation20 [shape = 's32[1]{0}', space=sflag, size = 0x4, scoped, tag = 'scoped memory for tpu_custom_call.1']
    #allocation21 [shape = 'u8[16384]{0}', space=vmem, size = 0x4000, scoped, tag = 'input window, operand 17, single buffered']
    #allocation22 [shape = 'u8[16384]{0}', space=vmem, size = 0x4000, scoped, tag = 'input window, operand 18, single buffered']
    #allocation23 [shape = 's32[1]{0}', space=sflag, size = 0x4, scoped, tag = 'scoped memory for tpu_custom_call.1']
    #allocation24 [shape = 'u8[1024]{0}', space=vmem, size = 0x400, scoped, tag = 'output window, operand 0, single buffered']
    %34 = vsyncpa [#allocation5], 0
    %35 = vsyncpa [#allocation8], 0
    %36 = vsyncpa [#allocation11], 0
    %37 = vsyncpa [#allocation14], 0
    %38 = vsyncpa [#allocation17], 0
    %39 = vsyncpa [#allocation20], 0
    %40 = vsyncpa [#allocation23], 0
    %41 = vsyncpa [#allocation6], 0
    // Predicated region
    $region2: #{tpu_custom_call.1} parent=1 // pred_check
      _
    $region3: #{tpu_custom_call.1} parent=1 // pred_check_branch
      %43 = sbr.rel (0) target = $region5
    $region4: #{tpu_custom_call.1} parent=1 // pred_region
      _
    $region5: #{tpu_custom_call.1} parent=1 // pred_fallthru
      _
    // Predicated region
    $region6: #{tpu_custom_call.1} parent=1 // pred_check
      _
    $region7: #{tpu_custom_call.1} parent=1 // pred_check_branch
      %45 = sbr.rel (0) target = $region9
    $region8: #{tpu_custom_call.1} parent=1 // pred_region
      %s47 = ssub.s32 32, 32
      %48 = vsyncadd [#allocation5], %s47
      %s50 = sshll.u32 [#allocation4], 4
      %s51 = int_to_ptr.vmem [resolvable:$true] %s50
      %53 = dma.hbm_to_vmem [thread:$0]  %s2, 32, %s51, [#allocation5]
    $region9: #{tpu_custom_call.1} parent=1 // pred_fallthru
      _
    // Predicated region
    $region10: #{tpu_custom_call.1} parent=1 // pred_check
      _
    $region11: #{tpu_custom_call.1} parent=1 // pred_check_branch
      %55 = sbr.rel (0) target = $region13
    $region12: #{tpu_custom_call.1} parent=1 // pred_region
      %s57 = ssub.s32 64, 64
      %58 = vsyncadd [#allocation8], %s57
      %s60 = sshll.u32 [#allocation7], 4
      %s61 = int_to_ptr.vmem [resolvable:$true] %s60
      %63 = dma.hbm_to_vmem [thread:$0]  %s3, 64, %s61, [#allocation8]
    $region13: #{tpu_custom_call.1} parent=1 // pred_fallthru
      _
    // Predicated region
    $region14: #{tpu_custom_call.1} parent=1 // pred_check
      _
    $region15: #{tpu_custom_call.1} parent=1 // pred_check_branch
      %65 = sbr.rel (0) target = $region17
    $region16: #{tpu_custom_call.1} parent=1 // pred_region
      %s67 = ssub.s32 64, 64
      %68 = vsyncadd [#allocation8], %s67
      %s70 = sshll.u32 [#allocation9], 4
      %s71 = int_to_ptr.vmem [resolvable:$true] %s70
      %73 = dma.hbm_to_vmem [thread:$0]  %s4, 64, %s71, [#allocation8]
    $region17: #{tpu_custom_call.1} parent=1 // pred_fallthru
      _
    // Predicated region
    $region18: #{tpu_custom_call.1} parent=1 // pred_check
      _
    $region19: #{tpu_custom_call.1} parent=1 // pred_check_branch
      %75 = sbr.rel (0) target = $region21
    $region20: #{tpu_custom_call.1} parent=1 // pred_region
      %s77 = ssub.s32 64, 64
      %78 = vsyncadd [#allocation11], %s77
      %s80 = sshll.u32 [#allocation10], 4
      %s81 = int_to_ptr.vmem [resolvable:$true] %s80
      %83 = dma.hbm_to_vmem [thread:$0]  %s5, 64, %s81, [#allocation11]
    $region21: #{tpu_custom_call.1} parent=1 // pred_fallthru
      _
    // Predicated region
    $region22: #{tpu_custom_call.1} parent=1 // pred_check
      _
    $region23: #{tpu_custom_call.1} parent=1 // pred_check_branch
      %85 = sbr.rel (0) target = $region25
    $region24: #{tpu_custom_call.1} parent=1 // pred_region
      _
    $region25: #{tpu_custom_call.1} parent=1 // pred_fallthru
      _
    // Predicated region
    $region26: #{tpu_custom_call.1} parent=1 // pred_check
      _
    $region27: #{tpu_custom_call.1} parent=1 // pred_check_branch
      %87 = sbr.rel (0) target = $region29
    $region28: #{tpu_custom_call.1} parent=1 // pred_region
      _
    $region29: #{tpu_custom_call.1} parent=1 // pred_fallthru
      _
    // Predicated region
    $region30: #{tpu_custom_call.1} parent=1 // pred_check
      _
    $region31: #{tpu_custom_call.1} parent=1 // pred_check_branch
      %89 = sbr.rel (0) target = $region33
    $region32: #{tpu_custom_call.1} parent=1 // pred_region
      %s91 = ssub.s32 512, 512
      %92 = vsyncadd [#allocation11], %s91
      %s93 = sshll.u32 [#allocation12], 4
      %s94 = int_to_ptr.vmem [resolvable:$true] %s93
      %99 = dma.hbm_to_vmem [thread:$0]  %s8, 512, %s94, [#allocation11], 128, 128, 8
    $region33: #{tpu_custom_call.1} parent=1 // pred_fallthru
      _
    // Predicated region
    $region34: #{tpu_custom_call.1} parent=1 // pred_check
      _
    $region35: #{tpu_custom_call.1} parent=1 // pred_check_branch
      %101 = sbr.rel (0) target = $region37
    $region36: #{tpu_custom_call.1} parent=1 // pred_region
      %s103 = ssub.s32 16, 16
      %104 = vsyncadd [#allocation14], %s103
      %s106 = sshll.u32 [#allocation13], 4
      %s107 = int_to_ptr.vmem [resolvable:$true] %s106
      %109 = dma.hbm_to_vmem [thread:$0]  %s9, 16, %s107, [#allocation14]
    $region37: #{tpu_custom_call.1} parent=1 // pred_fallthru
      _
    // Predicated region
    $region38: #{tpu_custom_call.1} parent=1 // pred_check
      _
    $region39: #{tpu_custom_call.1} parent=1 // pred_check_branch
      %111 = sbr.rel (0) target = $region41
    $region40: #{tpu_custom_call.1} parent=1 // pred_region
      %s113 = ssub.s32 16, 16
      %114 = vsyncadd [#allocation14], %s113
      %s116 = sshll.u32 [#allocation15], 4
      %s117 = int_to_ptr.vmem [resolvable:$true] %s116
      %119 = dma.hbm_to_vmem [thread:$0]  %s10, 16, %s117, [#allocation14]
    $region41: #{tpu_custom_call.1} parent=1 // pred_fallthru
      _
    // Predicated region
    $region42: #{tpu_custom_call.1} parent=1 // pred_check
      _
    $region43: #{tpu_custom_call.1} parent=1 // pred_check_branch
      %121 = sbr.rel (0) target = $region45
    $region44: #{tpu_custom_call.1} parent=1 // pred_region
      %s123 = ssub.s32 16, 16
      %124 = vsyncadd [#allocation17], %s123
      %s126 = sshll.u32 [#allocation16], 4
      %s127 = int_to_ptr.vmem [resolvable:$true] %s126
      %129 = dma.hbm_to_vmem [thread:$0]  %s11, 16, %s127, [#allocation17]
    $region45: #{tpu_custom_call.1} parent=1 // pred_fallthru
      _
    // Predicated region
    $region46: #{tpu_custom_call.1} parent=1 // pred_check
      _
    $region47: #{tpu_custom_call.1} parent=1 // pred_check_branch
      %131 = sbr.rel (0) target = $region49
    $region48: #{tpu_custom_call.1} parent=1 // pred_region
      %s133 = ssub.s32 16, 16
      %134 = vsyncadd [#allocation17], %s133
      %s136 = sshll.u32 [#allocation18], 4
      %s137 = int_to_ptr.vmem [resolvable:$true] %s136
      %139 = dma.hbm_to_vmem [thread:$0]  %s12, 16, %s137, [#allocation17]
    $region49: #{tpu_custom_call.1} parent=1 // pred_fallthru
      _
    // Predicated region
    $region50: #{tpu_custom_call.1} parent=1 // pred_check
      _
    $region51: #{tpu_custom_call.1} parent=1 // pred_check_branch
      %141 = sbr.rel (0) target = $region53
    $region52: #{tpu_custom_call.1} parent=1 // pred_region
      _
    $region53: #{tpu_custom_call.1} parent=1 // pred_fallthru
      _
    // Predicated region
    $region54: #{tpu_custom_call.1} parent=1 // pred_check
      _
    $region55: #{tpu_custom_call.1} parent=1 // pred_check_branch
      %143 = sbr.rel (0) target = $region57
    $region56: #{tpu_custom_call.1} parent=1 // pred_region
      %s145 = ssub.s32 128, 128
      %146 = vsyncadd [#allocation20], %s145
      %s148 = sshll.u32 [#allocation19], 4
      %s149 = int_to_ptr.vmem [resolvable:$true] %s148
      %151 = dma.hbm_to_vmem [thread:$0]  %s14, 128, %s149, [#allocation20]
    $region57: #{tpu_custom_call.1} parent=1 // pred_fallthru
      _
    // Predicated region
    $region58: #{tpu_custom_call.1} parent=1 // pred_check
      _
    $region59: #{tpu_custom_call.1} parent=1 // pred_check_branch
      %153 = sbr.rel (0) target = $region61
    $region60: #{tpu_custom_call.1} parent=1 // pred_region
      _
    $region61: #{tpu_custom_call.1} parent=1 // pred_fallthru
      _
    // Predicated region
    $region62: #{tpu_custom_call.1} parent=1 // pred_check
      _
    $region63: #{tpu_custom_call.1} parent=1 // pred_check_branch
      %155 = sbr.rel (0) target = $region65
    $region64: #{tpu_custom_call.1} parent=1 // pred_region
      _
    $region65: #{tpu_custom_call.1} parent=1 // pred_fallthru
      _
    // Predicated region
    $region66: #{tpu_custom_call.1} parent=1 // pred_check
      _
    $region67: #{tpu_custom_call.1} parent=1 // pred_check_branch
      %157 = sbr.rel (0) target = $region69
    $region68: #{tpu_custom_call.1} parent=1 // pred_region
      %s159 = ssub.s32 512, 512
      %160 = vsyncadd [#allocation20], %s159
      %s161 = sshll.u32 [#allocation21], 4
      %s162 = int_to_ptr.vmem [resolvable:$true] %s161
      %167 = dma.hbm_to_vmem [thread:$0]  %s17, 512, %s162, [#allocation20], 128, 128, 8
    $region69: #{tpu_custom_call.1} parent=1 // pred_fallthru
      _
    // Predicated region
    $region70: #{tpu_custom_call.1} parent=1 // pred_check
      _
    $region71: #{tpu_custom_call.1} parent=1 // pred_check_branch
      %169 = sbr.rel (0) target = $region73
    $region72: #{tpu_custom_call.1} parent=1 // pred_region
      %s171 = ssub.s32 512, 512
      %172 = vsyncadd [#allocation23], %s171
      %s173 = sshll.u32 [#allocation22], 4
      %s174 = int_to_ptr.vmem [resolvable:$true] %s173
      %179 = dma.hbm_to_vmem [thread:$0]  %s18, 512, %s174, [#allocation23], 128, 128, 8
    $region73: #{tpu_custom_call.1} parent=1 // pred_fallthru
      _
    // Predicated region
    $region74: #{tpu_custom_call.1} parent=1 // pred_check
      _
    $region75: #{tpu_custom_call.1} parent=1 // pred_check_branch
      %181 = sbr.rel (0) target = $region77
    $region76: #{tpu_custom_call.1} parent=1 // pred_region
      _
    $region77: #{tpu_custom_call.1} parent=1 // pred_fallthru
      _
    // Predicated region
    $region78: #{tpu_custom_call.1} parent=1 // pred_check
      _
    $region79: #{tpu_custom_call.1} parent=1 // pred_check_branch
      %183 = sbr.rel (0) target = $region81
    $region80: #{tpu_custom_call.1} parent=1 // pred_region
      _
    $region81: #{tpu_custom_call.1} parent=1 // pred_fallthru
      _
    // Predicated region
    $region82: #{tpu_custom_call.1} parent=1 // pred_check
      _
    $region83: #{tpu_custom_call.1} parent=1 // pred_check_branch
      %185 = sbr.rel (0) target = $region85
    $region84: #{tpu_custom_call.1} parent=1 // pred_region
      _
    $region85: #{tpu_custom_call.1} parent=1 // pred_fallthru
      _
    // Predicated region
    $region86: #{tpu_custom_call.1} parent=1 // pred_check
      _
    $region87: #{tpu_custom_call.1} parent=1 // pred_check_branch
      %187 = sbr.rel (0) target = $region89
    $region88: #{tpu_custom_call.1} parent=1 // pred_region
      _
    $region89: #{tpu_custom_call.1} parent=1 // pred_fallthru
      _
    // Predicated region
    $region90: #{tpu_custom_call.1} parent=1 // pred_check
      _
    $region91: #{tpu_custom_call.1} parent=1 // pred_check_branch
      %189 = sbr.rel (0) target = $region93
    $region92: #{tpu_custom_call.1} parent=1 // pred_region
      _
    $region93: #{tpu_custom_call.1} parent=1 // pred_fallthru
      _
    // Predicated region
    $region94: #{tpu_custom_call.1} parent=1 // pred_check
      _
    $region95: #{tpu_custom_call.1} parent=1 // pred_check_branch
      %191 = sbr.rel (0) target = $region97
    $region96: #{tpu_custom_call.1} parent=1 // pred_region
      _
    $region97: #{tpu_custom_call.1} parent=1 // pred_fallthru
      _
    // Predicated region
    $region98: #{tpu_custom_call.1} parent=1 // pred_check
      _
    $region99: #{tpu_custom_call.1} parent=1 // pred_check_branch
      %193 = sbr.rel (0) target = $region101
    $region100: #{tpu_custom_call.1} parent=1 // pred_region
      %194 = dma.done [#allocation5], 32
    $region101: #{tpu_custom_call.1} parent=1 // pred_fallthru
      _
    // Predicated region
    $region102: #{tpu_custom_call.1} parent=1 // pred_check
      _
    $region103: #{tpu_custom_call.1} parent=1 // pred_check_branch
      %196 = sbr.rel (0) target = $region105
    $region104: #{tpu_custom_call.1} parent=1 // pred_region
      %197 = dma.done [#allocation8], 64
    $region105: #{tpu_custom_call.1} parent=1 // pred_fallthru
      _
    // Predicated region
    $region106: #{tpu_custom_call.1} parent=1 // pred_check
      _
    $region107: #{tpu_custom_call.1} parent=1 // pred_check_branch
      %199 = sbr.rel (0) target = $region109
    $region108: #{tpu_custom_call.1} parent=1 // pred_region
      %200 = dma.done [#allocation8], 64
    $region109: #{tpu_custom_call.1} parent=1 // pred_fallthru
      _
    // Predicated region
    $region110: #{tpu_custom_call.1} parent=1 // pred_check
      _
    $region111: #{tpu_custom_call.1} parent=1 // pred_check_branch
      %202 = sbr.rel (0) target = $region113
    $region112: #{tpu_custom_call.1} parent=1 // pred_region
      %203 = dma.done [#allocation11], 64
    $region113: #{tpu_custom_call.1} parent=1 // pred_fallthru
      _
    // Predicated region
    $region114: #{tpu_custom_call.1} parent=1 // pred_check
      _
    $region115: #{tpu_custom_call.1} parent=1 // pred_check_branch
      %205 = sbr.rel (0) target = $region117
    $region116: #{tpu_custom_call.1} parent=1 // pred_region
      %206 = dma.done [#allocation11], 512
    $region117: #{tpu_custom_call.1} parent=1 // pred_fallthru
      _
    // Predicated region
    $region118: #{tpu_custom_call.1} parent=1 // pred_check
      _
    $region119: #{tpu_custom_call.1} parent=1 // pred_check_branch
      %208 = sbr.rel (0) target = $region121
    $region120: #{tpu_custom_call.1} parent=1 // pred_region
      %209 = dma.done [#allocation14], 16
    $region121: #{tpu_custom_call.1} parent=1 // pred_fallthru
      _
    // Predicated region
    $region122: #{tpu_custom_call.1} parent=1 // pred_check
      _
    $region123: #{tpu_custom_call.1} parent=1 // pred_check_branch
      %211 = sbr.rel (0) target = $region125
    $region124: #{tpu_custom_call.1} parent=1 // pred_region
      %212 = dma.done [#allocation14], 16
    $region125: #{tpu_custom_call.1} parent=1 // pred_fallthru
      _
    // Predicated region
    $region126: #{tpu_custom_call.1} parent=1 // pred_check
      _
    $region127: #{tpu_custom_call.1} parent=1 // pred_check_branch
      %214 = sbr.rel (0) target = $region129
    $region128: #{tpu_custom_call.1} parent=1 // pred_region
      %215 = dma.done [#allocation17], 16
    $region129: #{tpu_custom_call.1} parent=1 // pred_fallthru
      _
    // Predicated region
    $region130: #{tpu_custom_call.1} parent=1 // pred_check
      _
    $region131: #{tpu_custom_call.1} parent=1 // pred_check_branch
      %217 = sbr.rel (0) target = $region133
    $region132: #{tpu_custom_call.1} parent=1 // pred_region
      %218 = dma.done [#allocation17], 16
    $region133: #{tpu_custom_call.1} parent=1 // pred_fallthru
      _
    // Predicated region
    $region134: #{tpu_custom_call.1} parent=1 // pred_check
      _
    $region135: #{tpu_custom_call.1} parent=1 // pred_check_branch
      %220 = sbr.rel (0) target = $region137
    $region136: #{tpu_custom_call.1} parent=1 // pred_region
      %221 = dma.done [#allocation20], 128
    $region137: #{tpu_custom_call.1} parent=1 // pred_fallthru
      _
    // Predicated region
    $region138: #{tpu_custom_call.1} parent=1 // pred_check
      _
    $region139: #{tpu_custom_call.1} parent=1 // pred_check_branch
      %223 = sbr.rel (0) target = $region141
    $region140: #{tpu_custom_call.1} parent=1 // pred_region
      %224 = dma.done [#allocation20], 512
    $region141: #{tpu_custom_call.1} parent=1 // pred_fallthru
      _
    // Predicated region
    $region142: #{tpu_custom_call.1} parent=1 // pred_check
      _
    $region143: #{tpu_custom_call.1} parent=1 // pred_check_branch
      %226 = sbr.rel (0) target = $region145
    $region144: #{tpu_custom_call.1} parent=1 // pred_region
      %227 = dma.done [#allocation23], 512
    $region145: #{tpu_custom_call.1} parent=1 // pred_fallthru
      _
    %v228 = vld [vmem:[%s1] sm:$0xff]
    %v229 = vld [vmem:[%s1 + $0x8] sm:$0xff]
    %v230 = vld [vmem:[#allocation7] sm:$0xf]
    %v231 = vld [vmem:[#allocation13] sm:$0x1]
    %v233 = vlaneseq
    %v234 = vshrl.u32 %v233, 7
    %v235 = vsub.s32 0, %v234
    %v236 = vrot.slane %v231, %v235
    %vm238 = vcmask 31744
    %v240 = vsel %vm238, %v228, 0
    %v243 = vsel %vm238, %v229, 0
    %vm245 = vcmask 1043456
    %v247 = vsel %vm245, %v230, 0
    %249 = vmatprep.subr.mxu0 0.0
    %250 = vmatpush1.msra.mxu0 %v247
    %251 = vmatprep.subr.mxu0 0.0
    %252 = vmatpush1.msra.mxu0 0.0
    %253 = vmatprep.subr.mxu0 0.0
    %254 = vmatpush1.msra.mxu0 0.0
    %255 = vmatprep.subr.mxu0 0.0
    %256 = vmatpush1.msra.mxu0 0.0
    %257 = vmatprep.subr.mxu0 0.0
    %258 = vmatpush1.msra.mxu0 0.0
    %259 = vmatprep.subr.mxu0 0.0
    %260 = vmatpush1.msra.mxu0 0.0
    %261 = vmatprep.subr.mxu0 0.0
    %262 = vmatpush1.msra.mxu0 0.0
    %263 = vmatprep.subr.mxu0 0.0
    %264 = vmatpush1.msra.mxu0 0.0
    %265 = vmatprep.subr.mxu0 0.0
    %266 = vmatpush1.msra.mxu0 0.0
    %267 = vmatprep.subr.mxu0 0.0
    %268 = vmatpush1.msra.mxu0 0.0
    %269 = vmatprep.subr.mxu0 0.0
    %270 = vmatpush1.msra.mxu0 0.0
    %271 = vmatprep.subr.mxu0 0.0
    %272 = vmatpush1.msra.mxu0 0.0
    %273 = vmatprep.subr.mxu0 0.0
    %274 = vmatpush1.msra.mxu0 0.0
    %275 = vmatprep.subr.mxu0 0.0
    %276 = vmatpush1.msra.mxu0 0.0
    %277 = vmatprep.subr.mxu0 0.0
    %278 = vmatpush1.msra.mxu0 0.0
    %279 = vmatprep.subr.mxu0 0.0
    %280 = vmatpush1.msra.mxu0 0.0
    %281 = vmatprep.subr.mxu0 0.0
    %282 = vmatpush1.msra.mxu0 0.0
    %283 = vmatprep.subr.mxu0 0.0
    %284 = vmatpush1.msra.mxu0 0.0
    %285 = vmatprep.subr.mxu0 0.0
    %286 = vmatpush1.msra.mxu0 0.0
    %287 = vmatprep.subr.mxu0 0.0
    %288 = vmatpush1.msra.mxu0 0.0
    %289 = vmatprep.subr.mxu0 0.0
    %290 = vmatpush1.msra.mxu0 0.0
    %291 = vmatprep.subr.mxu0 0.0
    %292 = vmatpush1.msra.mxu0 0.0
    %293 = vmatprep.subr.mxu0 0.0
    %294 = vmatpush1.msra.mxu0 0.0
    %295 = vmatprep.subr.mxu0 0.0
    %296 = vmatpush1.msra.mxu0 0.0
    %297 = vmatprep.subr.mxu0 0.0
    %298 = vmatpush1.msra.mxu0 0.0
    %299 = vmatprep.subr.mxu0 0.0
    %300 = vmatpush1.msra.mxu0 0.0
    %301 = vmatprep.subr.mxu0 0.0
    %302 = vmatpush1.msra.mxu0 0.0
    %303 = vmatprep.subr.mxu0 0.0
    %304 = vmatpush1.msra.mxu0 0.0
    %305 = vmatprep.subr.mxu0 0.0
    %306 = vmatpush1.msra.mxu0 0.0
    %307 = vmatprep.subr.mxu0 0.0
    %308 = vmatpush1.msra.mxu0 0.0
    %309 = vmatprep.subr.mxu0 0.0
    %310 = vmatpush1.msra.mxu0 0.0
    %311 = vmatprep.subr.mxu0 0.0
    %312 = vmatpush1.msra.mxu0 0.0
    %313 = vmatprep.mubr.f32.mxu0 0.0
    %314 = vmatmul.mubr.f32.gmra.mrb[0].mxu0 %v240
    %v315 = vpop.f32.mrb[0].mxu0
    %v316 = vadd.f32 %v236, %v315
    %v317 = vpop.f32.mrb[0].mxu0
    %318 = vmatprep.mubr.f32.mxu0 0.0
    %319 = vmatmul.mubr.f32.gmra.mrb[0].mxu0 %v243
    %v320 = vpop.f32.mrb[0].mxu0
    %v321 = vadd.f32 %v236, %v320
    %v322 = vpop.f32.mrb[0].mxu0
    %323 = vdwg.mxu0
    %v324 = vld [vmem:[#allocation9] sm:$0xf]
    %v325 = vld [vmem:[#allocation15] sm:$0x1]
    %v327 = vlaneseq
    %v328 = vshrl.u32 %v327, 7
    %v329 = vsub.s32 0, %v328
    %v330 = vrot.slane %v325, %v329
    %v333 = vsel %vm245, %v324, 0
    %335 = vmatprep.subr.mxu0 0.0
    %336 = vmatpush1.msra.mxu0 %v333
    %337 = vmatprep.subr.mxu0 0.0
    %338 = vmatpush1.msra.mxu0 0.0
    %339 = vmatprep.subr.mxu0 0.0
    %340 = vmatpush1.msra.mxu0 0.0
    %341 = vmatprep.subr.mxu0 0.0
    %342 = vmatpush1.msra.mxu0 0.0
    %343 = vmatprep.subr.mxu0 0.0
    %344 = vmatpush1.msra.mxu0 0.0
    %345 = vmatprep.subr.mxu0 0.0
    %346 = vmatpush1.msra.mxu0 0.0
    %347 = vmatprep.subr.mxu0 0.0
    %348 = vmatpush1.msra.mxu0 0.0
    %349 = vmatprep.subr.mxu0 0.0
    %350 = vmatpush1.msra.mxu0 0.0
    %351 = vmatprep.subr.mxu0 0.0
    %352 = vmatpush1.msra.mxu0 0.0
    %353 = vmatprep.subr.mxu0 0.0
    %354 = vmatpush1.msra.mxu0 0.0
    %355 = vmatprep.subr.mxu0 0.0
    %356 = vmatpush1.msra.mxu0 0.0
    %357 = vmatprep.subr.mxu0 0.0
    %358 = vmatpush1.msra.mxu0 0.0
    %359 = vmatprep.subr.mxu0 0.0
    %360 = vmatpush1.msra.mxu0 0.0
    %361 = vmatprep.subr.mxu0 0.0
    %362 = vmatpush1.msra.mxu0 0.0
    %363 = vmatprep.subr.mxu0 0.0
    %364 = vmatpush1.msra.mxu0 0.0
    %365 = vmatprep.subr.mxu0 0.0
    %366 = vmatpush1.msra.mxu0 0.0
    %367 = vmatprep.subr.mxu0 0.0
    %368 = vmatpush1.msra.mxu0 0.0
    %369 = vmatprep.subr.mxu0 0.0
    %370 = vmatpush1.msra.mxu0 0.0
    %371 = vmatprep.subr.mxu0 0.0
    %372 = vmatpush1.msra.mxu0 0.0
    %373 = vmatprep.subr.mxu0 0.0
    %374 = vmatpush1.msra.mxu0 0.0
    %375 = vmatprep.subr.mxu0 0.0
    %376 = vmatpush1.msra.mxu0 0.0
    %377 = vmatprep.subr.mxu0 0.0
    %378 = vmatpush1.msra.mxu0 0.0
    %379 = vmatprep.subr.mxu0 0.0
    %380 = vmatpush1.msra.mxu0 0.0
    %381 = vmatprep.subr.mxu0 0.0
    %382 = vmatpush1.msra.mxu0 0.0
    %383 = vmatprep.subr.mxu0 0.0
    %384 = vmatpush1.msra.mxu0 0.0
    %385 = vmatprep.subr.mxu0 0.0
    %386 = vmatpush1.msra.mxu0 0.0
    %387 = vmatprep.subr.mxu0 0.0
    %388 = vmatpush1.msra.mxu0 0.0
    %389 = vmatprep.subr.mxu0 0.0
    %390 = vmatpush1.msra.mxu0 0.0
    %391 = vmatprep.subr.mxu0 0.0
    %392 = vmatpush1.msra.mxu0 0.0
    %393 = vmatprep.subr.mxu0 0.0
    %394 = vmatpush1.msra.mxu0 0.0
    %395 = vmatprep.subr.mxu0 0.0
    %396 = vmatpush1.msra.mxu0 0.0
    %397 = vmatprep.subr.mxu0 0.0
    %398 = vmatpush1.msra.mxu0 0.0
    %399 = vmatprep.mubr.f32.mxu0 0.0
    %400 = vmatmul.mubr.f32.gmra.mrb[0].mxu0 %v240
    %v401 = vpop.f32.mrb[0].mxu0
    %v402 = vadd.f32 %v330, %v401
    %v403 = vpop.f32.mrb[0].mxu0
    %404 = vmatprep.mubr.f32.mxu0 0.0
    %405 = vmatmul.mubr.f32.gmra.mrb[0].mxu0 %v243
    %v406 = vpop.f32.mrb[0].mxu0
    %v407 = vadd.f32 %v330, %v406
    %v408 = vpop.f32.mrb[0].mxu0
    %409 = vdwg.mxu0
    %v410 = vld [vmem:[#allocation10] sm:$0xf]
    %v411 = vld [vmem:[#allocation16] sm:$0x1]
    %v413 = vlaneseq
    %v414 = vshrl.u32 %v413, 7
    %v415 = vsub.s32 0, %v414
    %v416 = vrot.slane %v411, %v415
    %v419 = vsel %vm245, %v410, 0
    %421 = vmatprep.subr.mxu0 0.0
    %422 = vmatpush1.msra.mxu0 %v419
    %423 = vmatprep.subr.mxu0 0.0
    %424 = vmatpush1.msra.mxu0 0.0
    %425 = vmatprep.subr.mxu0 0.0
    %426 = vmatpush1.msra.mxu0 0.0
    %427 = vmatprep.subr.mxu0 0.0
    %428 = vmatpush1.msra.mxu0 0.0
    %429 = vmatprep.subr.mxu0 0.0
    %430 = vmatpush1.msra.mxu0 0.0
    %431 = vmatprep.subr.mxu0 0.0
    %432 = vmatpush1.msra.mxu0 0.0
    %433 = vmatprep.subr.mxu0 0.0
    %434 = vmatpush1.msra.mxu0 0.0
    %435 = vmatprep.subr.mxu0 0.0
    %436 = vmatpush1.msra.mxu0 0.0
    %437 = vmatprep.subr.mxu0 0.0
    %438 = vmatpush1.msra.mxu0 0.0
    %439 = vmatprep.subr.mxu0 0.0
    %440 = vmatpush1.msra.mxu0 0.0
    %441 = vmatprep.subr.mxu0 0.0
    %442 = vmatpush1.msra.mxu0 0.0
    %443 = vmatprep.subr.mxu0 0.0
    %444 = vmatpush1.msra.mxu0 0.0
    %445 = vmatprep.subr.mxu0 0.0
    %446 = vmatpush1.msra.mxu0 0.0
    %447 = vmatprep.subr.mxu0 0.0
    %448 = vmatpush1.msra.mxu0 0.0
    %449 = vmatprep.subr.mxu0 0.0
    %450 = vmatpush1.msra.mxu0 0.0
    %451 = vmatprep.subr.mxu0 0.0
    %452 = vmatpush1.msra.mxu0 0.0
    %453 = vmatprep.subr.mxu0 0.0
    %454 = vmatpush1.msra.mxu0 0.0
    %455 = vmatprep.subr.mxu0 0.0
    %456 = vmatpush1.msra.mxu0 0.0
    %457 = vmatprep.subr.mxu0 0.0
    %458 = vmatpush1.msra.mxu0 0.0
    %459 = vmatprep.subr.mxu0 0.0
    %460 = vmatpush1.msra.mxu0 0.0
    %461 = vmatprep.subr.mxu0 0.0
    %462 = vmatpush1.msra.mxu0 0.0
    %463 = vmatprep.subr.mxu0 0.0
    %464 = vmatpush1.msra.mxu0 0.0
    %465 = vmatprep.subr.mxu0 0.0
    %466 = vmatpush1.msra.mxu0 0.0
    %467 = vmatprep.subr.mxu0 0.0
    %468 = vmatpush1.msra.mxu0 0.0
    %469 = vmatprep.subr.mxu0 0.0
    %470 = vmatpush1.msra.mxu0 0.0
    %471 = vmatprep.subr.mxu0 0.0
    %472 = vmatpush1.msra.mxu0 0.0
    %473 = vmatprep.subr.mxu0 0.0
    %474 = vmatpush1.msra.mxu0 0.0
    %475 = vmatprep.subr.mxu0 0.0
    %476 = vmatpush1.msra.mxu0 0.0
    %477 = vmatprep.subr.mxu0 0.0
    %478 = vmatpush1.msra.mxu0 0.0
    %479 = vmatprep.subr.mxu0 0.0
    %480 = vmatpush1.msra.mxu0 0.0
    %481 = vmatprep.subr.mxu0 0.0
    %482 = vmatpush1.msra.mxu0 0.0
    %483 = vmatprep.subr.mxu0 0.0
    %484 = vmatpush1.msra.mxu0 0.0
    %485 = vmatprep.mubr.f32.mxu0 0.0
    %486 = vmatmul.mubr.f32.gmra.mrb[0].mxu0 %v240
    %v487 = vpop.f32.mrb[0].mxu0
    %v488 = vadd.f32 %v416, %v487
    %v489 = vpop.f32.mrb[0].mxu0
    %490 = vmatprep.mubr.f32.mxu0 0.0
    %491 = vmatmul.mubr.f32.gmra.mrb[0].mxu0 %v243
    %v492 = vpop.f32.mrb[0].mxu0
    %v493 = vadd.f32 %v416, %v492
    %v494 = vpop.f32.mrb[0].mxu0
    %495 = vdwg.mxu0
    %v496 = vld [vmem:[%s6] sm:$0xff]
    %v497 = vld [vmem:[%s6 + $0x8] sm:$0xff]
    %v498 = vld [vmem:[%s6 + $0x10] sm:$0xff]
    %v499 = vld [vmem:[%s6 + $0x18] sm:$0xff]
    %v500 = vld [vmem:[%s7] sm:$0xff]
    %v501 = vld [vmem:[%s7 + $0x8] sm:$0xff]
    %v502 = vld [vmem:[%s7 + $0x10] sm:$0xff]
    %v503 = vld [vmem:[%s7 + $0x18] sm:$0xff]
    %v504 = vld [vmem:[#allocation12] sm:$0xff]
    %v505 = vld [vmem:[#allocation12 + $0x8] sm:$0xff]
    %v506 = vld [vmem:[#allocation12 + $0x10] sm:$0xff]
    %v507 = vld [vmem:[#allocation12 + $0x18] sm:$0xff]
    %v508 = vld [vmem:[#allocation18] sm:$0x1]
    %vm509 = vcmask 261120
    %v511 = vsel %vm509, 0.0, 0
    %513 = vmatprep.subr.mxu0 0.0
    %514 = vmatpush1.msra.mxu0 %v496
    %515 = vmatprep.subr.mxu0 0.0
    %516 = vmatpush1.msra.mxu0 %v497
    %517 = vmatprep.subr.mxu0 0.0
    %518 = vmatpush1.msra.mxu0 %v498
    %519 = vmatprep.subr.mxu0 0.0
    %520 = vmatpush1.msra.mxu0 %v499
    %521 = vmatprep.subr.mxu0 0.0
    %522 = vmatpush1.msra.mxu0 0.0
    %523 = vmatprep.subr.mxu0 0.0
    %524 = vmatpush1.msra.mxu0 0.0
    %525 = vmatprep.subr.mxu0 0.0
    %526 = vmatpush1.msra.mxu0 0.0
    %527 = vmatprep.subr.mxu0 0.0
    %528 = vmatpush1.msra.mxu0 0.0
    %529 = vmatprep.subr.mxu0 0.0
    %530 = vmatpush1.msra.mxu0 0.0
    %531 = vmatprep.subr.mxu0 0.0
    %532 = vmatpush1.msra.mxu0 0.0
    %533 = vmatprep.subr.mxu0 0.0
    %534 = vmatpush1.msra.mxu0 0.0
    %535 = vmatprep.subr.mxu0 0.0
    %536 = vmatpush1.msra.mxu0 0.0
    %537 = vmatprep.subr.mxu0 0.0
    %538 = vmatpush1.msra.mxu0 0.0
    %539 = vmatprep.subr.mxu0 0.0
    %540 = vmatpush1.msra.mxu0 0.0
    %541 = vmatprep.subr.mxu0 0.0
    %542 = vmatpush1.msra.mxu0 0.0
    %543 = vmatprep.subr.mxu0 0.0
    %544 = vmatpush1.msra.mxu0 0.0
    %545 = vmatprep.subr.mxu0 0.0
    %546 = vmatpush1.msra.mxu0 0.0
    %547 = vmatprep.subr.mxu0 0.0
    %548 = vmatpush1.msra.mxu0 0.0
    %549 = vmatprep.subr.mxu0 0.0
    %550 = vmatpush1.msra.mxu0 0.0
    %551 = vmatprep.subr.mxu0 0.0
    %552 = vmatpush1.msra.mxu0 0.0
    %553 = vmatprep.subr.mxu0 0.0
    %554 = vmatpush1.msra.mxu0 0.0
    %555 = vmatprep.subr.mxu0 0.0
    %556 = vmatpush1.msra.mxu0 0.0
    %557 = vmatprep.subr.mxu0 0.0
    %558 = vmatpush1.msra.mxu0 0.0
    %559 = vmatprep.subr.mxu0 0.0
    %560 = vmatpush1.msra.mxu0 0.0
    %561 = vmatprep.subr.mxu0 0.0
    %562 = vmatpush1.msra.mxu0 0.0
    %563 = vmatprep.subr.mxu0 0.0
    %564 = vmatpush1.msra.mxu0 0.0
    %565 = vmatprep.subr.mxu0 0.0
    %566 = vmatpush1.msra.mxu0 0.0
    %567 = vmatprep.subr.mxu0 0.0
    %568 = vmatpush1.msra.mxu0 0.0
    %569 = vmatprep.subr.mxu0 0.0
    %570 = vmatpush1.msra.mxu0 0.0
    %571 = vmatprep.subr.mxu0 0.0
    %572 = vmatpush1.msra.mxu0 0.0
    %573 = vmatprep.subr.mxu0 0.0
    %574 = vmatpush1.msra.mxu0 0.0
    %575 = vmatprep.subr.mxu0 0.0
    %576 = vmatpush1.msra.mxu0 0.0
    %577 = vmatprep.mubr.f32.mxu0 0.0
    %578 = vmatmul.mubr.f32.gmra.mrb[0].mxu0 %v511
    %v579 = vpop.f32.mrb[0].mxu0
    %v580 = vadd.f32 0.0, %v579
    %v581 = vpop.f32.mrb[0].mxu0
    %582 = vdwg.mxu0
    %v584 = vrot.slane %v580, 1
    %v587 = vadd.f32 %v316, %v580
    %v588 = vadd.f32 %v321, %v584
    %v589 = vmul.f32 %v587, 0.5
    %v590 = vmul.f32 %v588, 0.5
    %v591 = vtanh.pop %v589
    %v592 = vtanh.pop %v590
    %v593 = vmul.f32 %v591, 0.5
    %v594 = vmul.f32 %v592, 0.5
    %v595 = vadd.f32 %v593, 0.5
    %v596 = vadd.f32 %v594, 0.5
    %597 = vmatprep.subr.mxu0 0.0
    %598 = vmatpush1.msra.mxu0 %v500
    %599 = vmatprep.subr.mxu0 0.0
    %600 = vmatpush1.msra.mxu0 %v501
    %601 = vmatprep.subr.mxu0 0.0
    %602 = vmatpush1.msra.mxu0 %v502
    %603 = vmatprep.subr.mxu0 0.0
    %604 = vmatpush1.msra.mxu0 %v503
    %605 = vmatprep.subr.mxu0 0.0
    %606 = vmatpush1.msra.mxu0 0.0
    %607 = vmatprep.subr.mxu0 0.0
    %608 = vmatpush1.msra.mxu0 0.0
    %609 = vmatprep.subr.mxu0 0.0
    %610 = vmatpush1.msra.mxu0 0.0
    %611 = vmatprep.subr.mxu0 0.0
    %612 = vmatpush1.msra.mxu0 0.0
    %613 = vmatprep.subr.mxu0 0.0
    %614 = vmatpush1.msra.mxu0 0.0
    %615 = vmatprep.subr.mxu0 0.0
    %616 = vmatpush1.msra.mxu0 0.0
    %617 = vmatprep.subr.mxu0 0.0
    %618 = vmatpush1.msra.mxu0 0.0
    %619 = vmatprep.subr.mxu0 0.0
    %620 = vmatpush1.msra.mxu0 0.0
    %621 = vmatprep.subr.mxu0 0.0
    %622 = vmatpush1.msra.mxu0 0.0
    %623 = vmatprep.subr.mxu0 0.0
    %624 = vmatpush1.msra.mxu0 0.0
    %625 = vmatprep.subr.mxu0 0.0
    %626 = vmatpush1.msra.mxu0 0.0
    %627 = vmatprep.subr.mxu0 0.0
    %628 = vmatpush1.msra.mxu0 0.0
    %629 = vmatprep.subr.mxu0 0.0
    %630 = vmatpush1.msra.mxu0 0.0
    %631 = vmatprep.subr.mxu0 0.0
    %632 = vmatpush1.msra.mxu0 0.0
    %633 = vmatprep.subr.mxu0 0.0
    %634 = vmatpush1.msra.mxu0 0.0
    %635 = vmatprep.subr.mxu0 0.0
    %636 = vmatpush1.msra.mxu0 0.0
    %637 = vmatprep.subr.mxu0 0.0
    %638 = vmatpush1.msra.mxu0 0.0
    %639 = vmatprep.subr.mxu0 0.0
    %640 = vmatpush1.msra.mxu0 0.0
    %641 = vmatprep.subr.mxu0 0.0
    %642 = vmatpush1.msra.mxu0 0.0
    %643 = vmatprep.subr.mxu0 0.0
    %644 = vmatpush1.msra.mxu0 0.0
    %645 = vmatprep.subr.mxu0 0.0
    %646 = vmatpush1.msra.mxu0 0.0
    %647 = vmatprep.subr.mxu0 0.0
    %648 = vmatpush1.msra.mxu0 0.0
    %649 = vmatprep.subr.mxu0 0.0
    %650 = vmatpush1.msra.mxu0 0.0
    %651 = vmatprep.subr.mxu0 0.0
    %652 = vmatpush1.msra.mxu0 0.0
    %653 = vmatprep.subr.mxu0 0.0
    %654 = vmatpush1.msra.mxu0 0.0
    %655 = vmatprep.subr.mxu0 0.0
    %656 = vmatpush1.msra.mxu0 0.0
    %657 = vmatprep.subr.mxu0 0.0
    %658 = vmatpush1.msra.mxu0 0.0
    %659 = vmatprep.subr.mxu0 0.0
    %660 = vmatpush1.msra.mxu0 0.0
    %661 = vmatprep.mubr.f32.mxu0 0.0
    %662 = vmatmul.mubr.f32.gmra.mrb[0].mxu0 %v511
    %v663 = vpop.f32.mrb[0].mxu0
    %v664 = vadd.f32 0.0, %v663
    %v665 = vpop.f32.mrb[0].mxu0
    %666 = vdwg.mxu0
    %v668 = vrot.slane %v664, 1
    %v671 = vadd.f32 %v402, %v664
    %v672 = vadd.f32 %v407, %v668
    %v673 = vmul.f32 %v671, 0.5
    %v674 = vmul.f32 %v672, 0.5
    %v675 = vtanh.pop %v673
    %v676 = vtanh.pop %v674
    %v677 = vmul.f32 %v675, 0.5
    %v678 = vmul.f32 %v676, 0.5
    %v679 = vadd.f32 %v677, 0.5
    %v680 = vadd.f32 %v678, 0.5
    %v682 = vlaneseq
    %v683 = vshrl.u32 %v682, 7
    %v684 = vsub.s32 0, %v683
    %v685 = vrot.slane %v508, %v684
    %687 = vmatprep.subr.mxu0 0.0
    %688 = vmatpush1.msra.mxu0 %v504
    %689 = vmatprep.subr.mxu0 0.0
    %690 = vmatpush1.msra.mxu0 %v505
    %691 = vmatprep.subr.mxu0 0.0
    %692 = vmatpush1.msra.mxu0 %v506
    %693 = vmatprep.subr.mxu0 0.0
    %694 = vmatpush1.msra.mxu0 %v507
    %695 = vmatprep.subr.mxu0 0.0
    %696 = vmatpush1.msra.mxu0 0.0
    %697 = vmatprep.subr.mxu0 0.0
    %698 = vmatpush1.msra.mxu0 0.0
    %699 = vmatprep.subr.mxu0 0.0
    %700 = vmatpush1.msra.mxu0 0.0
    %701 = vmatprep.subr.mxu0 0.0
    %702 = vmatpush1.msra.mxu0 0.0
    %703 = vmatprep.subr.mxu0 0.0
    %704 = vmatpush1.msra.mxu0 0.0
    %705 = vmatprep.subr.mxu0 0.0
    %706 = vmatpush1.msra.mxu0 0.0
    %707 = vmatprep.subr.mxu0 0.0
    %708 = vmatpush1.msra.mxu0 0.0
    %709 = vmatprep.subr.mxu0 0.0
    %710 = vmatpush1.msra.mxu0 0.0
    %711 = vmatprep.subr.mxu0 0.0
    %712 = vmatpush1.msra.mxu0 0.0
    %713 = vmatprep.subr.mxu0 0.0
    %714 = vmatpush1.msra.mxu0 0.0
    %715 = vmatprep.subr.mxu0 0.0
    %716 = vmatpush1.msra.mxu0 0.0
    %717 = vmatprep.subr.mxu0 0.0
    %718 = vmatpush1.msra.mxu0 0.0
    %719 = vmatprep.subr.mxu0 0.0
    %720 = vmatpush1.msra.mxu0 0.0
    %721 = vmatprep.subr.mxu0 0.0
    %722 = vmatpush1.msra.mxu0 0.0
    %723 = vmatprep.subr.mxu0 0.0
    %724 = vmatpush1.msra.mxu0 0.0
    %725 = vmatprep.subr.mxu0 0.0
    %726 = vmatpush1.msra.mxu0 0.0
    %727 = vmatprep.subr.mxu0 0.0
    %728 = vmatpush1.msra.mxu0 0.0
    %729 = vmatprep.subr.mxu0 0.0
    %730 = vmatpush1.msra.mxu0 0.0
    %731 = vmatprep.subr.mxu0 0.0
    %732 = vmatpush1.msra.mxu0 0.0
    %733 = vmatprep.subr.mxu0 0.0
    %734 = vmatpush1.msra.mxu0 0.0
    %735 = vmatprep.subr.mxu0 0.0
    %736 = vmatpush1.msra.mxu0 0.0
    %737 = vmatprep.subr.mxu0 0.0
    %738 = vmatpush1.msra.mxu0 0.0
    %739 = vmatprep.subr.mxu0 0.0
    %740 = vmatpush1.msra.mxu0 0.0
    %741 = vmatprep.subr.mxu0 0.0
    %742 = vmatpush1.msra.mxu0 0.0
    %743 = vmatprep.subr.mxu0 0.0
    %744 = vmatpush1.msra.mxu0 0.0
    %745 = vmatprep.subr.mxu0 0.0
    %746 = vmatpush1.msra.mxu0 0.0
    %747 = vmatprep.subr.mxu0 0.0
    %748 = vmatpush1.msra.mxu0 0.0
    %749 = vmatprep.subr.mxu0 0.0
    %750 = vmatpush1.msra.mxu0 0.0
    %751 = vmatprep.mubr.f32.mxu0 0.0
    %752 = vmatmul.mubr.f32.gmra.mrb[0].mxu0 %v511
    %v753 = vpop.f32.mrb[0].mxu0
    %v754 = vadd.f32 %v685, %v753
    %v755 = vpop.f32.mrb[0].mxu0
    %756 = vdwg.mxu0
    %v758 = vrot.slane %v754, 1
    %v761 = vmul.f32 %v595, %v754
    %v762 = vmul.f32 %v596, %v758
    %v763 = vadd.f32 %v488, %v761
    %v764 = vadd.f32 %v493, %v762
    %v765 = vtanh.pop %v763
    %v766 = vtanh.pop %v764
    %v767 = vsub.f32 0.0, %v765
    %v768 = vsub.f32 0.0, %v766
    %v769 = vmul.f32 %v679, %v767
    %v770 = vmul.f32 %v680, %v768
    %v771 = vadd.f32 %v765, %v769
    %v772 = vadd.f32 %v766, %v770
    %v775 = vrot.slane %v772, 7
    %vm776 = vcmask 1041409
    %v777 = vsel %vm776, %v775, %v771
    %v778 = vsel %vm509, %v777, 0
    %780 = vmatprep.subr.mxu0 0.0
    %781 = vmatpush1.msra.mxu0 %v496
    %782 = vmatprep.subr.mxu0 0.0
    %783 = vmatpush1.msra.mxu0 %v497
    %784 = vmatprep.subr.mxu0 0.0
    %785 = vmatpush1.msra.mxu0 %v498
    %786 = vmatprep.subr.mxu0 0.0
    %787 = vmatpush1.msra.mxu0 %v499
    %788 = vmatprep.subr.mxu0 0.0
    %789 = vmatpush1.msra.mxu0 0.0
    %790 = vmatprep.subr.mxu0 0.0
    %791 = vmatpush1.msra.mxu0 0.0
    %792 = vmatprep.subr.mxu0 0.0
    %793 = vmatpush1.msra.mxu0 0.0
    %794 = vmatprep.subr.mxu0 0.0
    %795 = vmatpush1.msra.mxu0 0.0
    %796 = vmatprep.subr.mxu0 0.0
    %797 = vmatpush1.msra.mxu0 0.0
    %798 = vmatprep.subr.mxu0 0.0
    %799 = vmatpush1.msra.mxu0 0.0
    %800 = vmatprep.subr.mxu0 0.0
    %801 = vmatpush1.msra.mxu0 0.0
    %802 = vmatprep.subr.mxu0 0.0
    %803 = vmatpush1.msra.mxu0 0.0
    %804 = vmatprep.subr.mxu0 0.0
    %805 = vmatpush1.msra.mxu0 0.0
    %806 = vmatprep.subr.mxu0 0.0
    %807 = vmatpush1.msra.mxu0 0.0
    %808 = vmatprep.subr.mxu0 0.0
    %809 = vmatpush1.msra.mxu0 0.0
    %810 = vmatprep.subr.mxu0 0.0
    %811 = vmatpush1.msra.mxu0 0.0
    %812 = vmatprep.subr.mxu0 0.0
    %813 = vmatpush1.msra.mxu0 0.0
    %814 = vmatprep.subr.mxu0 0.0
    %815 = vmatpush1.msra.mxu0 0.0
    %816 = vmatprep.subr.mxu0 0.0
    %817 = vmatpush1.msra.mxu0 0.0
    %818 = vmatprep.subr.mxu0 0.0
    %819 = vmatpush1.msra.mxu0 0.0
    %820 = vmatprep.subr.mxu0 0.0
    %821 = vmatpush1.msra.mxu0 0.0
    %822 = vmatprep.subr.mxu0 0.0
    %823 = vmatpush1.msra.mxu0 0.0
    %824 = vmatprep.subr.mxu0 0.0
    %825 = vmatpush1.msra.mxu0 0.0
    %826 = vmatprep.subr.mxu0 0.0
    %827 = vmatpush1.msra.mxu0 0.0
    %828 = vmatprep.subr.mxu0 0.0
    %829 = vmatpush1.msra.mxu0 0.0
    %830 = vmatprep.subr.mxu0 0.0
    %831 = vmatpush1.msra.mxu0 0.0
    %832 = vmatprep.subr.mxu0 0.0
    %833 = vmatpush1.msra.mxu0 0.0
    %834 = vmatprep.subr.mxu0 0.0
    %835 = vmatpush1.msra.mxu0 0.0
    %836 = vmatprep.subr.mxu0 0.0
    %837 = vmatpush1.msra.mxu0 0.0
    %838 = vmatprep.subr.mxu0 0.0
    %839 = vmatpush1.msra.mxu0 0.0
    %840 = vmatprep.subr.mxu0 0.0
    %841 = vmatpush1.msra.mxu0 0.0
    %842 = vmatprep.subr.mxu0 0.0
    %843 = vmatpush1.msra.mxu0 0.0
    %844 = vmatprep.mubr.f32.mxu0 0.0
    %845 = vmatmul.mubr.f32.gmra.mrb[0].mxu0 %v778
    %v846 = vpop.f32.mrb[0].mxu0
    %v847 = vadd.f32 0.0, %v846
    %v848 = vpop.f32.mrb[0].mxu0
    %849 = vdwg.mxu0
    %v851 = vrot.slane %v847, 7
    %v854 = vadd.f32 %v316, %v851
    %v855 = vadd.f32 %v321, %v847
    %v856 = vmul.f32 %v854, 0.5
    %v857 = vmul.f32 %v855, 0.5
    %v858 = vtanh.pop %v856
    %v859 = vtanh.pop %v857
    %v860 = vmul.f32 %v858, 0.5
    %v861 = vmul.f32 %v859, 0.5
    %v862 = vadd.f32 %v860, 0.5
    %v863 = vadd.f32 %v861, 0.5
    %864 = vmatprep.subr.mxu0 0.0
    %865 = vmatpush1.msra.mxu0 %v500
    %866 = vmatprep.subr.mxu0 0.0
    %867 = vmatpush1.msra.mxu0 %v501
    %868 = vmatprep.subr.mxu0 0.0
    %869 = vmatpush1.msra.mxu0 %v502
    %870 = vmatprep.subr.mxu0 0.0
    %871 = vmatpush1.msra.mxu0 %v503
    %872 = vmatprep.subr.mxu0 0.0
    %873 = vmatpush1.msra.mxu0 0.0
    %874 = vmatprep.subr.mxu0 0.0
    %875 = vmatpush1.msra.mxu0 0.0
    %876 = vmatprep.subr.mxu0 0.0
    %877 = vmatpush1.msra.mxu0 0.0
    %878 = vmatprep.subr.mxu0 0.0
    %879 = vmatpush1.msra.mxu0 0.0
    %880 = vmatprep.subr.mxu0 0.0
    %881 = vmatpush1.msra.mxu0 0.0
    %882 = vmatprep.subr.mxu0 0.0
    %883 = vmatpush1.msra.mxu0 0.0
    %884 = vmatprep.subr.mxu0 0.0
    %885 = vmatpush1.msra.mxu0 0.0
    %886 = vmatprep.subr.mxu0 0.0
    %887 = vmatpush1.msra.mxu0 0.0
    %888 = vmatprep.subr.mxu0 0.0
    %889 = vmatpush1.msra.mxu0 0.0
    %890 = vmatprep.subr.mxu0 0.0
    %891 = vmatpush1.msra.mxu0 0.0
    %892 = vmatprep.subr.mxu0 0.0
    %893 = vmatpush1.msra.mxu0 0.0
    %894 = vmatprep.subr.mxu0 0.0
    %895 = vmatpush1.msra.mxu0 0.0
    %896 = vmatprep.subr.mxu0 0.0
    %897 = vmatpush1.msra.mxu0 0.0
    %898 = vmatprep.subr.mxu0 0.0
    %899 = vmatpush1.msra.mxu0 0.0
    %900 = vmatprep.subr.mxu0 0.0
    %901 = vmatpush1.msra.mxu0 0.0
    %902 = vmatprep.subr.mxu0 0.0
    %903 = vmatpush1.msra.mxu0 0.0
    %904 = vmatprep.subr.mxu0 0.0
    %905 = vmatpush1.msra.mxu0 0.0
    %906 = vmatprep.subr.mxu0 0.0
    %907 = vmatpush1.msra.mxu0 0.0
    %908 = vmatprep.subr.mxu0 0.0
    %909 = vmatpush1.msra.mxu0 0.0
    %910 = vmatprep.subr.mxu0 0.0
    %911 = vmatpush1.msra.mxu0 0.0
    %912 = vmatprep.subr.mxu0 0.0
    %913 = vmatpush1.msra.mxu0 0.0
    %914 = vmatprep.subr.mxu0 0.0
    %915 = vmatpush1.msra.mxu0 0.0
    %916 = vmatprep.subr.mxu0 0.0
    %917 = vmatpush1.msra.mxu0 0.0
    %918 = vmatprep.subr.mxu0 0.0
    %919 = vmatpush1.msra.mxu0 0.0
    %920 = vmatprep.subr.mxu0 0.0
    %921 = vmatpush1.msra.mxu0 0.0
    %922 = vmatprep.subr.mxu0 0.0
    %923 = vmatpush1.msra.mxu0 0.0
    %924 = vmatprep.subr.mxu0 0.0
    %925 = vmatpush1.msra.mxu0 0.0
    %926 = vmatprep.subr.mxu0 0.0
    %927 = vmatpush1.msra.mxu0 0.0
    %928 = vmatprep.mubr.f32.mxu0 0.0
    %929 = vmatmul.mubr.f32.gmra.mrb[0].mxu0 %v778
    %v930 = vpop.f32.mrb[0].mxu0
    %v931 = vadd.f32 0.0, %v930
    %v932 = vpop.f32.mrb[0].mxu0
    %933 = vdwg.mxu0
    %v935 = vrot.slane %v931, 7
    %v938 = vadd.f32 %v402, %v935
    %v939 = vadd.f32 %v407, %v931
    %v940 = vmul.f32 %v938, 0.5
    %v941 = vmul.f32 %v939, 0.5
    %v942 = vtanh.pop %v940
    %v943 = vtanh.pop %v941
    %v944 = vmul.f32 %v942, 0.5
    %v945 = vmul.f32 %v943, 0.5
    %v946 = vadd.f32 %v944, 0.5
    %v947 = vadd.f32 %v945, 0.5
    %948 = vmatprep.subr.mxu0 0.0
    %949 = vmatpush1.msra.mxu0 %v504
    %950 = vmatprep.subr.mxu0 0.0
    %951 = vmatpush1.msra.mxu0 %v505
    %952 = vmatprep.subr.mxu0 0.0
    %953 = vmatpush1.msra.mxu0 %v506
    %954 = vmatprep.subr.mxu0 0.0
    %955 = vmatpush1.msra.mxu0 %v507
    %956 = vmatprep.subr.mxu0 0.0
    %957 = vmatpush1.msra.mxu0 0.0
    %958 = vmatprep.subr.mxu0 0.0
    %959 = vmatpush1.msra.mxu0 0.0
    %960 = vmatprep.subr.mxu0 0.0
    %961 = vmatpush1.msra.mxu0 0.0
    %962 = vmatprep.subr.mxu0 0.0
    %963 = vmatpush1.msra.mxu0 0.0
    %964 = vmatprep.subr.mxu0 0.0
    %965 = vmatpush1.msra.mxu0 0.0
    %966 = vmatprep.subr.mxu0 0.0
    %967 = vmatpush1.msra.mxu0 0.0
    %968 = vmatprep.subr.mxu0 0.0
    %969 = vmatpush1.msra.mxu0 0.0
    %970 = vmatprep.subr.mxu0 0.0
    %971 = vmatpush1.msra.mxu0 0.0
    %972 = vmatprep.subr.mxu0 0.0
    %973 = vmatpush1.msra.mxu0 0.0
    %974 = vmatprep.subr.mxu0 0.0
    %975 = vmatpush1.msra.mxu0 0.0
    %976 = vmatprep.subr.mxu0 0.0
    %977 = vmatpush1.msra.mxu0 0.0
    %978 = vmatprep.subr.mxu0 0.0
    %979 = vmatpush1.msra.mxu0 0.0
    %980 = vmatprep.subr.mxu0 0.0
    %981 = vmatpush1.msra.mxu0 0.0
    %982 = vmatprep.subr.mxu0 0.0
    %983 = vmatpush1.msra.mxu0 0.0
    %984 = vmatprep.subr.mxu0 0.0
    %985 = vmatpush1.msra.mxu0 0.0
    %986 = vmatprep.subr.mxu0 0.0
    %987 = vmatpush1.msra.mxu0 0.0
    %988 = vmatprep.subr.mxu0 0.0
    %989 = vmatpush1.msra.mxu0 0.0
    %990 = vmatprep.subr.mxu0 0.0
    %991 = vmatpush1.msra.mxu0 0.0
    %992 = vmatprep.subr.mxu0 0.0
    %993 = vmatpush1.msra.mxu0 0.0
    %994 = vmatprep.subr.mxu0 0.0
    %995 = vmatpush1.msra.mxu0 0.0
    %996 = vmatprep.subr.mxu0 0.0
    %997 = vmatpush1.msra.mxu0 0.0
    %998 = vmatprep.subr.mxu0 0.0
    %999 = vmatpush1.msra.mxu0 0.0
    %1000 = vmatprep.subr.mxu0 0.0
    %1001 = vmatpush1.msra.mxu0 0.0
    %1002 = vmatprep.subr.mxu0 0.0
    %1003 = vmatpush1.msra.mxu0 0.0
    %1004 = vmatprep.subr.mxu0 0.0
    %1005 = vmatpush1.msra.mxu0 0.0
    %1006 = vmatprep.subr.mxu0 0.0
    %1007 = vmatpush1.msra.mxu0 0.0
    %1008 = vmatprep.subr.mxu0 0.0
    %1009 = vmatpush1.msra.mxu0 0.0
    %1010 = vmatprep.subr.mxu0 0.0
    %1011 = vmatpush1.msra.mxu0 0.0
    %1012 = vmatprep.mubr.f32.mxu0 0.0
    %1013 = vmatmul.mubr.f32.gmra.mrb[0].mxu0 %v778
    %v1014 = vpop.f32.mrb[0].mxu0
    %v1015 = vadd.f32 %v685, %v1014
    %v1016 = vpop.f32.mrb[0].mxu0
    %1017 = vdwg.mxu0
    %v1019 = vrot.slane %v1015, 7
    %v1022 = vmul.f32 %v862, %v1019
    %v1023 = vmul.f32 %v863, %v1015
    %v1024 = vadd.f32 %v488, %v1022
    %v1025 = vadd.f32 %v493, %v1023
    %v1026 = vtanh.pop %v1024
    %v1027 = vtanh.pop %v1025
    %v1030 = vrot.slane %v1026, 1
    %v1031 = vrot.slane %v1027, 1
    %v1034 = vsub.f32 %v771, %v1030
    %v1035 = vsub.f32 %v772, %v1031
    %v1038 = vrot.slane %v1034, 7
    %v1039 = vrot.slane %v1035, 7
    %v1042 = vmul.f32 %v946, %v1038
    %v1043 = vmul.f32 %v947, %v1039
    %v1044 = vadd.f32 %v1026, %v1042
    %v1045 = vadd.f32 %v1027, %v1043
    %v1048 = vrot.slane %v1044, 1
    %v1049 = vsel %vm776, %v1045, %v1048
    %v1050 = vsel %vm509, %v1049, 0
    %1052 = vmatprep.subr.mxu0 0.0
    %1053 = vmatpush1.msra.mxu0 %v496
    %1054 = vmatprep.subr.mxu0 0.0
    %1055 = vmatpush1.msra.mxu0 %v497
    %1056 = vmatprep.subr.mxu0 0.0
    %1057 = vmatpush1.msra.mxu0 %v498
    %1058 = vmatprep.subr.mxu0 0.0
    %1059 = vmatpush1.msra.mxu0 %v499
    %1060 = vmatprep.subr.mxu0 0.0
    %1061 = vmatpush1.msra.mxu0 0.0
    %1062 = vmatprep.subr.mxu0 0.0
    %1063 = vmatpush1.msra.mxu0 0.0
    %1064 = vmatprep.subr.mxu0 0.0
    %1065 = vmatpush1.msra.mxu0 0.0
    %1066 = vmatprep.subr.mxu0 0.0
    %1067 = vmatpush1.msra.mxu0 0.0
    %1068 = vmatprep.subr.mxu0 0.0
    %1069 = vmatpush1.msra.mxu0 0.0
    %1070 = vmatprep.subr.mxu0 0.0
    %1071 = vmatpush1.msra.mxu0 0.0
    %1072 = vmatprep.subr.mxu0 0.0
    %1073 = vmatpush1.msra.mxu0 0.0
    %1074 = vmatprep.subr.mxu0 0.0
    %1075 = vmatpush1.msra.mxu0 0.0
    %1076 = vmatprep.subr.mxu0 0.0
    %1077 = vmatpush1.msra.mxu0 0.0
    %1078 = vmatprep.subr.mxu0 0.0
    %1079 = vmatpush1.msra.mxu0 0.0
    %1080 = vmatprep.subr.mxu0 0.0
    %1081 = vmatpush1.msra.mxu0 0.0
    %1082 = vmatprep.subr.mxu0 0.0
    %1083 = vmatpush1.msra.mxu0 0.0
    %1084 = vmatprep.subr.mxu0 0.0
    %1085 = vmatpush1.msra.mxu0 0.0
    %1086 = vmatprep.subr.mxu0 0.0
    %1087 = vmatpush1.msra.mxu0 0.0
    %1088 = vmatprep.subr.mxu0 0.0
    %1089 = vmatpush1.msra.mxu0 0.0
    %1090 = vmatprep.subr.mxu0 0.0
    %1091 = vmatpush1.msra.mxu0 0.0
    %1092 = vmatprep.subr.mxu0 0.0
    %1093 = vmatpush1.msra.mxu0 0.0
    %1094 = vmatprep.subr.mxu0 0.0
    %1095 = vmatpush1.msra.mxu0 0.0
    %1096 = vmatprep.subr.mxu0 0.0
    %1097 = vmatpush1.msra.mxu0 0.0
    %1098 = vmatprep.subr.mxu0 0.0
    %1099 = vmatpush1.msra.mxu0 0.0
    %1100 = vmatprep.subr.mxu0 0.0
    %1101 = vmatpush1.msra.mxu0 0.0
    %1102 = vmatprep.subr.mxu0 0.0
    %1103 = vmatpush1.msra.mxu0 0.0
    %1104 = vmatprep.subr.mxu0 0.0
    %1105 = vmatpush1.msra.mxu0 0.0
    %1106 = vmatprep.subr.mxu0 0.0
    %1107 = vmatpush1.msra.mxu0 0.0
    %1108 = vmatprep.subr.mxu0 0.0
    %1109 = vmatpush1.msra.mxu0 0.0
    %1110 = vmatprep.subr.mxu0 0.0
    %1111 = vmatpush1.msra.mxu0 0.0
    %1112 = vmatprep.subr.mxu0 0.0
    %1113 = vmatpush1.msra.mxu0 0.0
    %1114 = vmatprep.subr.mxu0 0.0
    %1115 = vmatpush1.msra.mxu0 0.0
    %1116 = vmatprep.mubr.f32.mxu0 0.0
    %1117 = vmatmul.mubr.f32.gmra.mrb[0].mxu0 %v1050
    %v1118 = vpop.f32.mrb[0].mxu0
    %v1119 = vadd.f32 0.0, %v1118
    %v1120 = vpop.f32.mrb[0].mxu0
    %1121 = vdwg.mxu0
    %v1123 = vrot.slane %v1119, 6
    %v1124 = vrot.slane %v1119, 7
    %v1127 = vadd.f32 %v316, %v1123
    %v1128 = vadd.f32 %v321, %v1124
    %v1129 = vmul.f32 %v1127, 0.5
    %v1130 = vmul.f32 %v1128, 0.5
    %v1131 = vtanh.pop %v1129
    %v1132 = vtanh.pop %v1130
    %v1133 = vmul.f32 %v1131, 0.5
    %v1134 = vmul.f32 %v1132, 0.5
    %v1135 = vadd.f32 %v1133, 0.5
    %v1136 = vadd.f32 %v1134, 0.5
    %1137 = vmatprep.subr.mxu0 0.0
    %1138 = vmatpush1.msra.mxu0 %v500
    %1139 = vmatprep.subr.mxu0 0.0
    %1140 = vmatpush1.msra.mxu0 %v501
    %1141 = vmatprep.subr.mxu0 0.0
    %1142 = vmatpush1.msra.mxu0 %v502
    %1143 = vmatprep.subr.mxu0 0.0
    %1144 = vmatpush1.msra.mxu0 %v503
    %1145 = vmatprep.subr.mxu0 0.0
    %1146 = vmatpush1.msra.mxu0 0.0
    %1147 = vmatprep.subr.mxu0 0.0
    %1148 = vmatpush1.msra.mxu0 0.0
    %1149 = vmatprep.subr.mxu0 0.0
    %1150 = vmatpush1.msra.mxu0 0.0
    %1151 = vmatprep.subr.mxu0 0.0
    %1152 = vmatpush1.msra.mxu0 0.0
    %1153 = vmatprep.subr.mxu0 0.0
    %1154 = vmatpush1.msra.mxu0 0.0
    %1155 = vmatprep.subr.mxu0 0.0
    %1156 = vmatpush1.msra.mxu0 0.0
    %1157 = vmatprep.subr.mxu0 0.0
    %1158 = vmatpush1.msra.mxu0 0.0
    %1159 = vmatprep.subr.mxu0 0.0
    %1160 = vmatpush1.msra.mxu0 0.0
    %1161 = vmatprep.subr.mxu0 0.0
    %1162 = vmatpush1.msra.mxu0 0.0
    %1163 = vmatprep.subr.mxu0 0.0
    %1164 = vmatpush1.msra.mxu0 0.0
    %1165 = vmatprep.subr.mxu0 0.0
    %1166 = vmatpush1.msra.mxu0 0.0
    %1167 = vmatprep.subr.mxu0 0.0
    %1168 = vmatpush1.msra.mxu0 0.0
    %1169 = vmatprep.subr.mxu0 0.0
    %1170 = vmatpush1.msra.mxu0 0.0
    %1171 = vmatprep.subr.mxu0 0.0
    %1172 = vmatpush1.msra.mxu0 0.0
    %1173 = vmatprep.subr.mxu0 0.0
    %1174 = vmatpush1.msra.mxu0 0.0
    %1175 = vmatprep.subr.mxu0 0.0
    %1176 = vmatpush1.msra.mxu0 0.0
    %1177 = vmatprep.subr.mxu0 0.0
    %1178 = vmatpush1.msra.mxu0 0.0
    %1179 = vmatprep.subr.mxu0 0.0
    %1180 = vmatpush1.msra.mxu0 0.0
    %1181 = vmatprep.subr.mxu0 0.0
    %1182 = vmatpush1.msra.mxu0 0.0
    %1183 = vmatprep.subr.mxu0 0.0
    %1184 = vmatpush1.msra.mxu0 0.0
    %1185 = vmatprep.subr.mxu0 0.0
    %1186 = vmatpush1.msra.mxu0 0.0
    %1187 = vmatprep.subr.mxu0 0.0
    %1188 = vmatpush1.msra.mxu0 0.0
    %1189 = vmatprep.subr.mxu0 0.0
    %1190 = vmatpush1.msra.mxu0 0.0
    %1191 = vmatprep.subr.mxu0 0.0
    %1192 = vmatpush1.msra.mxu0 0.0
    %1193 = vmatprep.subr.mxu0 0.0
    %1194 = vmatpush1.msra.mxu0 0.0
    %1195 = vmatprep.subr.mxu0 0.0
    %1196 = vmatpush1.msra.mxu0 0.0
    %1197 = vmatprep.subr.mxu0 0.0
    %1198 = vmatpush1.msra.mxu0 0.0
    %1199 = vmatprep.subr.mxu0 0.0
    %1200 = vmatpush1.msra.mxu0 0.0
    %1201 = vmatprep.mubr.f32.mxu0 0.0
    %1202 = vmatmul.mubr.f32.gmra.mrb[0].mxu0 %v1050
    %v1203 = vpop.f32.mrb[0].mxu0
    %v1204 = vadd.f32 0.0, %v1203
    %v1205 = vpop.f32.mrb[0].mxu0
    %1206 = vdwg.mxu0
    %v1208 = vrot.slane %v1204, 6
    %v1209 = vrot.slane %v1204, 7
    %v1212 = vadd.f32 %v402, %v1208
    %v1213 = vadd.f32 %v407, %v1209
    %v1214 = vmul.f32 %v1212, 0.5
    %v1215 = vmul.f32 %v1213, 0.5
    %v1216 = vtanh.pop %v1214
    %v1217 = vtanh.pop %v1215
    %v1218 = vmul.f32 %v1216, 0.5
    %v1219 = vmul.f32 %v1217, 0.5
    %v1220 = vadd.f32 %v1218, 0.5
    %v1221 = vadd.f32 %v1219, 0.5
    %1222 = vmatprep.subr.mxu0 0.0
    %1223 = vmatpush1.msra.mxu0 %v504
    %1224 = vmatprep.subr.mxu0 0.0
    %1225 = vmatpush1.msra.mxu0 %v505
    %1226 = vmatprep.subr.mxu0 0.0
    %1227 = vmatpush1.msra.mxu0 %v506
    %1228 = vmatprep.subr.mxu0 0.0
    %1229 = vmatpush1.msra.mxu0 %v507
    %1230 = vmatprep.subr.mxu0 0.0
    %1231 = vmatpush1.msra.mxu0 0.0
    %1232 = vmatprep.subr.mxu0 0.0
    %1233 = vmatpush1.msra.mxu0 0.0
    %1234 = vmatprep.subr.mxu0 0.0
    %1235 = vmatpush1.msra.mxu0 0.0
    %1236 = vmatprep.subr.mxu0 0.0
    %1237 = vmatpush1.msra.mxu0 0.0
    %1238 = vmatprep.subr.mxu0 0.0
    %1239 = vmatpush1.msra.mxu0 0.0
    %1240 = vmatprep.subr.mxu0 0.0
    %1241 = vmatpush1.msra.mxu0 0.0
    %1242 = vmatprep.subr.mxu0 0.0
    %1243 = vmatpush1.msra.mxu0 0.0
    %1244 = vmatprep.subr.mxu0 0.0
    %1245 = vmatpush1.msra.mxu0 0.0
    %1246 = vmatprep.subr.mxu0 0.0
    %1247 = vmatpush1.msra.mxu0 0.0
    %1248 = vmatprep.subr.mxu0 0.0
    %1249 = vmatpush1.msra.mxu0 0.0
    %1250 = vmatprep.subr.mxu0 0.0
    %1251 = vmatpush1.msra.mxu0 0.0
    %1252 = vmatprep.subr.mxu0 0.0
    %1253 = vmatpush1.msra.mxu0 0.0
    %1254 = vmatprep.subr.mxu0 0.0
    %1255 = vmatpush1.msra.mxu0 0.0
    %1256 = vmatprep.subr.mxu0 0.0
    %1257 = vmatpush1.msra.mxu0 0.0
    %1258 = vmatprep.subr.mxu0 0.0
    %1259 = vmatpush1.msra.mxu0 0.0
    %1260 = vmatprep.subr.mxu0 0.0
    %1261 = vmatpush1.msra.mxu0 0.0
    %1262 = vmatprep.subr.mxu0 0.0
    %1263 = vmatpush1.msra.mxu0 0.0
    %1264 = vmatprep.subr.mxu0 0.0
    %1265 = vmatpush1.msra.mxu0 0.0
    %1266 = vmatprep.subr.mxu0 0.0
    %1267 = vmatpush1.msra.mxu0 0.0
    %1268 = vmatprep.subr.mxu0 0.0
    %1269 = vmatpush1.msra.mxu0 0.0
    %1270 = vmatprep.subr.mxu0 0.0
    %1271 = vmatpush1.msra.mxu0 0.0
    %1272 = vmatprep.subr.mxu0 0.0
    %1273 = vmatpush1.msra.mxu0 0.0
    %1274 = vmatprep.subr.mxu0 0.0
    %1275 = vmatpush1.msra.mxu0 0.0
    %1276 = vmatprep.subr.mxu0 0.0
    %1277 = vmatpush1.msra.mxu0 0.0
    %1278 = vmatprep.subr.mxu0 0.0
    %1279 = vmatpush1.msra.mxu0 0.0
    %1280 = vmatprep.subr.mxu0 0.0
    %1281 = vmatpush1.msra.mxu0 0.0
    %1282 = vmatprep.subr.mxu0 0.0
    %1283 = vmatpush1.msra.mxu0 0.0
    %1284 = vmatprep.subr.mxu0 0.0
    %1285 = vmatpush1.msra.mxu0 0.0
    %1286 = vmatprep.mubr.f32.mxu0 0.0
    %1287 = vmatmul.mubr.f32.gmra.mrb[0].mxu0 %v1050
    %v1288 = vpop.f32.mrb[0].mxu0
    %v1289 = vadd.f32 %v685, %v1288
    %v1290 = vpop.f32.mrb[0].mxu0
    %1291 = vdwg.mxu0
    %v1293 = vrot.slane %v1289, 6
    %v1294 = vrot.slane %v1289, 7
    %v1297 = vmul.f32 %v1135, %v1293
    %v1298 = vmul.f32 %v1136, %v1294
    %v1299 = vadd.f32 %v488, %v1297
    %v1300 = vadd.f32 %v493, %v1298
    %v1301 = vtanh.pop %v1299
    %v1302 = vtanh.pop %v1300
    %v1305 = vrot.slane %v1301, 1
    %v1306 = vrot.slane %v1302, 1
    %v1309 = vsub.f32 %v1044, %v1305
    %v1310 = vsub.f32 %v1045, %v1306
    %v1313 = vrot.slane %v1309, 7
    %v1314 = vrot.slane %v1310, 7
    %v1317 = vmul.f32 %v1220, %v1313
    %v1318 = vmul.f32 %v1221, %v1314
    %v1319 = vadd.f32 %v1301, %v1317
    %v1320 = vadd.f32 %v1302, %v1318
    %v1323 = vrot.slane %v1319, 2
    %v1324 = vrot.slane %v1320, 1
    %v1325 = vsel %vm776, %v1324, %v1323
    %v1326 = vsel %vm509, %v1325, 0
    %1328 = vmatprep.subr.mxu0 0.0
    %1329 = vmatpush1.msra.mxu0 %v496
    %1330 = vmatprep.subr.mxu0 0.0
    %1331 = vmatpush1.msra.mxu0 %v497
    %1332 = vmatprep.subr.mxu0 0.0
    %1333 = vmatpush1.msra.mxu0 %v498
    %1334 = vmatprep.subr.mxu0 0.0
    %1335 = vmatpush1.msra.mxu0 %v499
    %1336 = vmatprep.subr.mxu0 0.0
    %1337 = vmatpush1.msra.mxu0 0.0
    %1338 = vmatprep.subr.mxu0 0.0
    %1339 = vmatpush1.msra.mxu0 0.0
    %1340 = vmatprep.subr.mxu0 0.0
    %1341 = vmatpush1.msra.mxu0 0.0
    %1342 = vmatprep.subr.mxu0 0.0
    %1343 = vmatpush1.msra.mxu0 0.0
    %1344 = vmatprep.subr.mxu0 0.0
    %1345 = vmatpush1.msra.mxu0 0.0
    %1346 = vmatprep.subr.mxu0 0.0
    %1347 = vmatpush1.msra.mxu0 0.0
    %1348 = vmatprep.subr.mxu0 0.0
    %1349 = vmatpush1.msra.mxu0 0.0
    %1350 = vmatprep.subr.mxu0 0.0
    %1351 = vmatpush1.msra.mxu0 0.0
    %1352 = vmatprep.subr.mxu0 0.0
    %1353 = vmatpush1.msra.mxu0 0.0
    %1354 = vmatprep.subr.mxu0 0.0
    %1355 = vmatpush1.msra.mxu0 0.0
    %1356 = vmatprep.subr.mxu0 0.0
    %1357 = vmatpush1.msra.mxu0 0.0
    %1358 = vmatprep.subr.mxu0 0.0
    %1359 = vmatpush1.msra.mxu0 0.0
    %1360 = vmatprep.subr.mxu0 0.0
    %1361 = vmatpush1.msra.mxu0 0.0
    %1362 = vmatprep.subr.mxu0 0.0
    %1363 = vmatpush1.msra.mxu0 0.0
    %1364 = vmatprep.subr.mxu0 0.0
    %1365 = vmatpush1.msra.mxu0 0.0
    %1366 = vmatprep.subr.mxu0 0.0
    %1367 = vmatpush1.msra.mxu0 0.0
    %1368 = vmatprep.subr.mxu0 0.0
    %1369 = vmatpush1.msra.mxu0 0.0
    %1370 = vmatprep.subr.mxu0 0.0
    %1371 = vmatpush1.msra.mxu0 0.0
    %1372 = vmatprep.subr.mxu0 0.0
    %1373 = vmatpush1.msra.mxu0 0.0
    %1374 = vmatprep.subr.mxu0 0.0
    %1375 = vmatpush1.msra.mxu0 0.0
    %1376 = vmatprep.subr.mxu0 0.0
    %1377 = vmatpush1.msra.mxu0 0.0
    %1378 = vmatprep.subr.mxu0 0.0
    %1379 = vmatpush1.msra.mxu0 0.0
    %1380 = vmatprep.subr.mxu0 0.0
    %1381 = vmatpush1.msra.mxu0 0.0
    %1382 = vmatprep.subr.mxu0 0.0
    %1383 = vmatpush1.msra.mxu0 0.0
    %1384 = vmatprep.subr.mxu0 0.0
    %1385 = vmatpush1.msra.mxu0 0.0
    %1386 = vmatprep.subr.mxu0 0.0
    %1387 = vmatpush1.msra.mxu0 0.0
    %1388 = vmatprep.subr.mxu0 0.0
    %1389 = vmatpush1.msra.mxu0 0.0
    %1390 = vmatprep.subr.mxu0 0.0
    %1391 = vmatpush1.msra.mxu0 0.0
    %1392 = vmatprep.mubr.f32.mxu0 0.0
    %1393 = vmatmul.mubr.f32.gmra.mrb[0].mxu0 %v1326
    %v1394 = vpop.f32.mrb[0].mxu0
    %v1395 = vadd.f32 0.0, %v1394
    %v1396 = vpop.f32.mrb[0].mxu0
    %1397 = vdwg.mxu0
    %v1399 = vrot.slane %v1395, 5
    %v1400 = vrot.slane %v1395, 6
    %v1403 = vadd.f32 %v316, %v1399
    %v1404 = vadd.f32 %v321, %v1400
    %v1405 = vmul.f32 %v1403, 0.5
    %v1406 = vmul.f32 %v1404, 0.5
    %v1407 = vtanh.pop %v1405
    %v1408 = vtanh.pop %v1406
    %v1409 = vmul.f32 %v1407, 0.5
    %v1410 = vmul.f32 %v1408, 0.5
    %v1411 = vadd.f32 %v1409, 0.5
    %v1412 = vadd.f32 %v1410, 0.5
    %1413 = vmatprep.subr.mxu0 0.0
    %1414 = vmatpush1.msra.mxu0 %v500
    %1415 = vmatprep.subr.mxu0 0.0
    %1416 = vmatpush1.msra.mxu0 %v501
    %1417 = vmatprep.subr.mxu0 0.0
    %1418 = vmatpush1.msra.mxu0 %v502
    %1419 = vmatprep.subr.mxu0 0.0
    %1420 = vmatpush1.msra.mxu0 %v503
    %1421 = vmatprep.subr.mxu0 0.0
    %1422 = vmatpush1.msra.mxu0 0.0
    %1423 = vmatprep.subr.mxu0 0.0
    %1424 = vmatpush1.msra.mxu0 0.0
    %1425 = vmatprep.subr.mxu0 0.0
    %1426 = vmatpush1.msra.mxu0 0.0
    %1427 = vmatprep.subr.mxu0 0.0
    %1428 = vmatpush1.msra.mxu0 0.0
    %1429 = vmatprep.subr.mxu0 0.0
    %1430 = vmatpush1.msra.mxu0 0.0
    %1431 = vmatprep.subr.mxu0 0.0
    %1432 = vmatpush1.msra.mxu0 0.0
    %1433 = vmatprep.subr.mxu0 0.0
    %1434 = vmatpush1.msra.mxu0 0.0
    %1435 = vmatprep.subr.mxu0 0.0
    %1436 = vmatpush1.msra.mxu0 0.0
    %1437 = vmatprep.subr.mxu0 0.0
    %1438 = vmatpush1.msra.mxu0 0.0
    %1439 = vmatprep.subr.mxu0 0.0
    %1440 = vmatpush1.msra.mxu0 0.0
    %1441 = vmatprep.subr.mxu0 0.0
    %1442 = vmatpush1.msra.mxu0 0.0
    %1443 = vmatprep.subr.mxu0 0.0
    %1444 = vmatpush1.msra.mxu0 0.0
    %1445 = vmatprep.subr.mxu0 0.0
    %1446 = vmatpush1.msra.mxu0 0.0
    %1447 = vmatprep.subr.mxu0 0.0
    %1448 = vmatpush1.msra.mxu0 0.0
    %1449 = vmatprep.subr.mxu0 0.0
    %1450 = vmatpush1.msra.mxu0 0.0
    %1451 = vmatprep.subr.mxu0 0.0
    %1452 = vmatpush1.msra.mxu0 0.0
    %1453 = vmatprep.subr.mxu0 0.0
    %1454 = vmatpush1.msra.mxu0 0.0
    %1455 = vmatprep.subr.mxu0 0.0
    %1456 = vmatpush1.msra.mxu0 0.0
    %1457 = vmatprep.subr.mxu0 0.0
    %1458 = vmatpush1.msra.mxu0 0.0
    %1459 = vmatprep.subr.mxu0 0.0
    %1460 = vmatpush1.msra.mxu0 0.0
    %1461 = vmatprep.subr.mxu0 0.0
    %1462 = vmatpush1.msra.mxu0 0.0
    %1463 = vmatprep.subr.mxu0 0.0
    %1464 = vmatpush1.msra.mxu0 0.0
    %1465 = vmatprep.subr.mxu0 0.0
    %1466 = vmatpush1.msra.mxu0 0.0
    %1467 = vmatprep.subr.mxu0 0.0
    %1468 = vmatpush1.msra.mxu0 0.0
    %1469 = vmatprep.subr.mxu0 0.0
    %1470 = vmatpush1.msra.mxu0 0.0
    %1471 = vmatprep.subr.mxu0 0.0
    %1472 = vmatpush1.msra.mxu0 0.0
    %1473 = vmatprep.subr.mxu0 0.0
    %1474 = vmatpush1.msra.mxu0 0.0
    %1475 = vmatprep.subr.mxu0 0.0
    %1476 = vmatpush1.msra.mxu0 0.0
    %1477 = vmatprep.mubr.f32.mxu0 0.0
    %1478 = vmatmul.mubr.f32.gmra.mrb[0].mxu0 %v1326
    %v1479 = vpop.f32.mrb[0].mxu0
    %v1480 = vadd.f32 0.0, %v1479
    %v1481 = vpop.f32.mrb[0].mxu0
    %1482 = vdwg.mxu0
    %v1484 = vrot.slane %v1480, 5
    %v1485 = vrot.slane %v1480, 6
    %v1488 = vadd.f32 %v402, %v1484
    %v1489 = vadd.f32 %v407, %v1485
    %v1490 = vmul.f32 %v1488, 0.5
    %v1491 = vmul.f32 %v1489, 0.5
    %v1492 = vtanh.pop %v1490
    %v1493 = vtanh.pop %v1491
    %v1494 = vmul.f32 %v1492, 0.5
    %v1495 = vmul.f32 %v1493, 0.5
    %v1496 = vadd.f32 %v1494, 0.5
    %v1497 = vadd.f32 %v1495, 0.5
    %1498 = vmatprep.subr.mxu0 0.0
    %1499 = vmatpush1.msra.mxu0 %v504
    %1500 = vmatprep.subr.mxu0 0.0
    %1501 = vmatpush1.msra.mxu0 %v505
    %1502 = vmatprep.subr.mxu0 0.0
    %1503 = vmatpush1.msra.mxu0 %v506
    %1504 = vmatprep.subr.mxu0 0.0
    %1505 = vmatpush1.msra.mxu0 %v507
    %1506 = vmatprep.subr.mxu0 0.0
    %1507 = vmatpush1.msra.mxu0 0.0
    %1508 = vmatprep.subr.mxu0 0.0
    %1509 = vmatpush1.msra.mxu0 0.0
    %1510 = vmatprep.subr.mxu0 0.0
    %1511 = vmatpush1.msra.mxu0 0.0
    %1512 = vmatprep.subr.mxu0 0.0
    %1513 = vmatpush1.msra.mxu0 0.0
    %1514 = vmatprep.subr.mxu0 0.0
    %1515 = vmatpush1.msra.mxu0 0.0
    %1516 = vmatprep.subr.mxu0 0.0
    %1517 = vmatpush1.msra.mxu0 0.0
    %1518 = vmatprep.subr.mxu0 0.0
    %1519 = vmatpush1.msra.mxu0 0.0
    %1520 = vmatprep.subr.mxu0 0.0
    %1521 = vmatpush1.msra.mxu0 0.0
    %1522 = vmatprep.subr.mxu0 0.0
    %1523 = vmatpush1.msra.mxu0 0.0
    %1524 = vmatprep.subr.mxu0 0.0
    %1525 = vmatpush1.msra.mxu0 0.0
    %1526 = vmatprep.subr.mxu0 0.0
    %1527 = vmatpush1.msra.mxu0 0.0
    %1528 = vmatprep.subr.mxu0 0.0
    %1529 = vmatpush1.msra.mxu0 0.0
    %1530 = vmatprep.subr.mxu0 0.0
    %1531 = vmatpush1.msra.mxu0 0.0
    %1532 = vmatprep.subr.mxu0 0.0
    %1533 = vmatpush1.msra.mxu0 0.0
    %1534 = vmatprep.subr.mxu0 0.0
    %1535 = vmatpush1.msra.mxu0 0.0
    %1536 = vmatprep.subr.mxu0 0.0
    %1537 = vmatpush1.msra.mxu0 0.0
    %1538 = vmatprep.subr.mxu0 0.0
    %1539 = vmatpush1.msra.mxu0 0.0
    %1540 = vmatprep.subr.mxu0 0.0
    %1541 = vmatpush1.msra.mxu0 0.0
    %1542 = vmatprep.subr.mxu0 0.0
    %1543 = vmatpush1.msra.mxu0 0.0
    %1544 = vmatprep.subr.mxu0 0.0
    %1545 = vmatpush1.msra.mxu0 0.0
    %1546 = vmatprep.subr.mxu0 0.0
    %1547 = vmatpush1.msra.mxu0 0.0
    %1548 = vmatprep.subr.mxu0 0.0
    %1549 = vmatpush1.msra.mxu0 0.0
    %1550 = vmatprep.subr.mxu0 0.0
    %1551 = vmatpush1.msra.mxu0 0.0
    %1552 = vmatprep.subr.mxu0 0.0
    %1553 = vmatpush1.msra.mxu0 0.0
    %1554 = vmatprep.subr.mxu0 0.0
    %1555 = vmatpush1.msra.mxu0 0.0
    %1556 = vmatprep.subr.mxu0 0.0
    %1557 = vmatpush1.msra.mxu0 0.0
    %1558 = vmatprep.subr.mxu0 0.0
    %1559 = vmatpush1.msra.mxu0 0.0
    %1560 = vmatprep.subr.mxu0 0.0
    %1561 = vmatpush1.msra.mxu0 0.0
    %1562 = vmatprep.mubr.f32.mxu0 0.0
    %1563 = vmatmul.mubr.f32.gmra.mrb[0].mxu0 %v1326
    %v1564 = vpop.f32.mrb[0].mxu0
    %v1565 = vadd.f32 %v685, %v1564
    %v1566 = vpop.f32.mrb[0].mxu0
    %1567 = vdwg.mxu0
    %v1569 = vrot.slane %v1565, 5
    %v1570 = vrot.slane %v1565, 6
    %v1573 = vmul.f32 %v1411, %v1569
    %v1574 = vmul.f32 %v1412, %v1570
    %v1575 = vadd.f32 %v488, %v1573
    %v1576 = vadd.f32 %v493, %v1574
    %v1577 = vtanh.pop %v1575
    %v1578 = vtanh.pop %v1576
    %v1581 = vrot.slane %v1577, 1
    %v1582 = vrot.slane %v1578, 1
    %v1585 = vsub.f32 %v1319, %v1581
    %v1586 = vsub.f32 %v1320, %v1582
    %v1589 = vrot.slane %v1585, 7
    %v1590 = vrot.slane %v1586, 7
    %v1593 = vmul.f32 %v1496, %v1589
    %v1594 = vmul.f32 %v1497, %v1590
    %v1595 = vadd.f32 %v1577, %v1593
    %v1596 = vadd.f32 %v1578, %v1594
    %v1599 = vrot.slane %v1595, 3
    %v1600 = vrot.slane %v1596, 2
    %v1601 = vsel %vm776, %v1600, %v1599
    %v1602 = vsel %vm509, %v1601, 0
    %1604 = vmatprep.subr.mxu0 0.0
    %1605 = vmatpush1.msra.mxu0 %v496
    %1606 = vmatprep.subr.mxu0 0.0
    %1607 = vmatpush1.msra.mxu0 %v497
    %1608 = vmatprep.subr.mxu0 0.0
    %1609 = vmatpush1.msra.mxu0 %v498
    %1610 = vmatprep.subr.mxu0 0.0
    %1611 = vmatpush1.msra.mxu0 %v499
    %1612 = vmatprep.subr.mxu0 0.0
    %1613 = vmatpush1.msra.mxu0 0.0
    %1614 = vmatprep.subr.mxu0 0.0
    %1615 = vmatpush1.msra.mxu0 0.0
    %1616 = vmatprep.subr.mxu0 0.0
    %1617 = vmatpush1.msra.mxu0 0.0
    %1618 = vmatprep.subr.mxu0 0.0
    %1619 = vmatpush1.msra.mxu0 0.0
    %1620 = vmatprep.subr.mxu0 0.0
    %1621 = vmatpush1.msra.mxu0 0.0
    %1622 = vmatprep.subr.mxu0 0.0
    %1623 = vmatpush1.msra.mxu0 0.0
    %1624 = vmatprep.subr.mxu0 0.0
    %1625 = vmatpush1.msra.mxu0 0.0
    %1626 = vmatprep.subr.mxu0 0.0
    %1627 = vmatpush1.msra.mxu0 0.0
    %1628 = vmatprep.subr.mxu0 0.0
    %1629 = vmatpush1.msra.mxu0 0.0
    %1630 = vmatprep.subr.mxu0 0.0
    %1631 = vmatpush1.msra.mxu0 0.0
    %1632 = vmatprep.subr.mxu0 0.0
    %1633 = vmatpush1.msra.mxu0 0.0
    %1634 = vmatprep.subr.mxu0 0.0
    %1635 = vmatpush1.msra.mxu0 0.0
    %1636 = vmatprep.subr.mxu0 0.0
    %1637 = vmatpush1.msra.mxu0 0.0
    %1638 = vmatprep.subr.mxu0 0.0
    %1639 = vmatpush1.msra.mxu0 0.0
    %1640 = vmatprep.subr.mxu0 0.0
    %1641 = vmatpush1.msra.mxu0 0.0
    %1642 = vmatprep.subr.mxu0 0.0
    %1643 = vmatpush1.msra.mxu0 0.0
    %1644 = vmatprep.subr.mxu0 0.0
    %1645 = vmatpush1.msra.mxu0 0.0
    %1646 = vmatprep.subr.mxu0 0.0
    %1647 = vmatpush1.msra.mxu0 0.0
    %1648 = vmatprep.subr.mxu0 0.0
    %1649 = vmatpush1.msra.mxu0 0.0
    %1650 = vmatprep.subr.mxu0 0.0
    %1651 = vmatpush1.msra.mxu0 0.0
    %1652 = vmatprep.subr.mxu0 0.0
    %1653 = vmatpush1.msra.mxu0 0.0
    %1654 = vmatprep.subr.mxu0 0.0
    %1655 = vmatpush1.msra.mxu0 0.0
    %1656 = vmatprep.subr.mxu0 0.0
    %1657 = vmatpush1.msra.mxu0 0.0
    %1658 = vmatprep.subr.mxu0 0.0
    %1659 = vmatpush1.msra.mxu0 0.0
    %1660 = vmatprep.subr.mxu0 0.0
    %1661 = vmatpush1.msra.mxu0 0.0
    %1662 = vmatprep.subr.mxu0 0.0
    %1663 = vmatpush1.msra.mxu0 0.0
    %1664 = vmatprep.subr.mxu0 0.0
    %1665 = vmatpush1.msra.mxu0 0.0
    %1666 = vmatprep.subr.mxu0 0.0
    %1667 = vmatpush1.msra.mxu0 0.0
    %1668 = vmatprep.mubr.f32.mxu0 0.0
    %1669 = vmatmul.mubr.f32.gmra.mrb[0].mxu0 %v1602
    %v1670 = vpop.f32.mrb[0].mxu0
    %v1671 = vadd.f32 0.0, %v1670
    %v1672 = vpop.f32.mrb[0].mxu0
    %1673 = vdwg.mxu0
    %v1675 = vrot.slane %v1671, 4
    %v1676 = vrot.slane %v1671, 5
    %v1679 = vadd.f32 %v316, %v1675
    %v1680 = vadd.f32 %v321, %v1676
    %v1681 = vmul.f32 %v1679, 0.5
    %v1682 = vmul.f32 %v1680, 0.5
    %v1683 = vtanh.pop %v1681
    %v1684 = vtanh.pop %v1682
    %v1685 = vmul.f32 %v1683, 0.5
    %v1686 = vmul.f32 %v1684, 0.5
    %v1687 = vadd.f32 %v1685, 0.5
    %v1688 = vadd.f32 %v1686, 0.5
    %1689 = vmatprep.subr.mxu0 0.0
    %1690 = vmatpush1.msra.mxu0 %v500
    %1691 = vmatprep.subr.mxu0 0.0
    %1692 = vmatpush1.msra.mxu0 %v501
    %1693 = vmatprep.subr.mxu0 0.0
    %1694 = vmatpush1.msra.mxu0 %v502
    %1695 = vmatprep.subr.mxu0 0.0
    %1696 = vmatpush1.msra.mxu0 %v503
    %1697 = vmatprep.subr.mxu0 0.0
    %1698 = vmatpush1.msra.mxu0 0.0
    %1699 = vmatprep.subr.mxu0 0.0
    %1700 = vmatpush1.msra.mxu0 0.0
    %1701 = vmatprep.subr.mxu0 0.0
    %1702 = vmatpush1.msra.mxu0 0.0
    %1703 = vmatprep.subr.mxu0 0.0
    %1704 = vmatpush1.msra.mxu0 0.0
    %1705 = vmatprep.subr.mxu0 0.0
    %1706 = vmatpush1.msra.mxu0 0.0
    %1707 = vmatprep.subr.mxu0 0.0
    %1708 = vmatpush1.msra.mxu0 0.0
    %1709 = vmatprep.subr.mxu0 0.0
    %1710 = vmatpush1.msra.mxu0 0.0
    %1711 = vmatprep.subr.mxu0 0.0
    %1712 = vmatpush1.msra.mxu0 0.0
    %1713 = vmatprep.subr.mxu0 0.0
    %1714 = vmatpush1.msra.mxu0 0.0
    %1715 = vmatprep.subr.mxu0 0.0
    %1716 = vmatpush1.msra.mxu0 0.0
    %1717 = vmatprep.subr.mxu0 0.0
    %1718 = vmatpush1.msra.mxu0 0.0
    %1719 = vmatprep.subr.mxu0 0.0
    %1720 = vmatpush1.msra.mxu0 0.0
    %1721 = vmatprep.subr.mxu0 0.0
    %1722 = vmatpush1.msra.mxu0 0.0
    %1723 = vmatprep.subr.mxu0 0.0
    %1724 = vmatpush1.msra.mxu0 0.0
    %1725 = vmatprep.subr.mxu0 0.0
    %1726 = vmatpush1.msra.mxu0 0.0
    %1727 = vmatprep.subr.mxu0 0.0
    %1728 = vmatpush1.msra.mxu0 0.0
    %1729 = vmatprep.subr.mxu0 0.0
    %1730 = vmatpush1.msra.mxu0 0.0
    %1731 = vmatprep.subr.mxu0 0.0
    %1732 = vmatpush1.msra.mxu0 0.0
    %1733 = vmatprep.subr.mxu0 0.0
    %1734 = vmatpush1.msra.mxu0 0.0
    %1735 = vmatprep.subr.mxu0 0.0
    %1736 = vmatpush1.msra.mxu0 0.0
    %1737 = vmatprep.subr.mxu0 0.0
    %1738 = vmatpush1.msra.mxu0 0.0
    %1739 = vmatprep.subr.mxu0 0.0
    %1740 = vmatpush1.msra.mxu0 0.0
    %1741 = vmatprep.subr.mxu0 0.0
    %1742 = vmatpush1.msra.mxu0 0.0
    %1743 = vmatprep.subr.mxu0 0.0
    %1744 = vmatpush1.msra.mxu0 0.0
    %1745 = vmatprep.subr.mxu0 0.0
    %1746 = vmatpush1.msra.mxu0 0.0
    %1747 = vmatprep.subr.mxu0 0.0
    %1748 = vmatpush1.msra.mxu0 0.0
    %1749 = vmatprep.subr.mxu0 0.0
    %1750 = vmatpush1.msra.mxu0 0.0
    %1751 = vmatprep.subr.mxu0 0.0
    %1752 = vmatpush1.msra.mxu0 0.0
    %1753 = vmatprep.mubr.f32.mxu0 0.0
    %1754 = vmatmul.mubr.f32.gmra.mrb[0].mxu0 %v1602
    %v1755 = vpop.f32.mrb[0].mxu0
    %v1756 = vadd.f32 0.0, %v1755
    %v1757 = vpop.f32.mrb[0].mxu0
    %1758 = vdwg.mxu0
    %v1760 = vrot.slane %v1756, 4
    %v1761 = vrot.slane %v1756, 5
    %v1764 = vadd.f32 %v402, %v1760
    %v1765 = vadd.f32 %v407, %v1761
    %v1766 = vmul.f32 %v1764, 0.5
    %v1767 = vmul.f32 %v1765, 0.5
    %v1768 = vtanh.pop %v1766
    %v1769 = vtanh.pop %v1767
    %v1770 = vmul.f32 %v1768, 0.5
    %v1771 = vmul.f32 %v1769, 0.5
    %v1772 = vadd.f32 %v1770, 0.5
    %v1773 = vadd.f32 %v1771, 0.5
    %1774 = vmatprep.subr.mxu0 0.0
    %1775 = vmatpush1.msra.mxu0 %v504
    %1776 = vmatprep.subr.mxu0 0.0
    %1777 = vmatpush1.msra.mxu0 %v505
    %1778 = vmatprep.subr.mxu0 0.0
    %1779 = vmatpush1.msra.mxu0 %v506
    %1780 = vmatprep.subr.mxu0 0.0
    %1781 = vmatpush1.msra.mxu0 %v507
    %1782 = vmatprep.subr.mxu0 0.0
    %1783 = vmatpush1.msra.mxu0 0.0
    %1784 = vmatprep.subr.mxu0 0.0
    %1785 = vmatpush1.msra.mxu0 0.0
    %1786 = vmatprep.subr.mxu0 0.0
    %1787 = vmatpush1.msra.mxu0 0.0
    %1788 = vmatprep.subr.mxu0 0.0
    %1789 = vmatpush1.msra.mxu0 0.0
    %1790 = vmatprep.subr.mxu0 0.0
    %1791 = vmatpush1.msra.mxu0 0.0
    %1792 = vmatprep.subr.mxu0 0.0
    %1793 = vmatpush1.msra.mxu0 0.0
    %1794 = vmatprep.subr.mxu0 0.0
    %1795 = vmatpush1.msra.mxu0 0.0
    %1796 = vmatprep.subr.mxu0 0.0
    %1797 = vmatpush1.msra.mxu0 0.0
    %1798 = vmatprep.subr.mxu0 0.0
    %1799 = vmatpush1.msra.mxu0 0.0
    %1800 = vmatprep.subr.mxu0 0.0
    %1801 = vmatpush1.msra.mxu0 0.0
    %1802 = vmatprep.subr.mxu0 0.0
    %1803 = vmatpush1.msra.mxu0 0.0
    %1804 = vmatprep.subr.mxu0 0.0
    %1805 = vmatpush1.msra.mxu0 0.0
    %1806 = vmatprep.subr.mxu0 0.0
    %1807 = vmatpush1.msra.mxu0 0.0
    %1808 = vmatprep.subr.mxu0 0.0
    %1809 = vmatpush1.msra.mxu0 0.0
    %1810 = vmatprep.subr.mxu0 0.0
    %1811 = vmatpush1.msra.mxu0 0.0
    %1812 = vmatprep.subr.mxu0 0.0
    %1813 = vmatpush1.msra.mxu0 0.0
    %1814 = vmatprep.subr.mxu0 0.0
    %1815 = vmatpush1.msra.mxu0 0.0
    %1816 = vmatprep.subr.mxu0 0.0
    %1817 = vmatpush1.msra.mxu0 0.0
    %1818 = vmatprep.subr.mxu0 0.0
    %1819 = vmatpush1.msra.mxu0 0.0
    %1820 = vmatprep.subr.mxu0 0.0
    %1821 = vmatpush1.msra.mxu0 0.0
    %1822 = vmatprep.subr.mxu0 0.0
    %1823 = vmatpush1.msra.mxu0 0.0
    %1824 = vmatprep.subr.mxu0 0.0
    %1825 = vmatpush1.msra.mxu0 0.0
    %1826 = vmatprep.subr.mxu0 0.0
    %1827 = vmatpush1.msra.mxu0 0.0
    %1828 = vmatprep.subr.mxu0 0.0
    %1829 = vmatpush1.msra.mxu0 0.0
    %1830 = vmatprep.subr.mxu0 0.0
    %1831 = vmatpush1.msra.mxu0 0.0
    %1832 = vmatprep.subr.mxu0 0.0
    %1833 = vmatpush1.msra.mxu0 0.0
    %1834 = vmatprep.subr.mxu0 0.0
    %1835 = vmatpush1.msra.mxu0 0.0
    %1836 = vmatprep.subr.mxu0 0.0
    %1837 = vmatpush1.msra.mxu0 0.0
    %1838 = vmatprep.mubr.f32.mxu0 0.0
    %1839 = vmatmul.mubr.f32.gmra.mrb[0].mxu0 %v1602
    %v1840 = vpop.f32.mrb[0].mxu0
    %v1841 = vadd.f32 %v685, %v1840
    %v1842 = vpop.f32.mrb[0].mxu0
    %1843 = vdwg.mxu0
    %v1845 = vrot.slane %v1841, 4
    %v1846 = vrot.slane %v1841, 5
    %v1849 = vmul.f32 %v1687, %v1845
    %v1850 = vmul.f32 %v1688, %v1846
    %v1851 = vadd.f32 %v488, %v1849
    %v1852 = vadd.f32 %v493, %v1850
    %v1853 = vtanh.pop %v1851
    %v1854 = vtanh.pop %v1852
    %v1857 = vrot.slane %v1853, 1
    %v1858 = vrot.slane %v1854, 1
    %v1861 = vsub.f32 %v1595, %v1857
    %v1862 = vsub.f32 %v1596, %v1858
    %v1865 = vrot.slane %v1861, 7
    %v1866 = vrot.slane %v1862, 7
    %v1869 = vmul.f32 %v1772, %v1865
    %v1870 = vmul.f32 %v1773, %v1866
    %v1871 = vadd.f32 %v1853, %v1869
    %v1872 = vadd.f32 %v1854, %v1870
    %v1875 = vrot.slane %v1871, 4
    %v1876 = vrot.slane %v1872, 3
    %v1877 = vsel %vm776, %v1876, %v1875
    %v1878 = vsel %vm509, %v1877, 0
    %1880 = vmatprep.subr.mxu0 0.0
    %1881 = vmatpush1.msra.mxu0 %v496
    %1882 = vmatprep.subr.mxu0 0.0
    %1883 = vmatpush1.msra.mxu0 %v497
    %1884 = vmatprep.subr.mxu0 0.0
    %1885 = vmatpush1.msra.mxu0 %v498
    %1886 = vmatprep.subr.mxu0 0.0
    %1887 = vmatpush1.msra.mxu0 %v499
    %1888 = vmatprep.subr.mxu0 0.0
    %1889 = vmatpush1.msra.mxu0 0.0
    %1890 = vmatprep.subr.mxu0 0.0
    %1891 = vmatpush1.msra.mxu0 0.0
    %1892 = vmatprep.subr.mxu0 0.0
    %1893 = vmatpush1.msra.mxu0 0.0
    %1894 = vmatprep.subr.mxu0 0.0
    %1895 = vmatpush1.msra.mxu0 0.0
    %1896 = vmatprep.subr.mxu0 0.0
    %1897 = vmatpush1.msra.mxu0 0.0
    %1898 = vmatprep.subr.mxu0 0.0
    %1899 = vmatpush1.msra.mxu0 0.0
    %1900 = vmatprep.subr.mxu0 0.0
    %1901 = vmatpush1.msra.mxu0 0.0
    %1902 = vmatprep.subr.mxu0 0.0
    %1903 = vmatpush1.msra.mxu0 0.0
    %1904 = vmatprep.subr.mxu0 0.0
    %1905 = vmatpush1.msra.mxu0 0.0
    %1906 = vmatprep.subr.mxu0 0.0
    %1907 = vmatpush1.msra.mxu0 0.0
    %1908 = vmatprep.subr.mxu0 0.0
    %1909 = vmatpush1.msra.mxu0 0.0
    %1910 = vmatprep.subr.mxu0 0.0
    %1911 = vmatpush1.msra.mxu0 0.0
    %1912 = vmatprep.subr.mxu0 0.0
    %1913 = vmatpush1.msra.mxu0 0.0
    %1914 = vmatprep.subr.mxu0 0.0
    %1915 = vmatpush1.msra.mxu0 0.0
    %1916 = vmatprep.subr.mxu0 0.0
    %1917 = vmatpush1.msra.mxu0 0.0
    %1918 = vmatprep.subr.mxu0 0.0
    %1919 = vmatpush1.msra.mxu0 0.0
    %1920 = vmatprep.subr.mxu0 0.0
    %1921 = vmatpush1.msra.mxu0 0.0
    %1922 = vmatprep.subr.mxu0 0.0
    %1923 = vmatpush1.msra.mxu0 0.0
    %1924 = vmatprep.subr.mxu0 0.0
    %1925 = vmatpush1.msra.mxu0 0.0
    %1926 = vmatprep.subr.mxu0 0.0
    %1927 = vmatpush1.msra.mxu0 0.0
    %1928 = vmatprep.subr.mxu0 0.0
    %1929 = vmatpush1.msra.mxu0 0.0
    %1930 = vmatprep.subr.mxu0 0.0
    %1931 = vmatpush1.msra.mxu0 0.0
    %1932 = vmatprep.subr.mxu0 0.0
    %1933 = vmatpush1.msra.mxu0 0.0
    %1934 = vmatprep.subr.mxu0 0.0
    %1935 = vmatpush1.msra.mxu0 0.0
    %1936 = vmatprep.subr.mxu0 0.0
    %1937 = vmatpush1.msra.mxu0 0.0
    %1938 = vmatprep.subr.mxu0 0.0
    %1939 = vmatpush1.msra.mxu0 0.0
    %1940 = vmatprep.subr.mxu0 0.0
    %1941 = vmatpush1.msra.mxu0 0.0
    %1942 = vmatprep.subr.mxu0 0.0
    %1943 = vmatpush1.msra.mxu0 0.0
    %1944 = vmatprep.mubr.f32.mxu0 0.0
    %1945 = vmatmul.mubr.f32.gmra.mrb[0].mxu0 %v1878
    %v1946 = vpop.f32.mrb[0].mxu0
    %v1947 = vadd.f32 0.0, %v1946
    %v1948 = vpop.f32.mrb[0].mxu0
    %1949 = vdwg.mxu0
    %v1951 = vrot.slane %v1947, 3
    %v1952 = vrot.slane %v1947, 4
    %v1955 = vadd.f32 %v316, %v1951
    %v1956 = vadd.f32 %v321, %v1952
    %v1957 = vmul.f32 %v1955, 0.5
    %v1958 = vmul.f32 %v1956, 0.5
    %v1959 = vtanh.pop %v1957
    %v1960 = vtanh.pop %v1958
    %v1961 = vmul.f32 %v1959, 0.5
    %v1962 = vmul.f32 %v1960, 0.5
    %v1963 = vadd.f32 %v1961, 0.5
    %v1964 = vadd.f32 %v1962, 0.5
    %1965 = vmatprep.subr.mxu0 0.0
    %1966 = vmatpush1.msra.mxu0 %v500
    %1967 = vmatprep.subr.mxu0 0.0
    %1968 = vmatpush1.msra.mxu0 %v501
    %1969 = vmatprep.subr.mxu0 0.0
    %1970 = vmatpush1.msra.mxu0 %v502
    %1971 = vmatprep.subr.mxu0 0.0
    %1972 = vmatpush1.msra.mxu0 %v503
    %1973 = vmatprep.subr.mxu0 0.0
    %1974 = vmatpush1.msra.mxu0 0.0
    %1975 = vmatprep.subr.mxu0 0.0
    %1976 = vmatpush1.msra.mxu0 0.0
    %1977 = vmatprep.subr.mxu0 0.0
    %1978 = vmatpush1.msra.mxu0 0.0
    %1979 = vmatprep.subr.mxu0 0.0
    %1980 = vmatpush1.msra.mxu0 0.0
    %1981 = vmatprep.subr.mxu0 0.0
    %1982 = vmatpush1.msra.mxu0 0.0
    %1983 = vmatprep.subr.mxu0 0.0
    %1984 = vmatpush1.msra.mxu0 0.0
    %1985 = vmatprep.subr.mxu0 0.0
    %1986 = vmatpush1.msra.mxu0 0.0
    %1987 = vmatprep.subr.mxu0 0.0
    %1988 = vmatpush1.msra.mxu0 0.0
    %1989 = vmatprep.subr.mxu0 0.0
    %1990 = vmatpush1.msra.mxu0 0.0
    %1991 = vmatprep.subr.mxu0 0.0
    %1992 = vmatpush1.msra.mxu0 0.0
    %1993 = vmatprep.subr.mxu0 0.0
    %1994 = vmatpush1.msra.mxu0 0.0
    %1995 = vmatprep.subr.mxu0 0.0
    %1996 = vmatpush1.msra.mxu0 0.0
    %1997 = vmatprep.subr.mxu0 0.0
    %1998 = vmatpush1.msra.mxu0 0.0
    %1999 = vmatprep.subr.mxu0 0.0
    %2000 = vmatpush1.msra.mxu0 0.0
    %2001 = vmatprep.subr.mxu0 0.0
    %2002 = vmatpush1.msra.mxu0 0.0
    %2003 = vmatprep.subr.mxu0 0.0
    %2004 = vmatpush1.msra.mxu0 0.0
    %2005 = vmatprep.subr.mxu0 0.0
    %2006 = vmatpush1.msra.mxu0 0.0
    %2007 = vmatprep.subr.mxu0 0.0
    %2008 = vmatpush1.msra.mxu0 0.0
    %2009 = vmatprep.subr.mxu0 0.0
    %2010 = vmatpush1.msra.mxu0 0.0
    %2011 = vmatprep.subr.mxu0 0.0
    %2012 = vmatpush1.msra.mxu0 0.0
    %2013 = vmatprep.subr.mxu0 0.0
    %2014 = vmatpush1.msra.mxu0 0.0
    %2015 = vmatprep.subr.mxu0 0.0
    %2016 = vmatpush1.msra.mxu0 0.0
    %2017 = vmatprep.subr.mxu0 0.0
    %2018 = vmatpush1.msra.mxu0 0.0
    %2019 = vmatprep.subr.mxu0 0.0
    %2020 = vmatpush1.msra.mxu0 0.0
    %2021 = vmatprep.subr.mxu0 0.0
    %2022 = vmatpush1.msra.mxu0 0.0
    %2023 = vmatprep.subr.mxu0 0.0
    %2024 = vmatpush1.msra.mxu0 0.0
    %2025 = vmatprep.subr.mxu0 0.0
    %2026 = vmatpush1.msra.mxu0 0.0
    %2027 = vmatprep.subr.mxu0 0.0
    %2028 = vmatpush1.msra.mxu0 0.0
    %2029 = vmatprep.mubr.f32.mxu0 0.0
    %2030 = vmatmul.mubr.f32.gmra.mrb[0].mxu0 %v1878
    %v2031 = vpop.f32.mrb[0].mxu0
    %v2032 = vadd.f32 0.0, %v2031
    %v2033 = vpop.f32.mrb[0].mxu0
    %2034 = vdwg.mxu0
    %v2036 = vrot.slane %v2032, 3
    %v2037 = vrot.slane %v2032, 4
    %v2040 = vadd.f32 %v402, %v2036
    %v2041 = vadd.f32 %v407, %v2037
    %v2042 = vmul.f32 %v2040, 0.5
    %v2043 = vmul.f32 %v2041, 0.5
    %v2044 = vtanh.pop %v2042
    %v2045 = vtanh.pop %v2043
    %v2046 = vmul.f32 %v2044, 0.5
    %v2047 = vmul.f32 %v2045, 0.5
    %v2048 = vadd.f32 %v2046, 0.5
    %v2049 = vadd.f32 %v2047, 0.5
    %2050 = vmatprep.subr.mxu0 0.0
    %2051 = vmatpush1.msra.mxu0 %v504
    %2052 = vmatprep.subr.mxu0 0.0
    %2053 = vmatpush1.msra.mxu0 %v505
    %2054 = vmatprep.subr.mxu0 0.0
    %2055 = vmatpush1.msra.mxu0 %v506
    %2056 = vmatprep.subr.mxu0 0.0
    %2057 = vmatpush1.msra.mxu0 %v507
    %2058 = vmatprep.subr.mxu0 0.0
    %2059 = vmatpush1.msra.mxu0 0.0
    %2060 = vmatprep.subr.mxu0 0.0
    %2061 = vmatpush1.msra.mxu0 0.0
    %2062 = vmatprep.subr.mxu0 0.0
    %2063 = vmatpush1.msra.mxu0 0.0
    %2064 = vmatprep.subr.mxu0 0.0
    %2065 = vmatpush1.msra.mxu0 0.0
    %2066 = vmatprep.subr.mxu0 0.0
    %2067 = vmatpush1.msra.mxu0 0.0
    %2068 = vmatprep.subr.mxu0 0.0
    %2069 = vmatpush1.msra.mxu0 0.0
    %2070 = vmatprep.subr.mxu0 0.0
    %2071 = vmatpush1.msra.mxu0 0.0
    %2072 = vmatprep.subr.mxu0 0.0
    %2073 = vmatpush1.msra.mxu0 0.0
    %2074 = vmatprep.subr.mxu0 0.0
    %2075 = vmatpush1.msra.mxu0 0.0
    %2076 = vmatprep.subr.mxu0 0.0
    %2077 = vmatpush1.msra.mxu0 0.0
    %2078 = vmatprep.subr.mxu0 0.0
    %2079 = vmatpush1.msra.mxu0 0.0
    %2080 = vmatprep.subr.mxu0 0.0
    %2081 = vmatpush1.msra.mxu0 0.0
    %2082 = vmatprep.subr.mxu0 0.0
    %2083 = vmatpush1.msra.mxu0 0.0
    %2084 = vmatprep.subr.mxu0 0.0
    %2085 = vmatpush1.msra.mxu0 0.0
    %2086 = vmatprep.subr.mxu0 0.0
    %2087 = vmatpush1.msra.mxu0 0.0
    %2088 = vmatprep.subr.mxu0 0.0
    %2089 = vmatpush1.msra.mxu0 0.0
    %2090 = vmatprep.subr.mxu0 0.0
    %2091 = vmatpush1.msra.mxu0 0.0
    %2092 = vmatprep.subr.mxu0 0.0
    %2093 = vmatpush1.msra.mxu0 0.0
    %2094 = vmatprep.subr.mxu0 0.0
    %2095 = vmatpush1.msra.mxu0 0.0
    %2096 = vmatprep.subr.mxu0 0.0
    %2097 = vmatpush1.msra.mxu0 0.0
    %2098 = vmatprep.subr.mxu0 0.0
    %2099 = vmatpush1.msra.mxu0 0.0
    %2100 = vmatprep.subr.mxu0 0.0
    %2101 = vmatpush1.msra.mxu0 0.0
    %2102 = vmatprep.subr.mxu0 0.0
    %2103 = vmatpush1.msra.mxu0 0.0
    %2104 = vmatprep.subr.mxu0 0.0
    %2105 = vmatpush1.msra.mxu0 0.0
    %2106 = vmatprep.subr.mxu0 0.0
    %2107 = vmatpush1.msra.mxu0 0.0
    %2108 = vmatprep.subr.mxu0 0.0
    %2109 = vmatpush1.msra.mxu0 0.0
    %2110 = vmatprep.subr.mxu0 0.0
    %2111 = vmatpush1.msra.mxu0 0.0
    %2112 = vmatprep.subr.mxu0 0.0
    %2113 = vmatpush1.msra.mxu0 0.0
    %2114 = vmatprep.mubr.f32.mxu0 0.0
    %2115 = vmatmul.mubr.f32.gmra.mrb[0].mxu0 %v1878
    %v2116 = vpop.f32.mrb[0].mxu0
    %v2117 = vadd.f32 %v685, %v2116
    %v2118 = vpop.f32.mrb[0].mxu0
    %2119 = vdwg.mxu0
    %v2121 = vrot.slane %v2117, 3
    %v2122 = vrot.slane %v2117, 4
    %v2125 = vmul.f32 %v1963, %v2121
    %v2126 = vmul.f32 %v1964, %v2122
    %v2127 = vadd.f32 %v488, %v2125
    %v2128 = vadd.f32 %v493, %v2126
    %v2129 = vtanh.pop %v2127
    %v2130 = vtanh.pop %v2128
    %v2133 = vrot.slane %v2129, 1
    %v2134 = vrot.slane %v2130, 1
    %v2137 = vsub.f32 %v1871, %v2133
    %v2138 = vsub.f32 %v1872, %v2134
    %v2141 = vrot.slane %v2137, 7
    %v2142 = vrot.slane %v2138, 7
    %v2145 = vmul.f32 %v2048, %v2141
    %v2146 = vmul.f32 %v2049, %v2142
    %v2147 = vadd.f32 %v2129, %v2145
    %v2148 = vadd.f32 %v2130, %v2146
    %v2151 = vrot.slane %v2147, 5
    %v2152 = vrot.slane %v2148, 4
    %v2153 = vsel %vm776, %v2152, %v2151
    %v2154 = vsel %vm509, %v2153, 0
    %2156 = vmatprep.subr.mxu0 0.0
    %2157 = vmatpush1.msra.mxu0 %v496
    %2158 = vmatprep.subr.mxu0 0.0
    %2159 = vmatpush1.msra.mxu0 %v497
    %2160 = vmatprep.subr.mxu0 0.0
    %2161 = vmatpush1.msra.mxu0 %v498
    %2162 = vmatprep.subr.mxu0 0.0
    %2163 = vmatpush1.msra.mxu0 %v499
    %2164 = vmatprep.subr.mxu0 0.0
    %2165 = vmatpush1.msra.mxu0 0.0
    %2166 = vmatprep.subr.mxu0 0.0
    %2167 = vmatpush1.msra.mxu0 0.0
    %2168 = vmatprep.subr.mxu0 0.0
    %2169 = vmatpush1.msra.mxu0 0.0
    %2170 = vmatprep.subr.mxu0 0.0
    %2171 = vmatpush1.msra.mxu0 0.0
    %2172 = vmatprep.subr.mxu0 0.0
    %2173 = vmatpush1.msra.mxu0 0.0
    %2174 = vmatprep.subr.mxu0 0.0
    %2175 = vmatpush1.msra.mxu0 0.0
    %2176 = vmatprep.subr.mxu0 0.0
    %2177 = vmatpush1.msra.mxu0 0.0
    %2178 = vmatprep.subr.mxu0 0.0
    %2179 = vmatpush1.msra.mxu0 0.0
    %2180 = vmatprep.subr.mxu0 0.0
    %2181 = vmatpush1.msra.mxu0 0.0
    %2182 = vmatprep.subr.mxu0 0.0
    %2183 = vmatpush1.msra.mxu0 0.0
    %2184 = vmatprep.subr.mxu0 0.0
    %2185 = vmatpush1.msra.mxu0 0.0
    %2186 = vmatprep.subr.mxu0 0.0
    %2187 = vmatpush1.msra.mxu0 0.0
    %2188 = vmatprep.subr.mxu0 0.0
    %2189 = vmatpush1.msra.mxu0 0.0
    %2190 = vmatprep.subr.mxu0 0.0
    %2191 = vmatpush1.msra.mxu0 0.0
    %2192 = vmatprep.subr.mxu0 0.0
    %2193 = vmatpush1.msra.mxu0 0.0
    %2194 = vmatprep.subr.mxu0 0.0
    %2195 = vmatpush1.msra.mxu0 0.0
    %2196 = vmatprep.subr.mxu0 0.0
    %2197 = vmatpush1.msra.mxu0 0.0
    %2198 = vmatprep.subr.mxu0 0.0
    %2199 = vmatpush1.msra.mxu0 0.0
    %2200 = vmatprep.subr.mxu0 0.0
    %2201 = vmatpush1.msra.mxu0 0.0
    %2202 = vmatprep.subr.mxu0 0.0
    %2203 = vmatpush1.msra.mxu0 0.0
    %2204 = vmatprep.subr.mxu0 0.0
    %2205 = vmatpush1.msra.mxu0 0.0
    %2206 = vmatprep.subr.mxu0 0.0
    %2207 = vmatpush1.msra.mxu0 0.0
    %2208 = vmatprep.subr.mxu0 0.0
    %2209 = vmatpush1.msra.mxu0 0.0
    %2210 = vmatprep.subr.mxu0 0.0
    %2211 = vmatpush1.msra.mxu0 0.0
    %2212 = vmatprep.subr.mxu0 0.0
    %2213 = vmatpush1.msra.mxu0 0.0
    %2214 = vmatprep.subr.mxu0 0.0
    %2215 = vmatpush1.msra.mxu0 0.0
    %2216 = vmatprep.subr.mxu0 0.0
    %2217 = vmatpush1.msra.mxu0 0.0
    %2218 = vmatprep.subr.mxu0 0.0
    %2219 = vmatpush1.msra.mxu0 0.0
    %2220 = vmatprep.mubr.f32.mxu0 0.0
    %2221 = vmatmul.mubr.f32.gmra.mrb[0].mxu0 %v2154
    %v2222 = vpop.f32.mrb[0].mxu0
    %v2223 = vadd.f32 0.0, %v2222
    %v2224 = vpop.f32.mrb[0].mxu0
    %2225 = vdwg.mxu0
    %v2227 = vrot.slane %v2223, 2
    %v2228 = vrot.slane %v2223, 3
    %v2231 = vadd.f32 %v316, %v2227
    %v2232 = vadd.f32 %v321, %v2228
    %v2233 = vmul.f32 %v2231, 0.5
    %v2234 = vmul.f32 %v2232, 0.5
    %v2235 = vtanh.pop %v2233
    %v2236 = vtanh.pop %v2234
    %v2237 = vmul.f32 %v2235, 0.5
    %v2238 = vmul.f32 %v2236, 0.5
    %v2239 = vadd.f32 %v2237, 0.5
    %v2240 = vadd.f32 %v2238, 0.5
    %2241 = vmatprep.subr.mxu0 0.0
    %2242 = vmatpush1.msra.mxu0 %v500
    %2243 = vmatprep.subr.mxu0 0.0
    %2244 = vmatpush1.msra.mxu0 %v501
    %2245 = vmatprep.subr.mxu0 0.0
    %2246 = vmatpush1.msra.mxu0 %v502
    %2247 = vmatprep.subr.mxu0 0.0
    %2248 = vmatpush1.msra.mxu0 %v503
    %2249 = vmatprep.subr.mxu0 0.0
    %2250 = vmatpush1.msra.mxu0 0.0
    %2251 = vmatprep.subr.mxu0 0.0
    %2252 = vmatpush1.msra.mxu0 0.0
    %2253 = vmatprep.subr.mxu0 0.0
    %2254 = vmatpush1.msra.mxu0 0.0
    %2255 = vmatprep.subr.mxu0 0.0
    %2256 = vmatpush1.msra.mxu0 0.0
    %2257 = vmatprep.subr.mxu0 0.0
    %2258 = vmatpush1.msra.mxu0 0.0
    %2259 = vmatprep.subr.mxu0 0.0
    %2260 = vmatpush1.msra.mxu0 0.0
    %2261 = vmatprep.subr.mxu0 0.0
    %2262 = vmatpush1.msra.mxu0 0.0
    %2263 = vmatprep.subr.mxu0 0.0
    %2264 = vmatpush1.msra.mxu0 0.0
    %2265 = vmatprep.subr.mxu0 0.0
    %2266 = vmatpush1.msra.mxu0 0.0
    %2267 = vmatprep.subr.mxu0 0.0
    %2268 = vmatpush1.msra.mxu0 0.0
    %2269 = vmatprep.subr.mxu0 0.0
    %2270 = vmatpush1.msra.mxu0 0.0
    %2271 = vmatprep.subr.mxu0 0.0
    %2272 = vmatpush1.msra.mxu0 0.0
    %2273 = vmatprep.subr.mxu0 0.0
    %2274 = vmatpush1.msra.mxu0 0.0
    %2275 = vmatprep.subr.mxu0 0.0
    %2276 = vmatpush1.msra.mxu0 0.0
    %2277 = vmatprep.subr.mxu0 0.0
    %2278 = vmatpush1.msra.mxu0 0.0
    %2279 = vmatprep.subr.mxu0 0.0
    %2280 = vmatpush1.msra.mxu0 0.0
    %2281 = vmatprep.subr.mxu0 0.0
    %2282 = vmatpush1.msra.mxu0 0.0
    %2283 = vmatprep.subr.mxu0 0.0
    %2284 = vmatpush1.msra.mxu0 0.0
    %2285 = vmatprep.subr.mxu0 0.0
    %2286 = vmatpush1.msra.mxu0 0.0
    %2287 = vmatprep.subr.mxu0 0.0
    %2288 = vmatpush1.msra.mxu0 0.0
    %2289 = vmatprep.subr.mxu0 0.0
    %2290 = vmatpush1.msra.mxu0 0.0
    %2291 = vmatprep.subr.mxu0 0.0
    %2292 = vmatpush1.msra.mxu0 0.0
    %2293 = vmatprep.subr.mxu0 0.0
    %2294 = vmatpush1.msra.mxu0 0.0
    %2295 = vmatprep.subr.mxu0 0.0
    %2296 = vmatpush1.msra.mxu0 0.0
    %2297 = vmatprep.subr.mxu0 0.0
    %2298 = vmatpush1.msra.mxu0 0.0
    %2299 = vmatprep.subr.mxu0 0.0
    %2300 = vmatpush1.msra.mxu0 0.0
    %2301 = vmatprep.subr.mxu0 0.0
    %2302 = vmatpush1.msra.mxu0 0.0
    %2303 = vmatprep.subr.mxu0 0.0
    %2304 = vmatpush1.msra.mxu0 0.0
    %2305 = vmatprep.mubr.f32.mxu0 0.0
    %2306 = vmatmul.mubr.f32.gmra.mrb[0].mxu0 %v2154
    %v2307 = vpop.f32.mrb[0].mxu0
    %v2308 = vadd.f32 0.0, %v2307
    %v2309 = vpop.f32.mrb[0].mxu0
    %2310 = vdwg.mxu0
    %v2312 = vrot.slane %v2308, 2
    %v2313 = vrot.slane %v2308, 3
    %v2316 = vadd.f32 %v402, %v2312
    %v2317 = vadd.f32 %v407, %v2313
    %v2318 = vmul.f32 %v2316, 0.5
    %v2319 = vmul.f32 %v2317, 0.5
    %v2320 = vtanh.pop %v2318
    %v2321 = vtanh.pop %v2319
    %v2322 = vmul.f32 %v2320, 0.5
    %v2323 = vmul.f32 %v2321, 0.5
    %v2324 = vadd.f32 %v2322, 0.5
    %v2325 = vadd.f32 %v2323, 0.5
    %2326 = vmatprep.subr.mxu0 0.0
    %2327 = vmatpush1.msra.mxu0 %v504
    %2328 = vmatprep.subr.mxu0 0.0
    %2329 = vmatpush1.msra.mxu0 %v505
    %2330 = vmatprep.subr.mxu0 0.0
    %2331 = vmatpush1.msra.mxu0 %v506
    %2332 = vmatprep.subr.mxu0 0.0
    %2333 = vmatpush1.msra.mxu0 %v507
    %2334 = vmatprep.subr.mxu0 0.0
    %2335 = vmatpush1.msra.mxu0 0.0
    %2336 = vmatprep.subr.mxu0 0.0
    %2337 = vmatpush1.msra.mxu0 0.0
    %2338 = vmatprep.subr.mxu0 0.0
    %2339 = vmatpush1.msra.mxu0 0.0
    %2340 = vmatprep.subr.mxu0 0.0
    %2341 = vmatpush1.msra.mxu0 0.0
    %2342 = vmatprep.subr.mxu0 0.0
    %2343 = vmatpush1.msra.mxu0 0.0
    %2344 = vmatprep.subr.mxu0 0.0
    %2345 = vmatpush1.msra.mxu0 0.0
    %2346 = vmatprep.subr.mxu0 0.0
    %2347 = vmatpush1.msra.mxu0 0.0
    %2348 = vmatprep.subr.mxu0 0.0
    %2349 = vmatpush1.msra.mxu0 0.0
    %2350 = vmatprep.subr.mxu0 0.0
    %2351 = vmatpush1.msra.mxu0 0.0
    %2352 = vmatprep.subr.mxu0 0.0
    %2353 = vmatpush1.msra.mxu0 0.0
    %2354 = vmatprep.subr.mxu0 0.0
    %2355 = vmatpush1.msra.mxu0 0.0
    %2356 = vmatprep.subr.mxu0 0.0
    %2357 = vmatpush1.msra.mxu0 0.0
    %2358 = vmatprep.subr.mxu0 0.0
    %2359 = vmatpush1.msra.mxu0 0.0
    %2360 = vmatprep.subr.mxu0 0.0
    %2361 = vmatpush1.msra.mxu0 0.0
    %2362 = vmatprep.subr.mxu0 0.0
    %2363 = vmatpush1.msra.mxu0 0.0
    %2364 = vmatprep.subr.mxu0 0.0
    %2365 = vmatpush1.msra.mxu0 0.0
    %2366 = vmatprep.subr.mxu0 0.0
    %2367 = vmatpush1.msra.mxu0 0.0
    %2368 = vmatprep.subr.mxu0 0.0
    %2369 = vmatpush1.msra.mxu0 0.0
    %2370 = vmatprep.subr.mxu0 0.0
    %2371 = vmatpush1.msra.mxu0 0.0
    %2372 = vmatprep.subr.mxu0 0.0
    %2373 = vmatpush1.msra.mxu0 0.0
    %2374 = vmatprep.subr.mxu0 0.0
    %2375 = vmatpush1.msra.mxu0 0.0
    %2376 = vmatprep.subr.mxu0 0.0
    %2377 = vmatpush1.msra.mxu0 0.0
    %2378 = vmatprep.subr.mxu0 0.0
    %2379 = vmatpush1.msra.mxu0 0.0
    %2380 = vmatprep.subr.mxu0 0.0
    %2381 = vmatpush1.msra.mxu0 0.0
    %2382 = vmatprep.subr.mxu0 0.0
    %2383 = vmatpush1.msra.mxu0 0.0
    %2384 = vmatprep.subr.mxu0 0.0
    %2385 = vmatpush1.msra.mxu0 0.0
    %2386 = vmatprep.subr.mxu0 0.0
    %2387 = vmatpush1.msra.mxu0 0.0
    %2388 = vmatprep.subr.mxu0 0.0
    %2389 = vmatpush1.msra.mxu0 0.0
    %2390 = vmatprep.mubr.f32.mxu0 0.0
    %2391 = vmatmul.mubr.f32.gmra.mrb[0].mxu0 %v2154
    %v2392 = vpop.f32.mrb[0].mxu0
    %v2393 = vadd.f32 %v685, %v2392
    %v2394 = vpop.f32.mrb[0].mxu0
    %2395 = vdwg.mxu0
    %v2397 = vrot.slane %v2393, 2
    %v2398 = vrot.slane %v2393, 3
    %v2401 = vmul.f32 %v2239, %v2397
    %v2402 = vmul.f32 %v2240, %v2398
    %v2403 = vadd.f32 %v488, %v2401
    %v2404 = vadd.f32 %v493, %v2402
    %v2405 = vtanh.pop %v2403
    %v2406 = vtanh.pop %v2404
    %v2409 = vrot.slane %v2405, 1
    %v2410 = vrot.slane %v2406, 1
    %v2413 = vsub.f32 %v2147, %v2409
    %v2414 = vsub.f32 %v2148, %v2410
    %v2417 = vrot.slane %v2413, 7
    %v2418 = vrot.slane %v2414, 7
    %v2421 = vmul.f32 %v2324, %v2417
    %v2422 = vmul.f32 %v2325, %v2418
    %v2423 = vadd.f32 %v2405, %v2421
    %v2424 = vadd.f32 %v2406, %v2422
    %v2427 = vrot.slane %v2423, 6
    %v2428 = vrot.slane %v2424, 5
    %v2429 = vsel %vm776, %v2428, %v2427
    %v2430 = vsel %vm509, %v2429, 0
    %2432 = vmatprep.subr.mxu0 0.0
    %2433 = vmatpush1.msra.mxu0 %v496
    %2434 = vmatprep.subr.mxu0 0.0
    %2435 = vmatpush1.msra.mxu0 %v497
    %2436 = vmatprep.subr.mxu0 0.0
    %2437 = vmatpush1.msra.mxu0 %v498
    %2438 = vmatprep.subr.mxu0 0.0
    %2439 = vmatpush1.msra.mxu0 %v499
    %2440 = vmatprep.subr.mxu0 0.0
    %2441 = vmatpush1.msra.mxu0 0.0
    %2442 = vmatprep.subr.mxu0 0.0
    %2443 = vmatpush1.msra.mxu0 0.0
    %2444 = vmatprep.subr.mxu0 0.0
    %2445 = vmatpush1.msra.mxu0 0.0
    %2446 = vmatprep.subr.mxu0 0.0
    %2447 = vmatpush1.msra.mxu0 0.0
    %2448 = vmatprep.subr.mxu0 0.0
    %2449 = vmatpush1.msra.mxu0 0.0
    %2450 = vmatprep.subr.mxu0 0.0
    %2451 = vmatpush1.msra.mxu0 0.0
    %2452 = vmatprep.subr.mxu0 0.0
    %2453 = vmatpush1.msra.mxu0 0.0
    %2454 = vmatprep.subr.mxu0 0.0
    %2455 = vmatpush1.msra.mxu0 0.0
    %2456 = vmatprep.subr.mxu0 0.0
    %2457 = vmatpush1.msra.mxu0 0.0
    %2458 = vmatprep.subr.mxu0 0.0
    %2459 = vmatpush1.msra.mxu0 0.0
    %2460 = vmatprep.subr.mxu0 0.0
    %2461 = vmatpush1.msra.mxu0 0.0
    %2462 = vmatprep.subr.mxu0 0.0
    %2463 = vmatpush1.msra.mxu0 0.0
    %2464 = vmatprep.subr.mxu0 0.0
    %2465 = vmatpush1.msra.mxu0 0.0
    %2466 = vmatprep.subr.mxu0 0.0
    %2467 = vmatpush1.msra.mxu0 0.0
    %2468 = vmatprep.subr.mxu0 0.0
    %2469 = vmatpush1.msra.mxu0 0.0
    %2470 = vmatprep.subr.mxu0 0.0
    %2471 = vmatpush1.msra.mxu0 0.0
    %2472 = vmatprep.subr.mxu0 0.0
    %2473 = vmatpush1.msra.mxu0 0.0
    %2474 = vmatprep.subr.mxu0 0.0
    %2475 = vmatpush1.msra.mxu0 0.0
    %2476 = vmatprep.subr.mxu0 0.0
    %2477 = vmatpush1.msra.mxu0 0.0
    %2478 = vmatprep.subr.mxu0 0.0
    %2479 = vmatpush1.msra.mxu0 0.0
    %2480 = vmatprep.subr.mxu0 0.0
    %2481 = vmatpush1.msra.mxu0 0.0
    %2482 = vmatprep.subr.mxu0 0.0
    %2483 = vmatpush1.msra.mxu0 0.0
    %2484 = vmatprep.subr.mxu0 0.0
    %2485 = vmatpush1.msra.mxu0 0.0
    %2486 = vmatprep.subr.mxu0 0.0
    %2487 = vmatpush1.msra.mxu0 0.0
    %2488 = vmatprep.subr.mxu0 0.0
    %2489 = vmatpush1.msra.mxu0 0.0
    %2490 = vmatprep.subr.mxu0 0.0
    %2491 = vmatpush1.msra.mxu0 0.0
    %2492 = vmatprep.subr.mxu0 0.0
    %2493 = vmatpush1.msra.mxu0 0.0
    %2494 = vmatprep.subr.mxu0 0.0
    %2495 = vmatpush1.msra.mxu0 0.0
    %2496 = vmatprep.mubr.f32.mxu0 0.0
    %2497 = vmatmul.mubr.f32.gmra.mrb[0].mxu0 %v2430
    %v2498 = vpop.f32.mrb[0].mxu0
    %v2499 = vadd.f32 0.0, %v2498
    %v2500 = vpop.f32.mrb[0].mxu0
    %2501 = vdwg.mxu0
    %v2503 = vrot.slane %v2499, 1
    %v2504 = vrot.slane %v2499, 2
    %v2507 = vadd.f32 %v316, %v2503
    %v2508 = vadd.f32 %v321, %v2504
    %v2509 = vmul.f32 %v2507, 0.5
    %v2510 = vmul.f32 %v2508, 0.5
    %v2511 = vtanh.pop %v2509
    %v2512 = vtanh.pop %v2510
    %v2513 = vmul.f32 %v2511, 0.5
    %v2514 = vmul.f32 %v2512, 0.5
    %v2515 = vadd.f32 %v2513, 0.5
    %v2516 = vadd.f32 %v2514, 0.5
    %2517 = vmatprep.subr.mxu0 0.0
    %2518 = vmatpush1.msra.mxu0 %v500
    %2519 = vmatprep.subr.mxu0 0.0
    %2520 = vmatpush1.msra.mxu0 %v501
    %2521 = vmatprep.subr.mxu0 0.0
    %2522 = vmatpush1.msra.mxu0 %v502
    %2523 = vmatprep.subr.mxu0 0.0
    %2524 = vmatpush1.msra.mxu0 %v503
    %2525 = vmatprep.subr.mxu0 0.0
    %2526 = vmatpush1.msra.mxu0 0.0
    %2527 = vmatprep.subr.mxu0 0.0
    %2528 = vmatpush1.msra.mxu0 0.0
    %2529 = vmatprep.subr.mxu0 0.0
    %2530 = vmatpush1.msra.mxu0 0.0
    %2531 = vmatprep.subr.mxu0 0.0
    %2532 = vmatpush1.msra.mxu0 0.0
    %2533 = vmatprep.subr.mxu0 0.0
    %2534 = vmatpush1.msra.mxu0 0.0
    %2535 = vmatprep.subr.mxu0 0.0
    %2536 = vmatpush1.msra.mxu0 0.0
    %2537 = vmatprep.subr.mxu0 0.0
    %2538 = vmatpush1.msra.mxu0 0.0
    %2539 = vmatprep.subr.mxu0 0.0
    %2540 = vmatpush1.msra.mxu0 0.0
    %2541 = vmatprep.subr.mxu0 0.0
    %2542 = vmatpush1.msra.mxu0 0.0
    %2543 = vmatprep.subr.mxu0 0.0
    %2544 = vmatpush1.msra.mxu0 0.0
    %2545 = vmatprep.subr.mxu0 0.0
    %2546 = vmatpush1.msra.mxu0 0.0
    %2547 = vmatprep.subr.mxu0 0.0
    %2548 = vmatpush1.msra.mxu0 0.0
    %2549 = vmatprep.subr.mxu0 0.0
    %2550 = vmatpush1.msra.mxu0 0.0
    %2551 = vmatprep.subr.mxu0 0.0
    %2552 = vmatpush1.msra.mxu0 0.0
    %2553 = vmatprep.subr.mxu0 0.0
    %2554 = vmatpush1.msra.mxu0 0.0
    %2555 = vmatprep.subr.mxu0 0.0
    %2556 = vmatpush1.msra.mxu0 0.0
    %2557 = vmatprep.subr.mxu0 0.0
    %2558 = vmatpush1.msra.mxu0 0.0
    %2559 = vmatprep.subr.mxu0 0.0
    %2560 = vmatpush1.msra.mxu0 0.0
    %2561 = vmatprep.subr.mxu0 0.0
    %2562 = vmatpush1.msra.mxu0 0.0
    %2563 = vmatprep.subr.mxu0 0.0
    %2564 = vmatpush1.msra.mxu0 0.0
    %2565 = vmatprep.subr.mxu0 0.0
    %2566 = vmatpush1.msra.mxu0 0.0
    %2567 = vmatprep.subr.mxu0 0.0
    %2568 = vmatpush1.msra.mxu0 0.0
    %2569 = vmatprep.subr.mxu0 0.0
    %2570 = vmatpush1.msra.mxu0 0.0
    %2571 = vmatprep.subr.mxu0 0.0
    %2572 = vmatpush1.msra.mxu0 0.0
    %2573 = vmatprep.subr.mxu0 0.0
    %2574 = vmatpush1.msra.mxu0 0.0
    %2575 = vmatprep.subr.mxu0 0.0
    %2576 = vmatpush1.msra.mxu0 0.0
    %2577 = vmatprep.subr.mxu0 0.0
    %2578 = vmatpush1.msra.mxu0 0.0
    %2579 = vmatprep.subr.mxu0 0.0
    %2580 = vmatpush1.msra.mxu0 0.0
    %2581 = vmatprep.mubr.f32.mxu0 0.0
    %2582 = vmatmul.mubr.f32.gmra.mrb[0].mxu0 %v2430
    %v2583 = vpop.f32.mrb[0].mxu0
    %v2584 = vadd.f32 0.0, %v2583
    %v2585 = vpop.f32.mrb[0].mxu0
    %2586 = vdwg.mxu0
    %v2588 = vrot.slane %v2584, 1
    %v2589 = vrot.slane %v2584, 2
    %v2592 = vadd.f32 %v402, %v2588
    %v2593 = vadd.f32 %v407, %v2589
    %v2594 = vmul.f32 %v2592, 0.5
    %v2595 = vmul.f32 %v2593, 0.5
    %v2596 = vtanh.pop %v2594
    %v2597 = vtanh.pop %v2595
    %v2598 = vmul.f32 %v2596, 0.5
    %v2599 = vmul.f32 %v2597, 0.5
    %v2600 = vadd.f32 %v2598, 0.5
    %v2601 = vadd.f32 %v2599, 0.5
    %2602 = vmatprep.subr.mxu0 0.0
    %2603 = vmatpush1.msra.mxu0 %v504
    %2604 = vmatprep.subr.mxu0 0.0
    %2605 = vmatpush1.msra.mxu0 %v505
    %2606 = vmatprep.subr.mxu0 0.0
    %2607 = vmatpush1.msra.mxu0 %v506
    %2608 = vmatprep.subr.mxu0 0.0
    %2609 = vmatpush1.msra.mxu0 %v507
    %2610 = vmatprep.subr.mxu0 0.0
    %2611 = vmatpush1.msra.mxu0 0.0
    %2612 = vmatprep.subr.mxu0 0.0
    %2613 = vmatpush1.msra.mxu0 0.0
    %2614 = vmatprep.subr.mxu0 0.0
    %2615 = vmatpush1.msra.mxu0 0.0
    %2616 = vmatprep.subr.mxu0 0.0
    %2617 = vmatpush1.msra.mxu0 0.0
    %2618 = vmatprep.subr.mxu0 0.0
    %2619 = vmatpush1.msra.mxu0 0.0
    %2620 = vmatprep.subr.mxu0 0.0
    %2621 = vmatpush1.msra.mxu0 0.0
    %2622 = vmatprep.subr.mxu0 0.0
    %2623 = vmatpush1.msra.mxu0 0.0
    %2624 = vmatprep.subr.mxu0 0.0
    %2625 = vmatpush1.msra.mxu0 0.0
    %2626 = vmatprep.subr.mxu0 0.0
    %2627 = vmatpush1.msra.mxu0 0.0
    %2628 = vmatprep.subr.mxu0 0.0
    %2629 = vmatpush1.msra.mxu0 0.0
    %2630 = vmatprep.subr.mxu0 0.0
    %2631 = vmatpush1.msra.mxu0 0.0
    %2632 = vmatprep.subr.mxu0 0.0
    %2633 = vmatpush1.msra.mxu0 0.0
    %2634 = vmatprep.subr.mxu0 0.0
    %2635 = vmatpush1.msra.mxu0 0.0
    %2636 = vmatprep.subr.mxu0 0.0
    %2637 = vmatpush1.msra.mxu0 0.0
    %2638 = vmatprep.subr.mxu0 0.0
    %2639 = vmatpush1.msra.mxu0 0.0
    %2640 = vmatprep.subr.mxu0 0.0
    %2641 = vmatpush1.msra.mxu0 0.0
    %2642 = vmatprep.subr.mxu0 0.0
    %2643 = vmatpush1.msra.mxu0 0.0
    %2644 = vmatprep.subr.mxu0 0.0
    %2645 = vmatpush1.msra.mxu0 0.0
    %2646 = vmatprep.subr.mxu0 0.0
    %2647 = vmatpush1.msra.mxu0 0.0
    %2648 = vmatprep.subr.mxu0 0.0
    %2649 = vmatpush1.msra.mxu0 0.0
    %2650 = vmatprep.subr.mxu0 0.0
    %2651 = vmatpush1.msra.mxu0 0.0
    %2652 = vmatprep.subr.mxu0 0.0
    %2653 = vmatpush1.msra.mxu0 0.0
    %2654 = vmatprep.subr.mxu0 0.0
    %2655 = vmatpush1.msra.mxu0 0.0
    %2656 = vmatprep.subr.mxu0 0.0
    %2657 = vmatpush1.msra.mxu0 0.0
    %2658 = vmatprep.subr.mxu0 0.0
    %2659 = vmatpush1.msra.mxu0 0.0
    %2660 = vmatprep.subr.mxu0 0.0
    %2661 = vmatpush1.msra.mxu0 0.0
    %2662 = vmatprep.subr.mxu0 0.0
    %2663 = vmatpush1.msra.mxu0 0.0
    %2664 = vmatprep.subr.mxu0 0.0
    %2665 = vmatpush1.msra.mxu0 0.0
    %2666 = vmatprep.mubr.f32.mxu0 0.0
    %2667 = vmatmul.mubr.f32.gmra.mrb[0].mxu0 %v2430
    %v2668 = vpop.f32.mrb[0].mxu0
    %v2669 = vadd.f32 %v685, %v2668
    %v2670 = vpop.f32.mrb[0].mxu0
    %2671 = vdwg.mxu0
    %v2673 = vrot.slane %v2669, 1
    %v2674 = vrot.slane %v2669, 2
    %v2677 = vmul.f32 %v2515, %v2673
    %v2678 = vmul.f32 %v2516, %v2674
    %v2679 = vadd.f32 %v488, %v2677
    %v2680 = vadd.f32 %v493, %v2678
    %v2681 = vtanh.pop %v2679
    %v2682 = vtanh.pop %v2680
    %v2685 = vrot.slane %v2681, 1
    %v2686 = vrot.slane %v2682, 1
    %v2689 = vsub.f32 %v2423, %v2685
    %v2690 = vsub.f32 %v2424, %v2686
    %v2693 = vrot.slane %v2689, 7
    %v2694 = vrot.slane %v2690, 7
    %v2697 = vmul.f32 %v2600, %v2693
    %v2698 = vmul.f32 %v2601, %v2694
    %v2699 = vadd.f32 %v2681, %v2697
    %v2700 = vadd.f32 %v2682, %v2698
    %v2701 = vld [vmem:[%s13] sm:$0xff]
    %v2702 = vld [vmem:[#allocation19] sm:$0xff]
    %v2703 = vld [vmem:[%s15] sm:$0xff]
    %v2704 = vld [vmem:[%s16] sm:$0xff]
    %v2705 = vld [vmem:[%s16 + $0x8] sm:$0xff]
    %v2706 = vld [vmem:[%s16 + $0x10] sm:$0xff]
    %v2707 = vld [vmem:[%s16 + $0x18] sm:$0xff]
    %v2708 = vld [vmem:[#allocation21] sm:$0xff]
    %v2709 = vld [vmem:[#allocation21 + $0x8] sm:$0xff]
    %v2710 = vld [vmem:[#allocation21 + $0x10] sm:$0xff]
    %v2711 = vld [vmem:[#allocation21 + $0x18] sm:$0xff]
    %v2712 = vld [vmem:[#allocation22] sm:$0xff]
    %v2713 = vld [vmem:[#allocation22 + $0x8] sm:$0xff]
    %v2714 = vld [vmem:[#allocation22 + $0x10] sm:$0xff]
    %v2715 = vld [vmem:[#allocation22 + $0x18] sm:$0xff]
    %v2716 = vld [vmem:[%s19] sm:$0x1]
    %v2717 = vld [vmem:[%s20] sm:$0x1]
    %v2718 = vld [vmem:[%s21] sm:$0x1]
    %v2719 = vld [vmem:[%s22] sm:$0x1]
    %v2720 = vld [vmem:[%s23] sm:$0xff]
    %v2721 = vld [vmem:[%s23 + $0x8] sm:$0xff]
    %v2722 = vld [vmem:[%s23 + $0x10] sm:$0xff]
    %v2723 = vld [vmem:[%s23 + $0x18] sm:$0xff]
    %v2724 = vld [vmem:[%s24] sm:$0x1]
    %v2725 = vld [vmem:[#allocation4] sm:$0x3]
    %v2728 = vrot.slane %v2699, 7
    %v2729 = vrot.slane %v2700, 6
    %v2730 = vsel %vm776, %v2729, %v2728
    %v2731 = vsel %vm509, %v2730, 0
    %2733 = vmatprep.subr.mxu0 0.0
    %2734 = vmatpush1.msra.mxu0 %v2704
    %2735 = vmatprep.subr.mxu0 0.0
    %2736 = vmatpush1.msra.mxu0 %v2705
    %2737 = vmatprep.subr.mxu0 0.0
    %2738 = vmatpush1.msra.mxu0 %v2706
    %2739 = vmatprep.subr.mxu0 0.0
    %2740 = vmatpush1.msra.mxu0 %v2707
    %2741 = vmatprep.subr.mxu0 0.0
    %2742 = vmatpush1.msra.mxu0 0.0
    %2743 = vmatprep.subr.mxu0 0.0
    %2744 = vmatpush1.msra.mxu0 0.0
    %2745 = vmatprep.subr.mxu0 0.0
    %2746 = vmatpush1.msra.mxu0 0.0
    %2747 = vmatprep.subr.mxu0 0.0
    %2748 = vmatpush1.msra.mxu0 0.0
    %2749 = vmatprep.subr.mxu0 0.0
    %2750 = vmatpush1.msra.mxu0 0.0
    %2751 = vmatprep.subr.mxu0 0.0
    %2752 = vmatpush1.msra.mxu0 0.0
    %2753 = vmatprep.subr.mxu0 0.0
    %2754 = vmatpush1.msra.mxu0 0.0
    %2755 = vmatprep.subr.mxu0 0.0
    %2756 = vmatpush1.msra.mxu0 0.0
    %2757 = vmatprep.subr.mxu0 0.0
    %2758 = vmatpush1.msra.mxu0 0.0
    %2759 = vmatprep.subr.mxu0 0.0
    %2760 = vmatpush1.msra.mxu0 0.0
    %2761 = vmatprep.subr.mxu0 0.0
    %2762 = vmatpush1.msra.mxu0 0.0
    %2763 = vmatprep.subr.mxu0 0.0
    %2764 = vmatpush1.msra.mxu0 0.0
    %2765 = vmatprep.subr.mxu0 0.0
    %2766 = vmatpush1.msra.mxu0 0.0
    %2767 = vmatprep.subr.mxu0 0.0
    %2768 = vmatpush1.msra.mxu0 0.0
    %2769 = vmatprep.subr.mxu0 0.0
    %2770 = vmatpush1.msra.mxu0 0.0
    %2771 = vmatprep.subr.mxu0 0.0
    %2772 = vmatpush1.msra.mxu0 0.0
    %2773 = vmatprep.subr.mxu0 0.0
    %2774 = vmatpush1.msra.mxu0 0.0
    %2775 = vmatprep.subr.mxu0 0.0
    %2776 = vmatpush1.msra.mxu0 0.0
    %2777 = vmatprep.subr.mxu0 0.0
    %2778 = vmatpush1.msra.mxu0 0.0
    %2779 = vmatprep.subr.mxu0 0.0
    %2780 = vmatpush1.msra.mxu0 0.0
    %2781 = vmatprep.subr.mxu0 0.0
    %2782 = vmatpush1.msra.mxu0 0.0
    %2783 = vmatprep.subr.mxu0 0.0
    %2784 = vmatpush1.msra.mxu0 0.0
    %2785 = vmatprep.subr.mxu0 0.0
    %2786 = vmatpush1.msra.mxu0 0.0
    %2787 = vmatprep.subr.mxu0 0.0
    %2788 = vmatpush1.msra.mxu0 0.0
    %2789 = vmatprep.subr.mxu0 0.0
    %2790 = vmatpush1.msra.mxu0 0.0
    %2791 = vmatprep.subr.mxu0 0.0
    %2792 = vmatpush1.msra.mxu0 0.0
    %2793 = vmatprep.subr.mxu0 0.0
    %2794 = vmatpush1.msra.mxu0 0.0
    %2795 = vmatprep.subr.mxu0 0.0
    %2796 = vmatpush1.msra.mxu0 0.0
    %2797 = vmatprep.mubr.f32.mxu0 0.0
    %2798 = vmatmul.mubr.f32.gmra.mrb[0].mxu0 %v2731
    %v2799 = vpop.f32.mrb[0].mxu0
    %v2800 = vadd.f32 0.0, %v2799
    %v2801 = vpop.f32.mrb[0].mxu0
    %2802 = vdwg.mxu0
    %2803 = vset.pattern.permute.xlu0 0
    %2804 = vperm.xlu0 %2803, %v228
    %v2805 = vpop.permute.xlu0 %2804
    %2806 = vset.pattern.permute.xlu0 0
    %2807 = vperm.xlu0 %2806, %v229
    %v2808 = vpop.permute.xlu0 %2807
    %v2809 = vlaneseq
    %v2810 = vand.u32 %v2809, 127
    %v2811 = vlaneseq
    %v2812 = vshrl.u32 %v2811, 7
    %v2813 = vsub.s32 %v2810, %v2812
    %v2814 = vrot.slane %v2805, %v2813
    %v2815 = vlaneseq
    %v2816 = vshrl.u32 %v2815, 7
    %v2817 = vsub.s32 %v2810, %v2816
    %v2818 = vrot.slane %v2808, %v2817
    %v2819 = vsel %vm776, %v2818, %v2814
    %vm2820 = vcmask 64512
    %v2821 = vsel %vm2820, %v2819, 0
    %2823 = vmatprep.subr.mxu0 0.0
    %2824 = vmatpush1.msra.mxu0 %v2701
    %2825 = vmatprep.subr.mxu0 0.0
    %2826 = vmatpush1.msra.mxu0 0.0
    %2827 = vmatprep.subr.mxu0 0.0
    %2828 = vmatpush1.msra.mxu0 0.0
    %2829 = vmatprep.subr.mxu0 0.0
    %2830 = vmatpush1.msra.mxu0 0.0
    %2831 = vmatprep.subr.mxu0 0.0
    %2832 = vmatpush1.msra.mxu0 0.0
    %2833 = vmatprep.subr.mxu0 0.0
    %2834 = vmatpush1.msra.mxu0 0.0
    %2835 = vmatprep.subr.mxu0 0.0
    %2836 = vmatpush1.msra.mxu0 0.0
    %2837 = vmatprep.subr.mxu0 0.0
    %2838 = vmatpush1.msra.mxu0 0.0
    %2839 = vmatprep.subr.mxu0 0.0
    %2840 = vmatpush1.msra.mxu0 0.0
    %2841 = vmatprep.subr.mxu0 0.0
    %2842 = vmatpush1.msra.mxu0 0.0
    %2843 = vmatprep.subr.mxu0 0.0
    %2844 = vmatpush1.msra.mxu0 0.0
    %2845 = vmatprep.subr.mxu0 0.0
    %2846 = vmatpush1.msra.mxu0 0.0
    %2847 = vmatprep.subr.mxu0 0.0
    %2848 = vmatpush1.msra.mxu0 0.0
    %2849 = vmatprep.subr.mxu0 0.0
    %2850 = vmatpush1.msra.mxu0 0.0
    %2851 = vmatprep.subr.mxu0 0.0
    %2852 = vmatpush1.msra.mxu0 0.0
    %2853 = vmatprep.subr.mxu0 0.0
    %2854 = vmatpush1.msra.mxu0 0.0
    %2855 = vmatprep.subr.mxu0 0.0
    %2856 = vmatpush1.msra.mxu0 0.0
    %2857 = vmatprep.subr.mxu0 0.0
    %2858 = vmatpush1.msra.mxu0 0.0
    %2859 = vmatprep.subr.mxu0 0.0
    %2860 = vmatpush1.msra.mxu0 0.0
    %2861 = vmatprep.subr.mxu0 0.0
    %2862 = vmatpush1.msra.mxu0 0.0
    %2863 = vmatprep.subr.mxu0 0.0
    %2864 = vmatpush1.msra.mxu0 0.0
    %2865 = vmatprep.subr.mxu0 0.0
    %2866 = vmatpush1.msra.mxu0 0.0
    %2867 = vmatprep.subr.mxu0 0.0
    %2868 = vmatpush1.msra.mxu0 0.0
    %2869 = vmatprep.subr.mxu0 0.0
    %2870 = vmatpush1.msra.mxu0 0.0
    %2871 = vmatprep.subr.mxu0 0.0
    %2872 = vmatpush1.msra.mxu0 0.0
    %2873 = vmatprep.subr.mxu0 0.0
    %2874 = vmatpush1.msra.mxu0 0.0
    %2875 = vmatprep.subr.mxu0 0.0
    %2876 = vmatpush1.msra.mxu0 0.0
    %2877 = vmatprep.subr.mxu0 0.0
    %2878 = vmatpush1.msra.mxu0 0.0
    %2879 = vmatprep.subr.mxu0 0.0
    %2880 = vmatpush1.msra.mxu0 0.0
    %2881 = vmatprep.subr.mxu0 0.0
    %2882 = vmatpush1.msra.mxu0 0.0
    %2883 = vmatprep.subr.mxu0 0.0
    %2884 = vmatpush1.msra.mxu0 0.0
    %2885 = vmatprep.subr.mxu0 0.0
    %2886 = vmatpush1.msra.mxu0 0.0
    %2887 = vmatprep.mubr.f32.mxu0 0.0
    %2888 = vmatmul.mubr.f32.gmra.mrb[0].mxu0 %v2821
    %v2889 = vpop.f32.mrb[0].mxu0
    %v2890 = vadd.f32 %v2800, %v2889
    %v2891 = vpop.f32.mrb[0].mxu0
    %2892 = vdwg.mxu0
    %v2894 = vlaneseq
    %v2895 = vshrl.u32 %v2894, 7
    %v2896 = vsub.s32 0, %v2895
    %v2897 = vrot.slane %v2716, %v2896
    %v2899 = vadd.f32 %v2890, %v2897
    %v2900 = vmul.f32 %v2899, 0.5
    %v2901 = vtanh.pop %v2900
    %v2902 = vmul.f32 %v2901, 0.5
    %v2903 = vadd.f32 %v2902, 0.5
    %2904 = vmatprep.subr.mxu0 0.0
    %2905 = vmatpush1.msra.mxu0 %v2708
    %2906 = vmatprep.subr.mxu0 0.0
    %2907 = vmatpush1.msra.mxu0 %v2709
    %2908 = vmatprep.subr.mxu0 0.0
    %2909 = vmatpush1.msra.mxu0 %v2710
    %2910 = vmatprep.subr.mxu0 0.0
    %2911 = vmatpush1.msra.mxu0 %v2711
    %2912 = vmatprep.subr.mxu0 0.0
    %2913 = vmatpush1.msra.mxu0 0.0
    %2914 = vmatprep.subr.mxu0 0.0
    %2915 = vmatpush1.msra.mxu0 0.0
    %2916 = vmatprep.subr.mxu0 0.0
    %2917 = vmatpush1.msra.mxu0 0.0
    %2918 = vmatprep.subr.mxu0 0.0
    %2919 = vmatpush1.msra.mxu0 0.0
    %2920 = vmatprep.subr.mxu0 0.0
    %2921 = vmatpush1.msra.mxu0 0.0
    %2922 = vmatprep.subr.mxu0 0.0
    %2923 = vmatpush1.msra.mxu0 0.0
    %2924 = vmatprep.subr.mxu0 0.0
    %2925 = vmatpush1.msra.mxu0 0.0
    %2926 = vmatprep.subr.mxu0 0.0
    %2927 = vmatpush1.msra.mxu0 0.0
    %2928 = vmatprep.subr.mxu0 0.0
    %2929 = vmatpush1.msra.mxu0 0.0
    %2930 = vmatprep.subr.mxu0 0.0
    %2931 = vmatpush1.msra.mxu0 0.0
    %2932 = vmatprep.subr.mxu0 0.0
    %2933 = vmatpush1.msra.mxu0 0.0
    %2934 = vmatprep.subr.mxu0 0.0
    %2935 = vmatpush1.msra.mxu0 0.0
    %2936 = vmatprep.subr.mxu0 0.0
    %2937 = vmatpush1.msra.mxu0 0.0
    %2938 = vmatprep.subr.mxu0 0.0
    %2939 = vmatpush1.msra.mxu0 0.0
    %2940 = vmatprep.subr.mxu0 0.0
    %2941 = vmatpush1.msra.mxu0 0.0
    %2942 = vmatprep.subr.mxu0 0.0
    %2943 = vmatpush1.msra.mxu0 0.0
    %2944 = vmatprep.subr.mxu0 0.0
    %2945 = vmatpush1.msra.mxu0 0.0
    %2946 = vmatprep.subr.mxu0 0.0
    %2947 = vmatpush1.msra.mxu0 0.0
    %2948 = vmatprep.subr.mxu0 0.0
    %2949 = vmatpush1.msra.mxu0 0.0
    %2950 = vmatprep.subr.mxu0 0.0
    %2951 = vmatpush1.msra.mxu0 0.0
    %2952 = vmatprep.subr.mxu0 0.0
    %2953 = vmatpush1.msra.mxu0 0.0
    %2954 = vmatprep.subr.mxu0 0.0
    %2955 = vmatpush1.msra.mxu0 0.0
    %2956 = vmatprep.subr.mxu0 0.0
    %2957 = vmatpush1.msra.mxu0 0.0
    %2958 = vmatprep.subr.mxu0 0.0
    %2959 = vmatpush1.msra.mxu0 0.0
    %2960 = vmatprep.subr.mxu0 0.0
    %2961 = vmatpush1.msra.mxu0 0.0
    %2962 = vmatprep.subr.mxu0 0.0
    %2963 = vmatpush1.msra.mxu0 0.0
    %2964 = vmatprep.subr.mxu0 0.0
    %2965 = vmatpush1.msra.mxu0 0.0
    %2966 = vmatprep.subr.mxu0 0.0
    %2967 = vmatpush1.msra.mxu0 0.0
    %2968 = vmatprep.mubr.f32.mxu0 0.0
    %2969 = vmatmul.mubr.f32.gmra.mrb[0].mxu0 %v2731
    %v2970 = vpop.f32.mrb[0].mxu0
    %v2971 = vadd.f32 0.0, %v2970
    %v2972 = vpop.f32.mrb[0].mxu0
    %2973 = vdwg.mxu0
    %2974 = vmatprep.subr.mxu0 0.0
    %2975 = vmatpush1.msra.mxu0 %v2702
    %2976 = vmatprep.subr.mxu0 0.0
    %2977 = vmatpush1.msra.mxu0 0.0
    %2978 = vmatprep.subr.mxu0 0.0
    %2979 = vmatpush1.msra.mxu0 0.0
    %2980 = vmatprep.subr.mxu0 0.0
    %2981 = vmatpush1.msra.mxu0 0.0
    %2982 = vmatprep.subr.mxu0 0.0
    %2983 = vmatpush1.msra.mxu0 0.0
    %2984 = vmatprep.subr.mxu0 0.0
    %2985 = vmatpush1.msra.mxu0 0.0
    %2986 = vmatprep.subr.mxu0 0.0
    %2987 = vmatpush1.msra.mxu0 0.0
    %2988 = vmatprep.subr.mxu0 0.0
    %2989 = vmatpush1.msra.mxu0 0.0
    %2990 = vmatprep.subr.mxu0 0.0
    %2991 = vmatpush1.msra.mxu0 0.0
    %2992 = vmatprep.subr.mxu0 0.0
    %2993 = vmatpush1.msra.mxu0 0.0
    %2994 = vmatprep.subr.mxu0 0.0
    %2995 = vmatpush1.msra.mxu0 0.0
    %2996 = vmatprep.subr.mxu0 0.0
    %2997 = vmatpush1.msra.mxu0 0.0
    %2998 = vmatprep.subr.mxu0 0.0
    %2999 = vmatpush1.msra.mxu0 0.0
    %3000 = vmatprep.subr.mxu0 0.0
    %3001 = vmatpush1.msra.mxu0 0.0
    %3002 = vmatprep.subr.mxu0 0.0
    %3003 = vmatpush1.msra.mxu0 0.0
    %3004 = vmatprep.subr.mxu0 0.0
    %3005 = vmatpush1.msra.mxu0 0.0
    %3006 = vmatprep.subr.mxu0 0.0
    %3007 = vmatpush1.msra.mxu0 0.0
    %3008 = vmatprep.subr.mxu0 0.0
    %3009 = vmatpush1.msra.mxu0 0.0
    %3010 = vmatprep.subr.mxu0 0.0
    %3011 = vmatpush1.msra.mxu0 0.0
    %3012 = vmatprep.subr.mxu0 0.0
    %3013 = vmatpush1.msra.mxu0 0.0
    %3014 = vmatprep.subr.mxu0 0.0
    %3015 = vmatpush1.msra.mxu0 0.0
    %3016 = vmatprep.subr.mxu0 0.0
    %3017 = vmatpush1.msra.mxu0 0.0
    %3018 = vmatprep.subr.mxu0 0.0
    %3019 = vmatpush1.msra.mxu0 0.0
    %3020 = vmatprep.subr.mxu0 0.0
    %3021 = vmatpush1.msra.mxu0 0.0
    %3022 = vmatprep.subr.mxu0 0.0
    %3023 = vmatpush1.msra.mxu0 0.0
    %3024 = vmatprep.subr.mxu0 0.0
    %3025 = vmatpush1.msra.mxu0 0.0
    %3026 = vmatprep.subr.mxu0 0.0
    %3027 = vmatpush1.msra.mxu0 0.0
    %3028 = vmatprep.subr.mxu0 0.0
    %3029 = vmatpush1.msra.mxu0 0.0
    %3030 = vmatprep.subr.mxu0 0.0
    %3031 = vmatpush1.msra.mxu0 0.0
    %3032 = vmatprep.subr.mxu0 0.0
    %3033 = vmatpush1.msra.mxu0 0.0
    %3034 = vmatprep.subr.mxu0 0.0
    %3035 = vmatpush1.msra.mxu0 0.0
    %3036 = vmatprep.subr.mxu0 0.0
    %3037 = vmatpush1.msra.mxu0 0.0
    %3038 = vmatprep.mubr.f32.mxu0 0.0
    %3039 = vmatmul.mubr.f32.gmra.mrb[0].mxu0 %v2821
    %v3040 = vpop.f32.mrb[0].mxu0
    %v3041 = vadd.f32 %v2971, %v3040
    %v3042 = vpop.f32.mrb[0].mxu0
    %3043 = vdwg.mxu0
    %v3045 = vlaneseq
    %v3046 = vshrl.u32 %v3045, 7
    %v3047 = vsub.s32 0, %v3046
    %v3048 = vrot.slane %v2717, %v3047
    %v3050 = vadd.f32 %v3041, %v3048
    %v3051 = vmul.f32 %v3050, 0.5
    %v3052 = vtanh.pop %v3051
    %v3053 = vmul.f32 %v3052, 0.5
    %v3054 = vadd.f32 %v3053, 0.5
    %v3056 = vlaneseq
    %v3057 = vshrl.u32 %v3056, 7
    %v3058 = vsub.s32 0, %v3057
    %v3059 = vrot.slane %v2718, %v3058
    %3061 = vmatprep.subr.mxu0 0.0
    %3062 = vmatpush1.msra.mxu0 %v2703
    %3063 = vmatprep.subr.mxu0 0.0
    %3064 = vmatpush1.msra.mxu0 0.0
    %3065 = vmatprep.subr.mxu0 0.0
    %3066 = vmatpush1.msra.mxu0 0.0
    %3067 = vmatprep.subr.mxu0 0.0
    %3068 = vmatpush1.msra.mxu0 0.0
    %3069 = vmatprep.subr.mxu0 0.0
    %3070 = vmatpush1.msra.mxu0 0.0
    %3071 = vmatprep.subr.mxu0 0.0
    %3072 = vmatpush1.msra.mxu0 0.0
    %3073 = vmatprep.subr.mxu0 0.0
    %3074 = vmatpush1.msra.mxu0 0.0
    %3075 = vmatprep.subr.mxu0 0.0
    %3076 = vmatpush1.msra.mxu0 0.0
    %3077 = vmatprep.subr.mxu0 0.0
    %3078 = vmatpush1.msra.mxu0 0.0
    %3079 = vmatprep.subr.mxu0 0.0
    %3080 = vmatpush1.msra.mxu0 0.0
    %3081 = vmatprep.subr.mxu0 0.0
    %3082 = vmatpush1.msra.mxu0 0.0
    %3083 = vmatprep.subr.mxu0 0.0
    %3084 = vmatpush1.msra.mxu0 0.0
    %3085 = vmatprep.subr.mxu0 0.0
    %3086 = vmatpush1.msra.mxu0 0.0
    %3087 = vmatprep.subr.mxu0 0.0
    %3088 = vmatpush1.msra.mxu0 0.0
    %3089 = vmatprep.subr.mxu0 0.0
    %3090 = vmatpush1.msra.mxu0 0.0
    %3091 = vmatprep.subr.mxu0 0.0
    %3092 = vmatpush1.msra.mxu0 0.0
    %3093 = vmatprep.subr.mxu0 0.0
    %3094 = vmatpush1.msra.mxu0 0.0
    %3095 = vmatprep.subr.mxu0 0.0
    %3096 = vmatpush1.msra.mxu0 0.0
    %3097 = vmatprep.subr.mxu0 0.0
    %3098 = vmatpush1.msra.mxu0 0.0
    %3099 = vmatprep.subr.mxu0 0.0
    %3100 = vmatpush1.msra.mxu0 0.0
    %3101 = vmatprep.subr.mxu0 0.0
    %3102 = vmatpush1.msra.mxu0 0.0
    %3103 = vmatprep.subr.mxu0 0.0
    %3104 = vmatpush1.msra.mxu0 0.0
    %3105 = vmatprep.subr.mxu0 0.0
    %3106 = vmatpush1.msra.mxu0 0.0
    %3107 = vmatprep.subr.mxu0 0.0
    %3108 = vmatpush1.msra.mxu0 0.0
    %3109 = vmatprep.subr.mxu0 0.0
    %3110 = vmatpush1.msra.mxu0 0.0
    %3111 = vmatprep.subr.mxu0 0.0
    %3112 = vmatpush1.msra.mxu0 0.0
    %3113 = vmatprep.subr.mxu0 0.0
    %3114 = vmatpush1.msra.mxu0 0.0
    %3115 = vmatprep.subr.mxu0 0.0
    %3116 = vmatpush1.msra.mxu0 0.0
    %3117 = vmatprep.subr.mxu0 0.0
    %3118 = vmatpush1.msra.mxu0 0.0
    %3119 = vmatprep.subr.mxu0 0.0
    %3120 = vmatpush1.msra.mxu0 0.0
    %3121 = vmatprep.subr.mxu0 0.0
    %3122 = vmatpush1.msra.mxu0 0.0
    %3123 = vmatprep.subr.mxu0 0.0
    %3124 = vmatpush1.msra.mxu0 0.0
    %3125 = vmatprep.mubr.f32.mxu0 0.0
    %3126 = vmatmul.mubr.f32.gmra.mrb[0].mxu0 %v2821
    %v3127 = vpop.f32.mrb[0].mxu0
    %v3128 = vadd.f32 %v3059, %v3127
    %v3129 = vpop.f32.mrb[0].mxu0
    %3130 = vdwg.mxu0
    %v3132 = vlaneseq
    %v3133 = vshrl.u32 %v3132, 7
    %v3134 = vsub.s32 0, %v3133
    %v3135 = vrot.slane %v2719, %v3134
    %3137 = vmatprep.subr.mxu0 0.0
    %3138 = vmatpush1.msra.mxu0 %v2712
    %3139 = vmatprep.subr.mxu0 0.0
    %3140 = vmatpush1.msra.mxu0 %v2713
    %3141 = vmatprep.subr.mxu0 0.0
    %3142 = vmatpush1.msra.mxu0 %v2714
    %3143 = vmatprep.subr.mxu0 0.0
    %3144 = vmatpush1.msra.mxu0 %v2715
    %3145 = vmatprep.subr.mxu0 0.0
    %3146 = vmatpush1.msra.mxu0 0.0
    %3147 = vmatprep.subr.mxu0 0.0
    %3148 = vmatpush1.msra.mxu0 0.0
    %3149 = vmatprep.subr.mxu0 0.0
    %3150 = vmatpush1.msra.mxu0 0.0
    %3151 = vmatprep.subr.mxu0 0.0
    %3152 = vmatpush1.msra.mxu0 0.0
    %3153 = vmatprep.subr.mxu0 0.0
    %3154 = vmatpush1.msra.mxu0 0.0
    %3155 = vmatprep.subr.mxu0 0.0
    %3156 = vmatpush1.msra.mxu0 0.0
    %3157 = vmatprep.subr.mxu0 0.0
    %3158 = vmatpush1.msra.mxu0 0.0
    %3159 = vmatprep.subr.mxu0 0.0
    %3160 = vmatpush1.msra.mxu0 0.0
    %3161 = vmatprep.subr.mxu0 0.0
    %3162 = vmatpush1.msra.mxu0 0.0
    %3163 = vmatprep.subr.mxu0 0.0
    %3164 = vmatpush1.msra.mxu0 0.0
    %3165 = vmatprep.subr.mxu0 0.0
    %3166 = vmatpush1.msra.mxu0 0.0
    %3167 = vmatprep.subr.mxu0 0.0
    %3168 = vmatpush1.msra.mxu0 0.0
    %3169 = vmatprep.subr.mxu0 0.0
    %3170 = vmatpush1.msra.mxu0 0.0
    %3171 = vmatprep.subr.mxu0 0.0
    %3172 = vmatpush1.msra.mxu0 0.0
    %3173 = vmatprep.subr.mxu0 0.0
    %3174 = vmatpush1.msra.mxu0 0.0
    %3175 = vmatprep.subr.mxu0 0.0
    %3176 = vmatpush1.msra.mxu0 0.0
    %3177 = vmatprep.subr.mxu0 0.0
    %3178 = vmatpush1.msra.mxu0 0.0
    %3179 = vmatprep.subr.mxu0 0.0
    %3180 = vmatpush1.msra.mxu0 0.0
    %3181 = vmatprep.subr.mxu0 0.0
    %3182 = vmatpush1.msra.mxu0 0.0
    %3183 = vmatprep.subr.mxu0 0.0
    %3184 = vmatpush1.msra.mxu0 0.0
    %3185 = vmatprep.subr.mxu0 0.0
    %3186 = vmatpush1.msra.mxu0 0.0
    %3187 = vmatprep.subr.mxu0 0.0
    %3188 = vmatpush1.msra.mxu0 0.0
    %3189 = vmatprep.subr.mxu0 0.0
    %3190 = vmatpush1.msra.mxu0 0.0
    %3191 = vmatprep.subr.mxu0 0.0
    %3192 = vmatpush1.msra.mxu0 0.0
    %3193 = vmatprep.subr.mxu0 0.0
    %3194 = vmatpush1.msra.mxu0 0.0
    %3195 = vmatprep.subr.mxu0 0.0
    %3196 = vmatpush1.msra.mxu0 0.0
    %3197 = vmatprep.subr.mxu0 0.0
    %3198 = vmatpush1.msra.mxu0 0.0
    %3199 = vmatprep.subr.mxu0 0.0
    %3200 = vmatpush1.msra.mxu0 0.0
    %3201 = vmatprep.mubr.f32.mxu0 0.0
    %3202 = vmatmul.mubr.f32.gmra.mrb[0].mxu0 %v2731
    %v3203 = vpop.f32.mrb[0].mxu0
    %v3204 = vadd.f32 %v3135, %v3203
    %v3205 = vpop.f32.mrb[0].mxu0
    %3206 = vdwg.mxu0
    %v3207 = vmul.f32 %v2903, %v3204
    %v3208 = vadd.f32 %v3128, %v3207
    %v3209 = vtanh.pop %v3208
    %v3211 = vrot.slane %v3209, 1
    %v3212 = vrot.slane %v3209, 2
    %v3215 = vsub.f32 %v2699, %v3211
    %v3216 = vsub.f32 %v2700, %v3212
    %v3219 = vrot.slane %v3215, 7
    %v3220 = vrot.slane %v3216, 6
    %v3221 = vsel %vm776, %v3220, %v3219
    %v3223 = vmul.f32 %v3054, %v3221
    %v3224 = vadd.f32 %v3209, %v3223
    %v3226 = vlaneseq
    %v3227 = vshrl.u32 %v3226, 7
    %v3228 = vsub.s32 0, %v3227
    %v3229 = vrot.slane %v2724, %v3228
    %v3232 = vsel %vm509, %v3224, 0
    %3234 = vmatprep.subr.mxu0 0.0
    %3235 = vmatpush1.msra.mxu0 %v2720
    %3236 = vmatprep.subr.mxu0 0.0
    %3237 = vmatpush1.msra.mxu0 %v2721
    %3238 = vmatprep.subr.mxu0 0.0
    %3239 = vmatpush1.msra.mxu0 %v2722
    %3240 = vmatprep.subr.mxu0 0.0
    %3241 = vmatpush1.msra.mxu0 %v2723
    %3242 = vmatprep.subr.mxu0 0.0
    %3243 = vmatpush1.msra.mxu0 0.0
    %3244 = vmatprep.subr.mxu0 0.0
    %3245 = vmatpush1.msra.mxu0 0.0
    %3246 = vmatprep.subr.mxu0 0.0
    %3247 = vmatpush1.msra.mxu0 0.0
    %3248 = vmatprep.subr.mxu0 0.0
    %3249 = vmatpush1.msra.mxu0 0.0
    %3250 = vmatprep.subr.mxu0 0.0
    %3251 = vmatpush1.msra.mxu0 0.0
    %3252 = vmatprep.subr.mxu0 0.0
    %3253 = vmatpush1.msra.mxu0 0.0
    %3254 = vmatprep.subr.mxu0 0.0
    %3255 = vmatpush1.msra.mxu0 0.0
    %3256 = vmatprep.subr.mxu0 0.0
    %3257 = vmatpush1.msra.mxu0 0.0
    %3258 = vmatprep.subr.mxu0 0.0
    %3259 = vmatpush1.msra.mxu0 0.0
    %3260 = vmatprep.subr.mxu0 0.0
    %3261 = vmatpush1.msra.mxu0 0.0
    %3262 = vmatprep.subr.mxu0 0.0
    %3263 = vmatpush1.msra.mxu0 0.0
    %3264 = vmatprep.subr.mxu0 0.0
    %3265 = vmatpush1.msra.mxu0 0.0
    %3266 = vmatprep.subr.mxu0 0.0
    %3267 = vmatpush1.msra.mxu0 0.0
    %3268 = vmatprep.subr.mxu0 0.0
    %3269 = vmatpush1.msra.mxu0 0.0
    %3270 = vmatprep.subr.mxu0 0.0
    %3271 = vmatpush1.msra.mxu0 0.0
    %3272 = vmatprep.subr.mxu0 0.0
    %3273 = vmatpush1.msra.mxu0 0.0
    %3274 = vmatprep.subr.mxu0 0.0
    %3275 = vmatpush1.msra.mxu0 0.0
    %3276 = vmatprep.subr.mxu0 0.0
    %3277 = vmatpush1.msra.mxu0 0.0
    %3278 = vmatprep.subr.mxu0 0.0
    %3279 = vmatpush1.msra.mxu0 0.0
    %3280 = vmatprep.subr.mxu0 0.0
    %3281 = vmatpush1.msra.mxu0 0.0
    %3282 = vmatprep.subr.mxu0 0.0
    %3283 = vmatpush1.msra.mxu0 0.0
    %3284 = vmatprep.subr.mxu0 0.0
    %3285 = vmatpush1.msra.mxu0 0.0
    %3286 = vmatprep.subr.mxu0 0.0
    %3287 = vmatpush1.msra.mxu0 0.0
    %3288 = vmatprep.subr.mxu0 0.0
    %3289 = vmatpush1.msra.mxu0 0.0
    %3290 = vmatprep.subr.mxu0 0.0
    %3291 = vmatpush1.msra.mxu0 0.0
    %3292 = vmatprep.subr.mxu0 0.0
    %3293 = vmatpush1.msra.mxu0 0.0
    %3294 = vmatprep.subr.mxu0 0.0
    %3295 = vmatpush1.msra.mxu0 0.0
    %3296 = vmatprep.subr.mxu0 0.0
    %3297 = vmatpush1.msra.mxu0 0.0
    %3298 = vmatprep.mubr.f32.mxu0 0.0
    %3299 = vmatmul.mubr.f32.gmra.mrb[0].mxu0 %v3232
    %v3300 = vpop.f32.mrb[0].mxu0
    %v3301 = vadd.f32 %v3229, %v3300
    %v3302 = vpop.f32.mrb[0].mxu0
    %3303 = vdwg.mxu0
    %v3304 = vmax.f32 %v3301, 0.0
    %s3305 = sld [smem:[#allocation3]]
    %p3306 = scmp.gt.s32.totalorder %s3305, 0
    %s3307 = scalar_select %p3306, 1, 0
    %s3308 = scvt.s32.f32 %s3307
    %v3309 = vstv %s3308
    %v3310 = vmul.f32 %v3309, %v2725
    %s3311 = ssub.f32 1.0, %s3308
    %v3312 = vstv %s3311
    %v3313 = vmul.f32 %v3312, %v3304
    %v3314 = vadd.f32 %v3310, %v3313
    %v3315 = vadd.s32 %v2810, 2
    %v3316 = vlaneseq
    %v3317 = vshrl.u32 %v3316, 7
    %v3318 = vsub.s32 %v3315, %v3317
    %v3319 = vrot.slane %v2805, %v3318
    %v3320 = vlaneseq
    %v3321 = vshrl.u32 %v3320, 7
    %v3322 = vsub.s32 %v3315, %v3321
    %v3323 = vrot.slane %v2808, %v3322
    %vm3324 = vcmask 1043459
    %v3325 = vsel %vm3324, %v3323, %v3319
    %v3328 = vrot.slane %v3314, 6
    %3329 = vrot.lane.b32.xlu0 %v3328, 6
    %v3330 = vpop.permute.xlu0 %3329
    %vm3332 = vcmask 48128
    %v3333 = vsel %vm3332, %v3325, %v3330
    %3334 = vmatprep.subr.mxu0 0.0
    %3335 = vmatpush1.msra.mxu0 %v2704
    %3336 = vmatprep.subr.mxu0 0.0
    %3337 = vmatpush1.msra.mxu0 %v2705
    %3338 = vmatprep.subr.mxu0 0.0
    %3339 = vmatpush1.msra.mxu0 %v2706
    %3340 = vmatprep.subr.mxu0 0.0
    %3341 = vmatpush1.msra.mxu0 %v2707
    %3342 = vmatprep.subr.mxu0 0.0
    %3343 = vmatpush1.msra.mxu0 0.0
    %3344 = vmatprep.subr.mxu0 0.0
    %3345 = vmatpush1.msra.mxu0 0.0
    %3346 = vmatprep.subr.mxu0 0.0
    %3347 = vmatpush1.msra.mxu0 0.0
    %3348 = vmatprep.subr.mxu0 0.0
    %3349 = vmatpush1.msra.mxu0 0.0
    %3350 = vmatprep.subr.mxu0 0.0
    %3351 = vmatpush1.msra.mxu0 0.0
    %3352 = vmatprep.subr.mxu0 0.0
    %3353 = vmatpush1.msra.mxu0 0.0
    %3354 = vmatprep.subr.mxu0 0.0
    %3355 = vmatpush1.msra.mxu0 0.0
    %3356 = vmatprep.subr.mxu0 0.0
    %3357 = vmatpush1.msra.mxu0 0.0
    %3358 = vmatprep.subr.mxu0 0.0
    %3359 = vmatpush1.msra.mxu0 0.0
    %3360 = vmatprep.subr.mxu0 0.0
    %3361 = vmatpush1.msra.mxu0 0.0
    %3362 = vmatprep.subr.mxu0 0.0
    %3363 = vmatpush1.msra.mxu0 0.0
    %3364 = vmatprep.subr.mxu0 0.0
    %3365 = vmatpush1.msra.mxu0 0.0
    %3366 = vmatprep.subr.mxu0 0.0
    %3367 = vmatpush1.msra.mxu0 0.0
    %3368 = vmatprep.subr.mxu0 0.0
    %3369 = vmatpush1.msra.mxu0 0.0
    %3370 = vmatprep.subr.mxu0 0.0
    %3371 = vmatpush1.msra.mxu0 0.0
    %3372 = vmatprep.subr.mxu0 0.0
    %3373 = vmatpush1.msra.mxu0 0.0
    %3374 = vmatprep.subr.mxu0 0.0
    %3375 = vmatpush1.msra.mxu0 0.0
    %3376 = vmatprep.subr.mxu0 0.0
    %3377 = vmatpush1.msra.mxu0 0.0
    %3378 = vmatprep.subr.mxu0 0.0
    %3379 = vmatpush1.msra.mxu0 0.0
    %3380 = vmatprep.subr.mxu0 0.0
    %3381 = vmatpush1.msra.mxu0 0.0
    %3382 = vmatprep.subr.mxu0 0.0
    %3383 = vmatpush1.msra.mxu0 0.0
    %3384 = vmatprep.subr.mxu0 0.0
    %3385 = vmatpush1.msra.mxu0 0.0
    %3386 = vmatprep.subr.mxu0 0.0
    %3387 = vmatpush1.msra.mxu0 0.0
    %3388 = vmatprep.subr.mxu0 0.0
    %3389 = vmatpush1.msra.mxu0 0.0
    %3390 = vmatprep.subr.mxu0 0.0
    %3391 = vmatpush1.msra.mxu0 0.0
    %3392 = vmatprep.subr.mxu0 0.0
    %3393 = vmatpush1.msra.mxu0 0.0
    %3394 = vmatprep.subr.mxu0 0.0
    %3395 = vmatpush1.msra.mxu0 0.0
    %3396 = vmatprep.subr.mxu0 0.0
    %3397 = vmatpush1.msra.mxu0 0.0
    %3398 = vmatprep.mubr.f32.mxu0 0.0
    %3399 = vmatmul.mubr.f32.gmra.mrb[0].mxu0 %v3232
    %v3400 = vpop.f32.mrb[0].mxu0
    %v3401 = vadd.f32 0.0, %v3400
    %v3402 = vpop.f32.mrb[0].mxu0
    %3403 = vdwg.mxu0
    %v3405 = vrot.slane %v3333, 2
    %v3406 = vsel %vm2820, %v3405, 0
    %3408 = vmatprep.subr.mxu0 0.0
    %3409 = vmatpush1.msra.mxu0 %v2701
    %3410 = vmatprep.subr.mxu0 0.0
    %3411 = vmatpush1.msra.mxu0 0.0
    %3412 = vmatprep.subr.mxu0 0.0
    %3413 = vmatpush1.msra.mxu0 0.0
    %3414 = vmatprep.subr.mxu0 0.0
    %3415 = vmatpush1.msra.mxu0 0.0
    %3416 = vmatprep.subr.mxu0 0.0
    %3417 = vmatpush1.msra.mxu0 0.0
    %3418 = vmatprep.subr.mxu0 0.0
    %3419 = vmatpush1.msra.mxu0 0.0
    %3420 = vmatprep.subr.mxu0 0.0
    %3421 = vmatpush1.msra.mxu0 0.0
    %3422 = vmatprep.subr.mxu0 0.0
    %3423 = vmatpush1.msra.mxu0 0.0
    %3424 = vmatprep.subr.mxu0 0.0
    %3425 = vmatpush1.msra.mxu0 0.0
    %3426 = vmatprep.subr.mxu0 0.0
    %3427 = vmatpush1.msra.mxu0 0.0
    %3428 = vmatprep.subr.mxu0 0.0
    %3429 = vmatpush1.msra.mxu0 0.0
    %3430 = vmatprep.subr.mxu0 0.0
    %3431 = vmatpush1.msra.mxu0 0.0
    %3432 = vmatprep.subr.mxu0 0.0
    %3433 = vmatpush1.msra.mxu0 0.0
    %3434 = vmatprep.subr.mxu0 0.0
    %3435 = vmatpush1.msra.mxu0 0.0
    %3436 = vmatprep.subr.mxu0 0.0
    %3437 = vmatpush1.msra.mxu0 0.0
    %3438 = vmatprep.subr.mxu0 0.0
    %3439 = vmatpush1.msra.mxu0 0.0
    %3440 = vmatprep.subr.mxu0 0.0
    %3441 = vmatpush1.msra.mxu0 0.0
    %3442 = vmatprep.subr.mxu0 0.0
    %3443 = vmatpush1.msra.mxu0 0.0
    %3444 = vmatprep.subr.mxu0 0.0
    %3445 = vmatpush1.msra.mxu0 0.0
    %3446 = vmatprep.subr.mxu0 0.0
    %3447 = vmatpush1.msra.mxu0 0.0
    %3448 = vmatprep.subr.mxu0 0.0
    %3449 = vmatpush1.msra.mxu0 0.0
    %3450 = vmatprep.subr.mxu0 0.0
    %3451 = vmatpush1.msra.mxu0 0.0
    %3452 = vmatprep.subr.mxu0 0.0
    %3453 = vmatpush1.msra.mxu0 0.0
    %3454 = vmatprep.subr.mxu0 0.0
    %3455 = vmatpush1.msra.mxu0 0.0
    %3456 = vmatprep.subr.mxu0 0.0
    %3457 = vmatpush1.msra.mxu0 0.0
    %3458 = vmatprep.subr.mxu0 0.0
    %3459 = vmatpush1.msra.mxu0 0.0
    %3460 = vmatprep.subr.mxu0 0.0
    %3461 = vmatpush1.msra.mxu0 0.0
    %3462 = vmatprep.subr.mxu0 0.0
    %3463 = vmatpush1.msra.mxu0 0.0
    %3464 = vmatprep.subr.mxu0 0.0
    %3465 = vmatpush1.msra.mxu0 0.0
    %3466 = vmatprep.subr.mxu0 0.0
    %3467 = vmatpush1.msra.mxu0 0.0
    %3468 = vmatprep.subr.mxu0 0.0
    %3469 = vmatpush1.msra.mxu0 0.0
    %3470 = vmatprep.subr.mxu0 0.0
    %3471 = vmatpush1.msra.mxu0 0.0
    %3472 = vmatprep.mubr.f32.mxu0 0.0
    %3473 = vmatmul.mubr.f32.gmra.mrb[0].mxu0 %v3406
    %v3474 = vpop.f32.mrb[0].mxu0
    %v3475 = vadd.f32 %v3401, %v3474
    %v3476 = vpop.f32.mrb[0].mxu0
    %3477 = vdwg.mxu0
    %v3478 = vadd.f32 %v3475, %v2897
    %v3479 = vmul.f32 %v3478, 0.5
    %v3480 = vtanh.pop %v3479
    %v3481 = vmul.f32 %v3480, 0.5
    %v3482 = vadd.f32 %v3481, 0.5
    %3483 = vmatprep.subr.mxu0 0.0
    %3484 = vmatpush1.msra.mxu0 %v2708
    %3485 = vmatprep.subr.mxu0 0.0
    %3486 = vmatpush1.msra.mxu0 %v2709
    %3487 = vmatprep.subr.mxu0 0.0
    %3488 = vmatpush1.msra.mxu0 %v2710
    %3489 = vmatprep.subr.mxu0 0.0
    %3490 = vmatpush1.msra.mxu0 %v2711
    %3491 = vmatprep.subr.mxu0 0.0
    %3492 = vmatpush1.msra.mxu0 0.0
    %3493 = vmatprep.subr.mxu0 0.0
    %3494 = vmatpush1.msra.mxu0 0.0
    %3495 = vmatprep.subr.mxu0 0.0
    %3496 = vmatpush1.msra.mxu0 0.0
    %3497 = vmatprep.subr.mxu0 0.0
    %3498 = vmatpush1.msra.mxu0 0.0
    %3499 = vmatprep.subr.mxu0 0.0
    %3500 = vmatpush1.msra.mxu0 0.0
    %3501 = vmatprep.subr.mxu0 0.0
    %3502 = vmatpush1.msra.mxu0 0.0
    %3503 = vmatprep.subr.mxu0 0.0
    %3504 = vmatpush1.msra.mxu0 0.0
    %3505 = vmatprep.subr.mxu0 0.0
    %3506 = vmatpush1.msra.mxu0 0.0
    %3507 = vmatprep.subr.mxu0 0.0
    %3508 = vmatpush1.msra.mxu0 0.0
    %3509 = vmatprep.subr.mxu0 0.0
    %3510 = vmatpush1.msra.mxu0 0.0
    %3511 = vmatprep.subr.mxu0 0.0
    %3512 = vmatpush1.msra.mxu0 0.0
    %3513 = vmatprep.subr.mxu0 0.0
    %3514 = vmatpush1.msra.mxu0 0.0
    %3515 = vmatprep.subr.mxu0 0.0
    %3516 = vmatpush1.msra.mxu0 0.0
    %3517 = vmatprep.subr.mxu0 0.0
    %3518 = vmatpush1.msra.mxu0 0.0
    %3519 = vmatprep.subr.mxu0 0.0
    %3520 = vmatpush1.msra.mxu0 0.0
    %3521 = vmatprep.subr.mxu0 0.0
    %3522 = vmatpush1.msra.mxu0 0.0
    %3523 = vmatprep.subr.mxu0 0.0
    %3524 = vmatpush1.msra.mxu0 0.0
    %3525 = vmatprep.subr.mxu0 0.0
    %3526 = vmatpush1.msra.mxu0 0.0
    %3527 = vmatprep.subr.mxu0 0.0
    %3528 = vmatpush1.msra.mxu0 0.0
    %3529 = vmatprep.subr.mxu0 0.0
    %3530 = vmatpush1.msra.mxu0 0.0
    %3531 = vmatprep.subr.mxu0 0.0
    %3532 = vmatpush1.msra.mxu0 0.0
    %3533 = vmatprep.subr.mxu0 0.0
    %3534 = vmatpush1.msra.mxu0 0.0
    %3535 = vmatprep.subr.mxu0 0.0
    %3536 = vmatpush1.msra.mxu0 0.0
    %3537 = vmatprep.subr.mxu0 0.0
    %3538 = vmatpush1.msra.mxu0 0.0
    %3539 = vmatprep.subr.mxu0 0.0
    %3540 = vmatpush1.msra.mxu0 0.0
    %3541 = vmatprep.subr.mxu0 0.0
    %3542 = vmatpush1.msra.mxu0 0.0
    %3543 = vmatprep.subr.mxu0 0.0
    %3544 = vmatpush1.msra.mxu0 0.0
    %3545 = vmatprep.subr.mxu0 0.0
    %3546 = vmatpush1.msra.mxu0 0.0
    %3547 = vmatprep.mubr.f32.mxu0 0.0
    %3548 = vmatmul.mubr.f32.gmra.mrb[0].mxu0 %v3232
    %v3549 = vpop.f32.mrb[0].mxu0
    %v3550 = vadd.f32 0.0, %v3549
    %v3551 = vpop.f32.mrb[0].mxu0
    %3552 = vdwg.mxu0
    %3553 = vmatprep.subr.mxu0 0.0
    %3554 = vmatpush1.msra.mxu0 %v2702
    %3555 = vmatprep.subr.mxu0 0.0
    %3556 = vmatpush1.msra.mxu0 0.0
    %3557 = vmatprep.subr.mxu0 0.0
    %3558 = vmatpush1.msra.mxu0 0.0
    %3559 = vmatprep.subr.mxu0 0.0
    %3560 = vmatpush1.msra.mxu0 0.0
    %3561 = vmatprep.subr.mxu0 0.0
    %3562 = vmatpush1.msra.mxu0 0.0
    %3563 = vmatprep.subr.mxu0 0.0
    %3564 = vmatpush1.msra.mxu0 0.0
    %3565 = vmatprep.subr.mxu0 0.0
    %3566 = vmatpush1.msra.mxu0 0.0
    %3567 = vmatprep.subr.mxu0 0.0
    %3568 = vmatpush1.msra.mxu0 0.0
    %3569 = vmatprep.subr.mxu0 0.0
    %3570 = vmatpush1.msra.mxu0 0.0
    %3571 = vmatprep.subr.mxu0 0.0
    %3572 = vmatpush1.msra.mxu0 0.0
    %3573 = vmatprep.subr.mxu0 0.0
    %3574 = vmatpush1.msra.mxu0 0.0
    %3575 = vmatprep.subr.mxu0 0.0
    %3576 = vmatpush1.msra.mxu0 0.0
    %3577 = vmatprep.subr.mxu0 0.0
    %3578 = vmatpush1.msra.mxu0 0.0
    %3579 = vmatprep.subr.mxu0 0.0
    %3580 = vmatpush1.msra.mxu0 0.0
    %3581 = vmatprep.subr.mxu0 0.0
    %3582 = vmatpush1.msra.mxu0 0.0
    %3583 = vmatprep.subr.mxu0 0.0
    %3584 = vmatpush1.msra.mxu0 0.0
    %3585 = vmatprep.subr.mxu0 0.0
    %3586 = vmatpush1.msra.mxu0 0.0
    %3587 = vmatprep.subr.mxu0 0.0
    %3588 = vmatpush1.msra.mxu0 0.0
    %3589 = vmatprep.subr.mxu0 0.0
    %3590 = vmatpush1.msra.mxu0 0.0
    %3591 = vmatprep.subr.mxu0 0.0
    %3592 = vmatpush1.msra.mxu0 0.0
    %3593 = vmatprep.subr.mxu0 0.0
    %3594 = vmatpush1.msra.mxu0 0.0
    %3595 = vmatprep.subr.mxu0 0.0
    %3596 = vmatpush1.msra.mxu0 0.0
    %3597 = vmatprep.subr.mxu0 0.0
    %3598 = vmatpush1.msra.mxu0 0.0
    %3599 = vmatprep.subr.mxu0 0.0
    %3600 = vmatpush1.msra.mxu0 0.0
    %3601 = vmatprep.subr.mxu0 0.0
    %3602 = vmatpush1.msra.mxu0 0.0
    %3603 = vmatprep.subr.mxu0 0.0
    %3604 = vmatpush1.msra.mxu0 0.0
    %3605 = vmatprep.subr.mxu0 0.0
    %3606 = vmatpush1.msra.mxu0 0.0
    %3607 = vmatprep.subr.mxu0 0.0
    %3608 = vmatpush1.msra.mxu0 0.0
    %3609 = vmatprep.subr.mxu0 0.0
    %3610 = vmatpush1.msra.mxu0 0.0
    %3611 = vmatprep.subr.mxu0 0.0
    %3612 = vmatpush1.msra.mxu0 0.0
    %3613 = vmatprep.subr.mxu0 0.0
    %3614 = vmatpush1.msra.mxu0 0.0
    %3615 = vmatprep.subr.mxu0 0.0
    %3616 = vmatpush1.msra.mxu0 0.0
    %3617 = vmatprep.mubr.f32.mxu0 0.0
    %3618 = vmatmul.mubr.f32.gmra.mrb[0].mxu0 %v3406
    %v3619 = vpop.f32.mrb[0].mxu0
    %v3620 = vadd.f32 %v3550, %v3619
    %v3621 = vpop.f32.mrb[0].mxu0
    %3622 = vdwg.mxu0
    %v3623 = vadd.f32 %v3620, %v3048
    %v3624 = vmul.f32 %v3623, 0.5
    %v3625 = vtanh.pop %v3624
    %v3626 = vmul.f32 %v3625, 0.5
    %v3627 = vadd.f32 %v3626, 0.5
    %3628 = vmatprep.subr.mxu0 0.0
    %3629 = vmatpush1.msra.mxu0 %v2703
    %3630 = vmatprep.subr.mxu0 0.0
    %3631 = vmatpush1.msra.mxu0 0.0
    %3632 = vmatprep.subr.mxu0 0.0
    %3633 = vmatpush1.msra.mxu0 0.0
    %3634 = vmatprep.subr.mxu0 0.0
    %3635 = vmatpush1.msra.mxu0 0.0
    %3636 = vmatprep.subr.mxu0 0.0
    %3637 = vmatpush1.msra.mxu0 0.0
    %3638 = vmatprep.subr.mxu0 0.0
    %3639 = vmatpush1.msra.mxu0 0.0
    %3640 = vmatprep.subr.mxu0 0.0
    %3641 = vmatpush1.msra.mxu0 0.0
    %3642 = vmatprep.subr.mxu0 0.0
    %3643 = vmatpush1.msra.mxu0 0.0
    %3644 = vmatprep.subr.mxu0 0.0
    %3645 = vmatpush1.msra.mxu0 0.0
    %3646 = vmatprep.subr.mxu0 0.0
    %3647 = vmatpush1.msra.mxu0 0.0
    %3648 = vmatprep.subr.mxu0 0.0
    %3649 = vmatpush1.msra.mxu0 0.0
    %3650 = vmatprep.subr.mxu0 0.0
    %3651 = vmatpush1.msra.mxu0 0.0
    %3652 = vmatprep.subr.mxu0 0.0
    %3653 = vmatpush1.msra.mxu0 0.0
    %3654 = vmatprep.subr.mxu0 0.0
    %3655 = vmatpush1.msra.mxu0 0.0
    %3656 = vmatprep.subr.mxu0 0.0
    %3657 = vmatpush1.msra.mxu0 0.0
    %3658 = vmatprep.subr.mxu0 0.0
    %3659 = vmatpush1.msra.mxu0 0.0
    %3660 = vmatprep.subr.mxu0 0.0
    %3661 = vmatpush1.msra.mxu0 0.0
    %3662 = vmatprep.subr.mxu0 0.0
    %3663 = vmatpush1.msra.mxu0 0.0
    %3664 = vmatprep.subr.mxu0 0.0
    %3665 = vmatpush1.msra.mxu0 0.0
    %3666 = vmatprep.subr.mxu0 0.0
    %3667 = vmatpush1.msra.mxu0 0.0
    %3668 = vmatprep.subr.mxu0 0.0
    %3669 = vmatpush1.msra.mxu0 0.0
    %3670 = vmatprep.subr.mxu0 0.0
    %3671 = vmatpush1.msra.mxu0 0.0
    %3672 = vmatprep.subr.mxu0 0.0
    %3673 = vmatpush1.msra.mxu0 0.0
    %3674 = vmatprep.subr.mxu0 0.0
    %3675 = vmatpush1.msra.mxu0 0.0
    %3676 = vmatprep.subr.mxu0 0.0
    %3677 = vmatpush1.msra.mxu0 0.0
    %3678 = vmatprep.subr.mxu0 0.0
    %3679 = vmatpush1.msra.mxu0 0.0
    %3680 = vmatprep.subr.mxu0 0.0
    %3681 = vmatpush1.msra.mxu0 0.0
    %3682 = vmatprep.subr.mxu0 0.0
    %3683 = vmatpush1.msra.mxu0 0.0
    %3684 = vmatprep.subr.mxu0 0.0
    %3685 = vmatpush1.msra.mxu0 0.0
    %3686 = vmatprep.subr.mxu0 0.0
    %3687 = vmatpush1.msra.mxu0 0.0
    %3688 = vmatprep.subr.mxu0 0.0
    %3689 = vmatpush1.msra.mxu0 0.0
    %3690 = vmatprep.subr.mxu0 0.0
    %3691 = vmatpush1.msra.mxu0 0.0
    %3692 = vmatprep.mubr.f32.mxu0 0.0
    %3693 = vmatmul.mubr.f32.gmra.mrb[0].mxu0 %v3406
    %v3694 = vpop.f32.mrb[0].mxu0
    %v3695 = vadd.f32 %v3059, %v3694
    %v3696 = vpop.f32.mrb[0].mxu0
    %3697 = vdwg.mxu0
    %3698 = vmatprep.subr.mxu0 0.0
    %3699 = vmatpush1.msra.mxu0 %v2712
    %3700 = vmatprep.subr.mxu0 0.0
    %3701 = vmatpush1.msra.mxu0 %v2713
    %3702 = vmatprep.subr.mxu0 0.0
    %3703 = vmatpush1.msra.mxu0 %v2714
    %3704 = vmatprep.subr.mxu0 0.0
    %3705 = vmatpush1.msra.mxu0 %v2715
    %3706 = vmatprep.subr.mxu0 0.0
    %3707 = vmatpush1.msra.mxu0 0.0
    %3708 = vmatprep.subr.mxu0 0.0
    %3709 = vmatpush1.msra.mxu0 0.0
    %3710 = vmatprep.subr.mxu0 0.0
    %3711 = vmatpush1.msra.mxu0 0.0
    %3712 = vmatprep.subr.mxu0 0.0
    %3713 = vmatpush1.msra.mxu0 0.0
    %3714 = vmatprep.subr.mxu0 0.0
    %3715 = vmatpush1.msra.mxu0 0.0
    %3716 = vmatprep.subr.mxu0 0.0
    %3717 = vmatpush1.msra.mxu0 0.0
    %3718 = vmatprep.subr.mxu0 0.0
    %3719 = vmatpush1.msra.mxu0 0.0
    %3720 = vmatprep.subr.mxu0 0.0
    %3721 = vmatpush1.msra.mxu0 0.0
    %3722 = vmatprep.subr.mxu0 0.0
    %3723 = vmatpush1.msra.mxu0 0.0
    %3724 = vmatprep.subr.mxu0 0.0
    %3725 = vmatpush1.msra.mxu0 0.0
    %3726 = vmatprep.subr.mxu0 0.0
    %3727 = vmatpush1.msra.mxu0 0.0
    %3728 = vmatprep.subr.mxu0 0.0
    %3729 = vmatpush1.msra.mxu0 0.0
    %3730 = vmatprep.subr.mxu0 0.0
    %3731 = vmatpush1.msra.mxu0 0.0
    %3732 = vmatprep.subr.mxu0 0.0
    %3733 = vmatpush1.msra.mxu0 0.0
    %3734 = vmatprep.subr.mxu0 0.0
    %3735 = vmatpush1.msra.mxu0 0.0
    %3736 = vmatprep.subr.mxu0 0.0
    %3737 = vmatpush1.msra.mxu0 0.0
    %3738 = vmatprep.subr.mxu0 0.0
    %3739 = vmatpush1.msra.mxu0 0.0
    %3740 = vmatprep.subr.mxu0 0.0
    %3741 = vmatpush1.msra.mxu0 0.0
    %3742 = vmatprep.subr.mxu0 0.0
    %3743 = vmatpush1.msra.mxu0 0.0
    %3744 = vmatprep.subr.mxu0 0.0
    %3745 = vmatpush1.msra.mxu0 0.0
    %3746 = vmatprep.subr.mxu0 0.0
    %3747 = vmatpush1.msra.mxu0 0.0
    %3748 = vmatprep.subr.mxu0 0.0
    %3749 = vmatpush1.msra.mxu0 0.0
    %3750 = vmatprep.subr.mxu0 0.0
    %3751 = vmatpush1.msra.mxu0 0.0
    %3752 = vmatprep.subr.mxu0 0.0
    %3753 = vmatpush1.msra.mxu0 0.0
    %3754 = vmatprep.subr.mxu0 0.0
    %3755 = vmatpush1.msra.mxu0 0.0
    %3756 = vmatprep.subr.mxu0 0.0
    %3757 = vmatpush1.msra.mxu0 0.0
    %3758 = vmatprep.subr.mxu0 0.0
    %3759 = vmatpush1.msra.mxu0 0.0
    %3760 = vmatprep.subr.mxu0 0.0
    %3761 = vmatpush1.msra.mxu0 0.0
    %3762 = vmatprep.mubr.f32.mxu0 0.0
    %3763 = vmatmul.mubr.f32.gmra.mrb[0].mxu0 %v3232
    %v3764 = vpop.f32.mrb[0].mxu0
    %v3765 = vadd.f32 %v3135, %v3764
    %v3766 = vpop.f32.mrb[0].mxu0
    %3767 = vdwg.mxu0
    %v3768 = vmul.f32 %v3482, %v3765
    %v3769 = vadd.f32 %v3695, %v3768
    %v3770 = vtanh.pop %v3769
    %v3771 = vsub.f32 %v3224, %v3770
    %v3772 = vmul.f32 %v3627, %v3771
    %v3773 = vadd.f32 %v3770, %v3772
    %v3775 = vsel %vm509, %v3773, 0
    %3777 = vmatprep.subr.mxu0 0.0
    %3778 = vmatpush1.msra.mxu0 %v2720
    %3779 = vmatprep.subr.mxu0 0.0
    %3780 = vmatpush1.msra.mxu0 %v2721
    %3781 = vmatprep.subr.mxu0 0.0
    %3782 = vmatpush1.msra.mxu0 %v2722
    %3783 = vmatprep.subr.mxu0 0.0
    %3784 = vmatpush1.msra.mxu0 %v2723
    %3785 = vmatprep.subr.mxu0 0.0
    %3786 = vmatpush1.msra.mxu0 0.0
    %3787 = vmatprep.subr.mxu0 0.0
    %3788 = vmatpush1.msra.mxu0 0.0
    %3789 = vmatprep.subr.mxu0 0.0
    %3790 = vmatpush1.msra.mxu0 0.0
    %3791 = vmatprep.subr.mxu0 0.0
    %3792 = vmatpush1.msra.mxu0 0.0
    %3793 = vmatprep.subr.mxu0 0.0
    %3794 = vmatpush1.msra.mxu0 0.0
    %3795 = vmatprep.subr.mxu0 0.0
    %3796 = vmatpush1.msra.mxu0 0.0
    %3797 = vmatprep.subr.mxu0 0.0
    %3798 = vmatpush1.msra.mxu0 0.0
    %3799 = vmatprep.subr.mxu0 0.0
    %3800 = vmatpush1.msra.mxu0 0.0
    %3801 = vmatprep.subr.mxu0 0.0
    %3802 = vmatpush1.msra.mxu0 0.0
    %3803 = vmatprep.subr.mxu0 0.0
    %3804 = vmatpush1.msra.mxu0 0.0
    %3805 = vmatprep.subr.mxu0 0.0
    %3806 = vmatpush1.msra.mxu0 0.0
    %3807 = vmatprep.subr.mxu0 0.0
    %3808 = vmatpush1.msra.mxu0 0.0
    %3809 = vmatprep.subr.mxu0 0.0
    %3810 = vmatpush1.msra.mxu0 0.0
    %3811 = vmatprep.subr.mxu0 0.0
    %3812 = vmatpush1.msra.mxu0 0.0
    %3813 = vmatprep.subr.mxu0 0.0
    %3814 = vmatpush1.msra.mxu0 0.0
    %3815 = vmatprep.subr.mxu0 0.0
    %3816 = vmatpush1.msra.mxu0 0.0
    %3817 = vmatprep.subr.mxu0 0.0
    %3818 = vmatpush1.msra.mxu0 0.0
    %3819 = vmatprep.subr.mxu0 0.0
    %3820 = vmatpush1.msra.mxu0 0.0
    %3821 = vmatprep.subr.mxu0 0.0
    %3822 = vmatpush1.msra.mxu0 0.0
    %3823 = vmatprep.subr.mxu0 0.0
    %3824 = vmatpush1.msra.mxu0 0.0
    %3825 = vmatprep.subr.mxu0 0.0
    %3826 = vmatpush1.msra.mxu0 0.0
    %3827 = vmatprep.subr.mxu0 0.0
    %3828 = vmatpush1.msra.mxu0 0.0
    %3829 = vmatprep.subr.mxu0 0.0
    %3830 = vmatpush1.msra.mxu0 0.0
    %3831 = vmatprep.subr.mxu0 0.0
    %3832 = vmatpush1.msra.mxu0 0.0
    %3833 = vmatprep.subr.mxu0 0.0
    %3834 = vmatpush1.msra.mxu0 0.0
    %3835 = vmatprep.subr.mxu0 0.0
    %3836 = vmatpush1.msra.mxu0 0.0
    %3837 = vmatprep.subr.mxu0 0.0
    %3838 = vmatpush1.msra.mxu0 0.0
    %3839 = vmatprep.subr.mxu0 0.0
    %3840 = vmatpush1.msra.mxu0 0.0
    %3841 = vmatprep.mubr.f32.mxu0 0.0
    %3842 = vmatmul.mubr.f32.gmra.mrb[0].mxu0 %v3775
    %v3843 = vpop.f32.mrb[0].mxu0
    %v3844 = vadd.f32 %v3229, %v3843
    %v3845 = vpop.f32.mrb[0].mxu0
    %3846 = vdwg.mxu0
    %v3847 = vmax.f32 %v3844, 0.0
    %s3848 = sld [smem:[#allocation3 + $0x1]]
    %p3849 = scmp.gt.s32.totalorder %s3848, 0
    %s3850 = scalar_select %p3849, 1, 0
    %s3851 = scvt.s32.f32 %s3850
    %v3852 = vstv %s3851
    %v3853 = vmul.f32 %v3852, %v2725
    %s3854 = ssub.f32 1.0, %s3851
    %v3855 = vstv %s3854
    %v3856 = vmul.f32 %v3855, %v3847
    %3858 = vrot.lane.b32.xlu0 %v3856, 2
    %v3859 = vpop.permute.xlu0 %3858
    %v3861 = vadd.f32 %v3853, %v3859
    %3862 = vrot.lane.b32.xlu0 %v3333, 126
    %v3863 = vpop.permute.xlu0 %3862
    %v3866 = vrot.slane %v3861, 6
    %3867 = vrot.lane.b32.xlu0 %v3866, 4
    %v3868 = vpop.permute.xlu0 %3867
    %v3870 = vsel %vm3332, %v3863, %v3868
    %3871 = vmatprep.subr.mxu0 0.0
    %3872 = vmatpush1.msra.mxu0 %v2704
    %3873 = vmatprep.subr.mxu0 0.0
    %3874 = vmatpush1.msra.mxu0 %v2705
    %3875 = vmatprep.subr.mxu0 0.0
    %3876 = vmatpush1.msra.mxu0 %v2706
    %3877 = vmatprep.subr.mxu0 0.0
    %3878 = vmatpush1.msra.mxu0 %v2707
    %3879 = vmatprep.subr.mxu0 0.0
    %3880 = vmatpush1.msra.mxu0 0.0
    %3881 = vmatprep.subr.mxu0 0.0
    %3882 = vmatpush1.msra.mxu0 0.0
    %3883 = vmatprep.subr.mxu0 0.0
    %3884 = vmatpush1.msra.mxu0 0.0
    %3885 = vmatprep.subr.mxu0 0.0
    %3886 = vmatpush1.msra.mxu0 0.0
    %3887 = vmatprep.subr.mxu0 0.0
    %3888 = vmatpush1.msra.mxu0 0.0
    %3889 = vmatprep.subr.mxu0 0.0
    %3890 = vmatpush1.msra.mxu0 0.0
    %3891 = vmatprep.subr.mxu0 0.0
    %3892 = vmatpush1.msra.mxu0 0.0
    %3893 = vmatprep.subr.mxu0 0.0
    %3894 = vmatpush1.msra.mxu0 0.0
    %3895 = vmatprep.subr.mxu0 0.0
    %3896 = vmatpush1.msra.mxu0 0.0
    %3897 = vmatprep.subr.mxu0 0.0
    %3898 = vmatpush1.msra.mxu0 0.0
    %3899 = vmatprep.subr.mxu0 0.0
    %3900 = vmatpush1.msra.mxu0 0.0
    %3901 = vmatprep.subr.mxu0 0.0
    %3902 = vmatpush1.msra.mxu0 0.0
    %3903 = vmatprep.subr.mxu0 0.0
    %3904 = vmatpush1.msra.mxu0 0.0
    %3905 = vmatprep.subr.mxu0 0.0
    %3906 = vmatpush1.msra.mxu0 0.0
    %3907 = vmatprep.subr.mxu0 0.0
    %3908 = vmatpush1.msra.mxu0 0.0
    %3909 = vmatprep.subr.mxu0 0.0
    %3910 = vmatpush1.msra.mxu0 0.0
    %3911 = vmatprep.subr.mxu0 0.0
    %3912 = vmatpush1.msra.mxu0 0.0
    %3913 = vmatprep.subr.mxu0 0.0
    %3914 = vmatpush1.msra.mxu0 0.0
    %3915 = vmatprep.subr.mxu0 0.0
    %3916 = vmatpush1.msra.mxu0 0.0
    %3917 = vmatprep.subr.mxu0 0.0
    %3918 = vmatpush1.msra.mxu0 0.0
    %3919 = vmatprep.subr.mxu0 0.0
    %3920 = vmatpush1.msra.mxu0 0.0
    %3921 = vmatprep.subr.mxu0 0.0
    %3922 = vmatpush1.msra.mxu0 0.0
    %3923 = vmatprep.subr.mxu0 0.0
    %3924 = vmatpush1.msra.mxu0 0.0
    %3925 = vmatprep.subr.mxu0 0.0
    %3926 = vmatpush1.msra.mxu0 0.0
    %3927 = vmatprep.subr.mxu0 0.0
    %3928 = vmatpush1.msra.mxu0 0.0
    %3929 = vmatprep.subr.mxu0 0.0
    %3930 = vmatpush1.msra.mxu0 0.0
    %3931 = vmatprep.subr.mxu0 0.0
    %3932 = vmatpush1.msra.mxu0 0.0
    %3933 = vmatprep.subr.mxu0 0.0
    %3934 = vmatpush1.msra.mxu0 0.0
    %3935 = vmatprep.mubr.f32.mxu0 0.0
    %3936 = vmatmul.mubr.f32.gmra.mrb[0].mxu0 %v3775
    %v3937 = vpop.f32.mrb[0].mxu0
    %v3938 = vadd.f32 0.0, %v3937
    %v3939 = vpop.f32.mrb[0].mxu0
    %3940 = vdwg.mxu0
    %v3942 = vrot.slane %v3870, 2
    %v3943 = vsel %vm2820, %v3942, 0
    %3945 = vmatprep.subr.mxu0 0.0
    %3946 = vmatpush1.msra.mxu0 %v2701
    %3947 = vmatprep.subr.mxu0 0.0
    %3948 = vmatpush1.msra.mxu0 0.0
    %3949 = vmatprep.subr.mxu0 0.0
    %3950 = vmatpush1.msra.mxu0 0.0
    %3951 = vmatprep.subr.mxu0 0.0
    %3952 = vmatpush1.msra.mxu0 0.0
    %3953 = vmatprep.subr.mxu0 0.0
    %3954 = vmatpush1.msra.mxu0 0.0
    %3955 = vmatprep.subr.mxu0 0.0
    %3956 = vmatpush1.msra.mxu0 0.0
    %3957 = vmatprep.subr.mxu0 0.0
    %3958 = vmatpush1.msra.mxu0 0.0
    %3959 = vmatprep.subr.mxu0 0.0
    %3960 = vmatpush1.msra.mxu0 0.0
    %3961 = vmatprep.subr.mxu0 0.0
    %3962 = vmatpush1.msra.mxu0 0.0
    %3963 = vmatprep.subr.mxu0 0.0
    %3964 = vmatpush1.msra.mxu0 0.0
    %3965 = vmatprep.subr.mxu0 0.0
    %3966 = vmatpush1.msra.mxu0 0.0
    %3967 = vmatprep.subr.mxu0 0.0
    %3968 = vmatpush1.msra.mxu0 0.0
    %3969 = vmatprep.subr.mxu0 0.0
    %3970 = vmatpush1.msra.mxu0 0.0
    %3971 = vmatprep.subr.mxu0 0.0
    %3972 = vmatpush1.msra.mxu0 0.0
    %3973 = vmatprep.subr.mxu0 0.0
    %3974 = vmatpush1.msra.mxu0 0.0
    %3975 = vmatprep.subr.mxu0 0.0
    %3976 = vmatpush1.msra.mxu0 0.0
    %3977 = vmatprep.subr.mxu0 0.0
    %3978 = vmatpush1.msra.mxu0 0.0
    %3979 = vmatprep.subr.mxu0 0.0
    %3980 = vmatpush1.msra.mxu0 0.0
    %3981 = vmatprep.subr.mxu0 0.0
    %3982 = vmatpush1.msra.mxu0 0.0
    %3983 = vmatprep.subr.mxu0 0.0
    %3984 = vmatpush1.msra.mxu0 0.0
    %3985 = vmatprep.subr.mxu0 0.0
    %3986 = vmatpush1.msra.mxu0 0.0
    %3987 = vmatprep.subr.mxu0 0.0
    %3988 = vmatpush1.msra.mxu0 0.0
    %3989 = vmatprep.subr.mxu0 0.0
    %3990 = vmatpush1.msra.mxu0 0.0
    %3991 = vmatprep.subr.mxu0 0.0
    %3992 = vmatpush1.msra.mxu0 0.0
    %3993 = vmatprep.subr.mxu0 0.0
    %3994 = vmatpush1.msra.mxu0 0.0
    %3995 = vmatprep.subr.mxu0 0.0
    %3996 = vmatpush1.msra.mxu0 0.0
    %3997 = vmatprep.subr.mxu0 0.0
    %3998 = vmatpush1.msra.mxu0 0.0
    %3999 = vmatprep.subr.mxu0 0.0
    %4000 = vmatpush1.msra.mxu0 0.0
    %4001 = vmatprep.subr.mxu0 0.0
    %4002 = vmatpush1.msra.mxu0 0.0
    %4003 = vmatprep.subr.mxu0 0.0
    %4004 = vmatpush1.msra.mxu0 0.0
    %4005 = vmatprep.subr.mxu0 0.0
    %4006 = vmatpush1.msra.mxu0 0.0
    %4007 = vmatprep.subr.mxu0 0.0
    %4008 = vmatpush1.msra.mxu0 0.0
    %4009 = vmatprep.mubr.f32.mxu0 0.0
    %4010 = vmatmul.mubr.f32.gmra.mrb[0].mxu0 %v3943
    %v4011 = vpop.f32.mrb[0].mxu0
    %v4012 = vadd.f32 %v3938, %v4011
    %v4013 = vpop.f32.mrb[0].mxu0
    %4014 = vdwg.mxu0
    %v4015 = vadd.f32 %v4012, %v2897
    %v4016 = vmul.f32 %v4015, 0.5
    %v4017 = vtanh.pop %v4016
    %v4018 = vmul.f32 %v4017, 0.5
    %v4019 = vadd.f32 %v4018, 0.5
    %4020 = vmatprep.subr.mxu0 0.0
    %4021 = vmatpush1.msra.mxu0 %v2708
    %4022 = vmatprep.subr.mxu0 0.0
    %4023 = vmatpush1.msra.mxu0 %v2709
    %4024 = vmatprep.subr.mxu0 0.0
    %4025 = vmatpush1.msra.mxu0 %v2710
    %4026 = vmatprep.subr.mxu0 0.0
    %4027 = vmatpush1.msra.mxu0 %v2711
    %4028 = vmatprep.subr.mxu0 0.0
    %4029 = vmatpush1.msra.mxu0 0.0
    %4030 = vmatprep.subr.mxu0 0.0
    %4031 = vmatpush1.msra.mxu0 0.0
    %4032 = vmatprep.subr.mxu0 0.0
    %4033 = vmatpush1.msra.mxu0 0.0
    %4034 = vmatprep.subr.mxu0 0.0
    %4035 = vmatpush1.msra.mxu0 0.0
    %4036 = vmatprep.subr.mxu0 0.0
    %4037 = vmatpush1.msra.mxu0 0.0
    %4038 = vmatprep.subr.mxu0 0.0
    %4039 = vmatpush1.msra.mxu0 0.0
    %4040 = vmatprep.subr.mxu0 0.0
    %4041 = vmatpush1.msra.mxu0 0.0
    %4042 = vmatprep.subr.mxu0 0.0
    %4043 = vmatpush1.msra.mxu0 0.0
    %4044 = vmatprep.subr.mxu0 0.0
    %4045 = vmatpush1.msra.mxu0 0.0
    %4046 = vmatprep.subr.mxu0 0.0
    %4047 = vmatpush1.msra.mxu0 0.0
    %4048 = vmatprep.subr.mxu0 0.0
    %4049 = vmatpush1.msra.mxu0 0.0
    %4050 = vmatprep.subr.mxu0 0.0
    %4051 = vmatpush1.msra.mxu0 0.0
    %4052 = vmatprep.subr.mxu0 0.0
    %4053 = vmatpush1.msra.mxu0 0.0
    %4054 = vmatprep.subr.mxu0 0.0
    %4055 = vmatpush1.msra.mxu0 0.0
    %4056 = vmatprep.subr.mxu0 0.0
    %4057 = vmatpush1.msra.mxu0 0.0
    %4058 = vmatprep.subr.mxu0 0.0
    %4059 = vmatpush1.msra.mxu0 0.0
    %4060 = vmatprep.subr.mxu0 0.0
    %4061 = vmatpush1.msra.mxu0 0.0
    %4062 = vmatprep.subr.mxu0 0.0
    %4063 = vmatpush1.msra.mxu0 0.0
    %4064 = vmatprep.subr.mxu0 0.0
    %4065 = vmatpush1.msra.mxu0 0.0
    %4066 = vmatprep.subr.mxu0 0.0
    %4067 = vmatpush1.msra.mxu0 0.0
    %4068 = vmatprep.subr.mxu0 0.0
    %4069 = vmatpush1.msra.mxu0 0.0
    %4070 = vmatprep.subr.mxu0 0.0
    %4071 = vmatpush1.msra.mxu0 0.0
    %4072 = vmatprep.subr.mxu0 0.0
    %4073 = vmatpush1.msra.mxu0 0.0
    %4074 = vmatprep.subr.mxu0 0.0
    %4075 = vmatpush1.msra.mxu0 0.0
    %4076 = vmatprep.subr.mxu0 0.0
    %4077 = vmatpush1.msra.mxu0 0.0
    %4078 = vmatprep.subr.mxu0 0.0
    %4079 = vmatpush1.msra.mxu0 0.0
    %4080 = vmatprep.subr.mxu0 0.0
    %4081 = vmatpush1.msra.mxu0 0.0
    %4082 = vmatprep.subr.mxu0 0.0
    %4083 = vmatpush1.msra.mxu0 0.0
    %4084 = vmatprep.mubr.f32.mxu0 0.0
    %4085 = vmatmul.mubr.f32.gmra.mrb[0].mxu0 %v3775
    %v4086 = vpop.f32.mrb[0].mxu0
    %v4087 = vadd.f32 0.0, %v4086
    %v4088 = vpop.f32.mrb[0].mxu0
    %4089 = vdwg.mxu0
    %4090 = vmatprep.subr.mxu0 0.0
    %4091 = vmatpush1.msra.mxu0 %v2702
    %4092 = vmatprep.subr.mxu0 0.0
    %4093 = vmatpush1.msra.mxu0 0.0
    %4094 = vmatprep.subr.mxu0 0.0
    %4095 = vmatpush1.msra.mxu0 0.0
    %4096 = vmatprep.subr.mxu0 0.0
    %4097 = vmatpush1.msra.mxu0 0.0
    %4098 = vmatprep.subr.mxu0 0.0
    %4099 = vmatpush1.msra.mxu0 0.0
    %4100 = vmatprep.subr.mxu0 0.0
    %4101 = vmatpush1.msra.mxu0 0.0
    %4102 = vmatprep.subr.mxu0 0.0
    %4103 = vmatpush1.msra.mxu0 0.0
    %4104 = vmatprep.subr.mxu0 0.0
    %4105 = vmatpush1.msra.mxu0 0.0
    %4106 = vmatprep.subr.mxu0 0.0
    %4107 = vmatpush1.msra.mxu0 0.0
    %4108 = vmatprep.subr.mxu0 0.0
    %4109 = vmatpush1.msra.mxu0 0.0
    %4110 = vmatprep.subr.mxu0 0.0
    %4111 = vmatpush1.msra.mxu0 0.0
    %4112 = vmatprep.subr.mxu0 0.0
    %4113 = vmatpush1.msra.mxu0 0.0
    %4114 = vmatprep.subr.mxu0 0.0
    %4115 = vmatpush1.msra.mxu0 0.0
    %4116 = vmatprep.subr.mxu0 0.0
    %4117 = vmatpush1.msra.mxu0 0.0
    %4118 = vmatprep.subr.mxu0 0.0
    %4119 = vmatpush1.msra.mxu0 0.0
    %4120 = vmatprep.subr.mxu0 0.0
    %4121 = vmatpush1.msra.mxu0 0.0
    %4122 = vmatprep.subr.mxu0 0.0
    %4123 = vmatpush1.msra.mxu0 0.0
    %4124 = vmatprep.subr.mxu0 0.0
    %4125 = vmatpush1.msra.mxu0 0.0
    %4126 = vmatprep.subr.mxu0 0.0
    %4127 = vmatpush1.msra.mxu0 0.0
    %4128 = vmatprep.subr.mxu0 0.0
    %4129 = vmatpush1.msra.mxu0 0.0
    %4130 = vmatprep.subr.mxu0 0.0
    %4131 = vmatpush1.msra.mxu0 0.0
    %4132 = vmatprep.subr.mxu0 0.0
    %4133 = vmatpush1.msra.mxu0 0.0
    %4134 = vmatprep.subr.mxu0 0.0
    %4135 = vmatpush1.msra.mxu0 0.0
    %4136 = vmatprep.subr.mxu0 0.0
    %4137 = vmatpush1.msra.mxu0 0.0
    %4138 = vmatprep.subr.mxu0 0.0
    %4139 = vmatpush1.msra.mxu0 0.0
    %4140 = vmatprep.subr.mxu0 0.0
    %4141 = vmatpush1.msra.mxu0 0.0
    %4142 = vmatprep.subr.mxu0 0.0
    %4143 = vmatpush1.msra.mxu0 0.0
    %4144 = vmatprep.subr.mxu0 0.0
    %4145 = vmatpush1.msra.mxu0 0.0
    %4146 = vmatprep.subr.mxu0 0.0
    %4147 = vmatpush1.msra.mxu0 0.0
    %4148 = vmatprep.subr.mxu0 0.0
    %4149 = vmatpush1.msra.mxu0 0.0
    %4150 = vmatprep.subr.mxu0 0.0
    %4151 = vmatpush1.msra.mxu0 0.0
    %4152 = vmatprep.subr.mxu0 0.0
    %4153 = vmatpush1.msra.mxu0 0.0
    %4154 = vmatprep.mubr.f32.mxu0 0.0
    %4155 = vmatmul.mubr.f32.gmra.mrb[0].mxu0 %v3943
    %v4156 = vpop.f32.mrb[0].mxu0
    %v4157 = vadd.f32 %v4087, %v4156
    %v4158 = vpop.f32.mrb[0].mxu0
    %4159 = vdwg.mxu0
    %v4160 = vadd.f32 %v4157, %v3048
    %v4161 = vmul.f32 %v4160, 0.5
    %v4162 = vtanh.pop %v4161
    %v4163 = vmul.f32 %v4162, 0.5
    %v4164 = vadd.f32 %v4163, 0.5
    %4165 = vmatprep.subr.mxu0 0.0
    %4166 = vmatpush1.msra.mxu0 %v2703
    %4167 = vmatprep.subr.mxu0 0.0
    %4168 = vmatpush1.msra.mxu0 0.0
    %4169 = vmatprep.subr.mxu0 0.0
    %4170 = vmatpush1.msra.mxu0 0.0
    %4171 = vmatprep.subr.mxu0 0.0
    %4172 = vmatpush1.msra.mxu0 0.0
    %4173 = vmatprep.subr.mxu0 0.0
    %4174 = vmatpush1.msra.mxu0 0.0
    %4175 = vmatprep.subr.mxu0 0.0
    %4176 = vmatpush1.msra.mxu0 0.0
    %4177 = vmatprep.subr.mxu0 0.0
    %4178 = vmatpush1.msra.mxu0 0.0
    %4179 = vmatprep.subr.mxu0 0.0
    %4180 = vmatpush1.msra.mxu0 0.0
    %4181 = vmatprep.subr.mxu0 0.0
    %4182 = vmatpush1.msra.mxu0 0.0
    %4183 = vmatprep.subr.mxu0 0.0
    %4184 = vmatpush1.msra.mxu0 0.0
    %4185 = vmatprep.subr.mxu0 0.0
    %4186 = vmatpush1.msra.mxu0 0.0
    %4187 = vmatprep.subr.mxu0 0.0
    %4188 = vmatpush1.msra.mxu0 0.0
    %4189 = vmatprep.subr.mxu0 0.0
    %4190 = vmatpush1.msra.mxu0 0.0
    %4191 = vmatprep.subr.mxu0 0.0
    %4192 = vmatpush1.msra.mxu0 0.0
    %4193 = vmatprep.subr.mxu0 0.0
    %4194 = vmatpush1.msra.mxu0 0.0
    %4195 = vmatprep.subr.mxu0 0.0
    %4196 = vmatpush1.msra.mxu0 0.0
    %4197 = vmatprep.subr.mxu0 0.0
    %4198 = vmatpush1.msra.mxu0 0.0
    %4199 = vmatprep.subr.mxu0 0.0
    %4200 = vmatpush1.msra.mxu0 0.0
    %4201 = vmatprep.subr.mxu0 0.0
    %4202 = vmatpush1.msra.mxu0 0.0
    %4203 = vmatprep.subr.mxu0 0.0
    %4204 = vmatpush1.msra.mxu0 0.0
    %4205 = vmatprep.subr.mxu0 0.0
    %4206 = vmatpush1.msra.mxu0 0.0
    %4207 = vmatprep.subr.mxu0 0.0
    %4208 = vmatpush1.msra.mxu0 0.0
    %4209 = vmatprep.subr.mxu0 0.0
    %4210 = vmatpush1.msra.mxu0 0.0
    %4211 = vmatprep.subr.mxu0 0.0
    %4212 = vmatpush1.msra.mxu0 0.0
    %4213 = vmatprep.subr.mxu0 0.0
    %4214 = vmatpush1.msra.mxu0 0.0
    %4215 = vmatprep.subr.mxu0 0.0
    %4216 = vmatpush1.msra.mxu0 0.0
    %4217 = vmatprep.subr.mxu0 0.0
    %4218 = vmatpush1.msra.mxu0 0.0
    %4219 = vmatprep.subr.mxu0 0.0
    %4220 = vmatpush1.msra.mxu0 0.0
    %4221 = vmatprep.subr.mxu0 0.0
    %4222 = vmatpush1.msra.mxu0 0.0
    %4223 = vmatprep.subr.mxu0 0.0
    %4224 = vmatpush1.msra.mxu0 0.0
    %4225 = vmatprep.subr.mxu0 0.0
    %4226 = vmatpush1.msra.mxu0 0.0
    %4227 = vmatprep.subr.mxu0 0.0
    %4228 = vmatpush1.msra.mxu0 0.0
    %4229 = vmatprep.mubr.f32.mxu0 0.0
    %4230 = vmatmul.mubr.f32.gmra.mrb[0].mxu0 %v3943
    %v4231 = vpop.f32.mrb[0].mxu0
    %v4232 = vadd.f32 %v3059, %v4231
    %v4233 = vpop.f32.mrb[0].mxu0
    %4234 = vdwg.mxu0
    %4235 = vmatprep.subr.mxu0 0.0
    %4236 = vmatpush1.msra.mxu0 %v2712
    %4237 = vmatprep.subr.mxu0 0.0
    %4238 = vmatpush1.msra.mxu0 %v2713
    %4239 = vmatprep.subr.mxu0 0.0
    %4240 = vmatpush1.msra.mxu0 %v2714
    %4241 = vmatprep.subr.mxu0 0.0
    %4242 = vmatpush1.msra.mxu0 %v2715
    %4243 = vmatprep.subr.mxu0 0.0
    %4244 = vmatpush1.msra.mxu0 0.0
    %4245 = vmatprep.subr.mxu0 0.0
    %4246 = vmatpush1.msra.mxu0 0.0
    %4247 = vmatprep.subr.mxu0 0.0
    %4248 = vmatpush1.msra.mxu0 0.0
    %4249 = vmatprep.subr.mxu0 0.0
    %4250 = vmatpush1.msra.mxu0 0.0
    %4251 = vmatprep.subr.mxu0 0.0
    %4252 = vmatpush1.msra.mxu0 0.0
    %4253 = vmatprep.subr.mxu0 0.0
    %4254 = vmatpush1.msra.mxu0 0.0
    %4255 = vmatprep.subr.mxu0 0.0
    %4256 = vmatpush1.msra.mxu0 0.0
    %4257 = vmatprep.subr.mxu0 0.0
    %4258 = vmatpush1.msra.mxu0 0.0
    %4259 = vmatprep.subr.mxu0 0.0
    %4260 = vmatpush1.msra.mxu0 0.0
    %4261 = vmatprep.subr.mxu0 0.0
    %4262 = vmatpush1.msra.mxu0 0.0
    %4263 = vmatprep.subr.mxu0 0.0
    %4264 = vmatpush1.msra.mxu0 0.0
    %4265 = vmatprep.subr.mxu0 0.0
    %4266 = vmatpush1.msra.mxu0 0.0
    %4267 = vmatprep.subr.mxu0 0.0
    %4268 = vmatpush1.msra.mxu0 0.0
    %4269 = vmatprep.subr.mxu0 0.0
    %4270 = vmatpush1.msra.mxu0 0.0
    %4271 = vmatprep.subr.mxu0 0.0
    %4272 = vmatpush1.msra.mxu0 0.0
    %4273 = vmatprep.subr.mxu0 0.0
    %4274 = vmatpush1.msra.mxu0 0.0
    %4275 = vmatprep.subr.mxu0 0.0
    %4276 = vmatpush1.msra.mxu0 0.0
    %4277 = vmatprep.subr.mxu0 0.0
    %4278 = vmatpush1.msra.mxu0 0.0
    %4279 = vmatprep.subr.mxu0 0.0
    %4280 = vmatpush1.msra.mxu0 0.0
    %4281 = vmatprep.subr.mxu0 0.0
    %4282 = vmatpush1.msra.mxu0 0.0
    %4283 = vmatprep.subr.mxu0 0.0
    %4284 = vmatpush1.msra.mxu0 0.0
    %4285 = vmatprep.subr.mxu0 0.0
    %4286 = vmatpush1.msra.mxu0 0.0
    %4287 = vmatprep.subr.mxu0 0.0
    %4288 = vmatpush1.msra.mxu0 0.0
    %4289 = vmatprep.subr.mxu0 0.0
    %4290 = vmatpush1.msra.mxu0 0.0
    %4291 = vmatprep.subr.mxu0 0.0
    %4292 = vmatpush1.msra.mxu0 0.0
    %4293 = vmatprep.subr.mxu0 0.0
    %4294 = vmatpush1.msra.mxu0 0.0
    %4295 = vmatprep.subr.mxu0 0.0
    %4296 = vmatpush1.msra.mxu0 0.0
    %4297 = vmatprep.subr.mxu0 0.0
    %4298 = vmatpush1.msra.mxu0 0.0
    %4299 = vmatprep.mubr.f32.mxu0 0.0
    %4300 = vmatmul.mubr.f32.gmra.mrb[0].mxu0 %v3775
    %v4301 = vpop.f32.mrb[0].mxu0
    %v4302 = vadd.f32 %v3135, %v4301
    %v4303 = vpop.f32.mrb[0].mxu0
    %4304 = vdwg.mxu0
    %v4305 = vmul.f32 %v4019, %v4302
    %v4306 = vadd.f32 %v4232, %v4305
    %v4307 = vtanh.pop %v4306
    %v4308 = vsub.f32 %v3773, %v4307
    %v4309 = vmul.f32 %v4164, %v4308
    %v4310 = vadd.f32 %v4307, %v4309
    %v4312 = vsel %vm509, %v4310, 0
    %4314 = vmatprep.subr.mxu0 0.0
    %4315 = vmatpush1.msra.mxu0 %v2720
    %4316 = vmatprep.subr.mxu0 0.0
    %4317 = vmatpush1.msra.mxu0 %v2721
    %4318 = vmatprep.subr.mxu0 0.0
    %4319 = vmatpush1.msra.mxu0 %v2722
    %4320 = vmatprep.subr.mxu0 0.0
    %4321 = vmatpush1.msra.mxu0 %v2723
    %4322 = vmatprep.subr.mxu0 0.0
    %4323 = vmatpush1.msra.mxu0 0.0
    %4324 = vmatprep.subr.mxu0 0.0
    %4325 = vmatpush1.msra.mxu0 0.0
    %4326 = vmatprep.subr.mxu0 0.0
    %4327 = vmatpush1.msra.mxu0 0.0
    %4328 = vmatprep.subr.mxu0 0.0
    %4329 = vmatpush1.msra.mxu0 0.0
    %4330 = vmatprep.subr.mxu0 0.0
    %4331 = vmatpush1.msra.mxu0 0.0
    %4332 = vmatprep.subr.mxu0 0.0
    %4333 = vmatpush1.msra.mxu0 0.0
    %4334 = vmatprep.subr.mxu0 0.0
    %4335 = vmatpush1.msra.mxu0 0.0
    %4336 = vmatprep.subr.mxu0 0.0
    %4337 = vmatpush1.msra.mxu0 0.0
    %4338 = vmatprep.subr.mxu0 0.0
    %4339 = vmatpush1.msra.mxu0 0.0
    %4340 = vmatprep.subr.mxu0 0.0
    %4341 = vmatpush1.msra.mxu0 0.0
    %4342 = vmatprep.subr.mxu0 0.0
    %4343 = vmatpush1.msra.mxu0 0.0
    %4344 = vmatprep.subr.mxu0 0.0
    %4345 = vmatpush1.msra.mxu0 0.0
    %4346 = vmatprep.subr.mxu0 0.0
    %4347 = vmatpush1.msra.mxu0 0.0
    %4348 = vmatprep.subr.mxu0 0.0
    %4349 = vmatpush1.msra.mxu0 0.0
    %4350 = vmatprep.subr.mxu0 0.0
    %4351 = vmatpush1.msra.mxu0 0.0
    %4352 = vmatprep.subr.mxu0 0.0
    %4353 = vmatpush1.msra.mxu0 0.0
    %4354 = vmatprep.subr.mxu0 0.0
    %4355 = vmatpush1.msra.mxu0 0.0
    %4356 = vmatprep.subr.mxu0 0.0
    %4357 = vmatpush1.msra.mxu0 0.0
    %4358 = vmatprep.subr.mxu0 0.0
    %4359 = vmatpush1.msra.mxu0 0.0
    %4360 = vmatprep.subr.mxu0 0.0
    %4361 = vmatpush1.msra.mxu0 0.0
    %4362 = vmatprep.subr.mxu0 0.0
    %4363 = vmatpush1.msra.mxu0 0.0
    %4364 = vmatprep.subr.mxu0 0.0
    %4365 = vmatpush1.msra.mxu0 0.0
    %4366 = vmatprep.subr.mxu0 0.0
    %4367 = vmatpush1.msra.mxu0 0.0
    %4368 = vmatprep.subr.mxu0 0.0
    %4369 = vmatpush1.msra.mxu0 0.0
    %4370 = vmatprep.subr.mxu0 0.0
    %4371 = vmatpush1.msra.mxu0 0.0
    %4372 = vmatprep.subr.mxu0 0.0
    %4373 = vmatpush1.msra.mxu0 0.0
    %4374 = vmatprep.subr.mxu0 0.0
    %4375 = vmatpush1.msra.mxu0 0.0
    %4376 = vmatprep.subr.mxu0 0.0
    %4377 = vmatpush1.msra.mxu0 0.0
    %4378 = vmatprep.mubr.f32.mxu0 0.0
    %4379 = vmatmul.mubr.f32.gmra.mrb[0].mxu0 %v4312
    %v4380 = vpop.f32.mrb[0].mxu0
    %v4381 = vadd.f32 %v3229, %v4380
    %v4382 = vpop.f32.mrb[0].mxu0
    %4383 = vdwg.mxu0
    %v4384 = vmax.f32 %v4381, 0.0
    %s4385 = sld [smem:[#allocation3 + $0x2]]
    %p4386 = scmp.gt.s32.totalorder %s4385, 0
    %s4387 = scalar_select %p4386, 1, 0
    %s4388 = scvt.s32.f32 %s4387
    %v4389 = vstv %s4388
    %v4390 = vmul.f32 %v4389, %v2725
    %s4391 = ssub.f32 1.0, %s4388
    %v4392 = vstv %s4391
    %v4393 = vmul.f32 %v4392, %v4384
    %4395 = vrot.lane.b32.xlu0 %v4393, 4
    %v4396 = vpop.permute.xlu0 %4395
    %v4398 = vadd.f32 %v4390, %v4396
    %4399 = vrot.lane.b32.xlu0 %v3870, 126
    %v4400 = vpop.permute.xlu0 %4399
    %v4403 = vrot.slane %v4398, 6
    %4404 = vrot.lane.b32.xlu0 %v4403, 2
    %v4405 = vpop.permute.xlu0 %4404
    %v4407 = vsel %vm3332, %v4400, %v4405
    %4408 = vmatprep.subr.mxu0 0.0
    %4409 = vmatpush1.msra.mxu0 %v2704
    %4410 = vmatprep.subr.mxu0 0.0
    %4411 = vmatpush1.msra.mxu0 %v2705
    %4412 = vmatprep.subr.mxu0 0.0
    %4413 = vmatpush1.msra.mxu0 %v2706
    %4414 = vmatprep.subr.mxu0 0.0
    %4415 = vmatpush1.msra.mxu0 %v2707
    %4416 = vmatprep.subr.mxu0 0.0
    %4417 = vmatpush1.msra.mxu0 0.0
    %4418 = vmatprep.subr.mxu0 0.0
    %4419 = vmatpush1.msra.mxu0 0.0
    %4420 = vmatprep.subr.mxu0 0.0
    %4421 = vmatpush1.msra.mxu0 0.0
    %4422 = vmatprep.subr.mxu0 0.0
    %4423 = vmatpush1.msra.mxu0 0.0
    %4424 = vmatprep.subr.mxu0 0.0
    %4425 = vmatpush1.msra.mxu0 0.0
    %4426 = vmatprep.subr.mxu0 0.0
    %4427 = vmatpush1.msra.mxu0 0.0
    %4428 = vmatprep.subr.mxu0 0.0
    %4429 = vmatpush1.msra.mxu0 0.0
    %4430 = vmatprep.subr.mxu0 0.0
    %4431 = vmatpush1.msra.mxu0 0.0
    %4432 = vmatprep.subr.mxu0 0.0
    %4433 = vmatpush1.msra.mxu0 0.0
    %4434 = vmatprep.subr.mxu0 0.0
    %4435 = vmatpush1.msra.mxu0 0.0
    %4436 = vmatprep.subr.mxu0 0.0
    %4437 = vmatpush1.msra.mxu0 0.0
    %4438 = vmatprep.subr.mxu0 0.0
    %4439 = vmatpush1.msra.mxu0 0.0
    %4440 = vmatprep.subr.mxu0 0.0
    %4441 = vmatpush1.msra.mxu0 0.0
    %4442 = vmatprep.subr.mxu0 0.0
    %4443 = vmatpush1.msra.mxu0 0.0
    %4444 = vmatprep.subr.mxu0 0.0
    %4445 = vmatpush1.msra.mxu0 0.0
    %4446 = vmatprep.subr.mxu0 0.0
    %4447 = vmatpush1.msra.mxu0 0.0
    %4448 = vmatprep.subr.mxu0 0.0
    %4449 = vmatpush1.msra.mxu0 0.0
    %4450 = vmatprep.subr.mxu0 0.0
    %4451 = vmatpush1.msra.mxu0 0.0
    %4452 = vmatprep.subr.mxu0 0.0
    %4453 = vmatpush1.msra.mxu0 0.0
    %4454 = vmatprep.subr.mxu0 0.0
    %4455 = vmatpush1.msra.mxu0 0.0
    %4456 = vmatprep.subr.mxu0 0.0
    %4457 = vmatpush1.msra.mxu0 0.0
    %4458 = vmatprep.subr.mxu0 0.0
    %4459 = vmatpush1.msra.mxu0 0.0
    %4460 = vmatprep.subr.mxu0 0.0
    %4461 = vmatpush1.msra.mxu0 0.0
    %4462 = vmatprep.subr.mxu0 0.0
    %4463 = vmatpush1.msra.mxu0 0.0
    %4464 = vmatprep.subr.mxu0 0.0
    %4465 = vmatpush1.msra.mxu0 0.0
    %4466 = vmatprep.subr.mxu0 0.0
    %4467 = vmatpush1.msra.mxu0 0.0
    %4468 = vmatprep.subr.mxu0 0.0
    %4469 = vmatpush1.msra.mxu0 0.0
    %4470 = vmatprep.subr.mxu0 0.0
    %4471 = vmatpush1.msra.mxu0 0.0
    %4472 = vmatprep.mubr.f32.mxu0 0.0
    %4473 = vmatmul.mubr.f32.gmra.mrb[0].mxu0 %v4312
    %v4474 = vpop.f32.mrb[0].mxu0
    %v4475 = vadd.f32 0.0, %v4474
    %v4476 = vpop.f32.mrb[0].mxu0
    %4477 = vdwg.mxu0
    %v4479 = vrot.slane %v4407, 2
    %v4480 = vsel %vm2820, %v4479, 0
    %4482 = vmatprep.subr.mxu0 0.0
    %4483 = vmatpush1.msra.mxu0 %v2701
    %4484 = vmatprep.subr.mxu0 0.0
    %4485 = vmatpush1.msra.mxu0 0.0
    %4486 = vmatprep.subr.mxu0 0.0
    %4487 = vmatpush1.msra.mxu0 0.0
    %4488 = vmatprep.subr.mxu0 0.0
    %4489 = vmatpush1.msra.mxu0 0.0
    %4490 = vmatprep.subr.mxu0 0.0
    %4491 = vmatpush1.msra.mxu0 0.0
    %4492 = vmatprep.subr.mxu0 0.0
    %4493 = vmatpush1.msra.mxu0 0.0
    %4494 = vmatprep.subr.mxu0 0.0
    %4495 = vmatpush1.msra.mxu0 0.0
    %4496 = vmatprep.subr.mxu0 0.0
    %4497 = vmatpush1.msra.mxu0 0.0
    %4498 = vmatprep.subr.mxu0 0.0
    %4499 = vmatpush1.msra.mxu0 0.0
    %4500 = vmatprep.subr.mxu0 0.0
    %4501 = vmatpush1.msra.mxu0 0.0
    %4502 = vmatprep.subr.mxu0 0.0
    %4503 = vmatpush1.msra.mxu0 0.0
    %4504 = vmatprep.subr.mxu0 0.0
    %4505 = vmatpush1.msra.mxu0 0.0
    %4506 = vmatprep.subr.mxu0 0.0
    %4507 = vmatpush1.msra.mxu0 0.0
    %4508 = vmatprep.subr.mxu0 0.0
    %4509 = vmatpush1.msra.mxu0 0.0
    %4510 = vmatprep.subr.mxu0 0.0
    %4511 = vmatpush1.msra.mxu0 0.0
    %4512 = vmatprep.subr.mxu0 0.0
    %4513 = vmatpush1.msra.mxu0 0.0
    %4514 = vmatprep.subr.mxu0 0.0
    %4515 = vmatpush1.msra.mxu0 0.0
    %4516 = vmatprep.subr.mxu0 0.0
    %4517 = vmatpush1.msra.mxu0 0.0
    %4518 = vmatprep.subr.mxu0 0.0
    %4519 = vmatpush1.msra.mxu0 0.0
    %4520 = vmatprep.subr.mxu0 0.0
    %4521 = vmatpush1.msra.mxu0 0.0
    %4522 = vmatprep.subr.mxu0 0.0
    %4523 = vmatpush1.msra.mxu0 0.0
    %4524 = vmatprep.subr.mxu0 0.0
    %4525 = vmatpush1.msra.mxu0 0.0
    %4526 = vmatprep.subr.mxu0 0.0
    %4527 = vmatpush1.msra.mxu0 0.0
    %4528 = vmatprep.subr.mxu0 0.0
    %4529 = vmatpush1.msra.mxu0 0.0
    %4530 = vmatprep.subr.mxu0 0.0
    %4531 = vmatpush1.msra.mxu0 0.0
    %4532 = vmatprep.subr.mxu0 0.0
    %4533 = vmatpush1.msra.mxu0 0.0
    %4534 = vmatprep.subr.mxu0 0.0
    %4535 = vmatpush1.msra.mxu0 0.0
    %4536 = vmatprep.subr.mxu0 0.0
    %4537 = vmatpush1.msra.mxu0 0.0
    %4538 = vmatprep.subr.mxu0 0.0
    %4539 = vmatpush1.msra.mxu0 0.0
    %4540 = vmatprep.subr.mxu0 0.0
    %4541 = vmatpush1.msra.mxu0 0.0
    %4542 = vmatprep.subr.mxu0 0.0
    %4543 = vmatpush1.msra.mxu0 0.0
    %4544 = vmatprep.subr.mxu0 0.0
    %4545 = vmatpush1.msra.mxu0 0.0
    %4546 = vmatprep.mubr.f32.mxu0 0.0
    %4547 = vmatmul.mubr.f32.gmra.mrb[0].mxu0 %v4480
    %v4548 = vpop.f32.mrb[0].mxu0
    %v4549 = vadd.f32 %v4475, %v4548
    %v4550 = vpop.f32.mrb[0].mxu0
    %4551 = vdwg.mxu0
    %v4552 = vadd.f32 %v4549, %v2897
    %v4553 = vmul.f32 %v4552, 0.5
    %v4554 = vtanh.pop %v4553
    %v4555 = vmul.f32 %v4554, 0.5
    %v4556 = vadd.f32 %v4555, 0.5
    %4557 = vmatprep.subr.mxu0 0.0
    %4558 = vmatpush1.msra.mxu0 %v2708
    %4559 = vmatprep.subr.mxu0 0.0
    %4560 = vmatpush1.msra.mxu0 %v2709
    %4561 = vmatprep.subr.mxu0 0.0
    %4562 = vmatpush1.msra.mxu0 %v2710
    %4563 = vmatprep.subr.mxu0 0.0
    %4564 = vmatpush1.msra.mxu0 %v2711
    %4565 = vmatprep.subr.mxu0 0.0
    %4566 = vmatpush1.msra.mxu0 0.0
    %4567 = vmatprep.subr.mxu0 0.0
    %4568 = vmatpush1.msra.mxu0 0.0
    %4569 = vmatprep.subr.mxu0 0.0
    %4570 = vmatpush1.msra.mxu0 0.0
    %4571 = vmatprep.subr.mxu0 0.0
    %4572 = vmatpush1.msra.mxu0 0.0
    %4573 = vmatprep.subr.mxu0 0.0
    %4574 = vmatpush1.msra.mxu0 0.0
    %4575 = vmatprep.subr.mxu0 0.0
    %4576 = vmatpush1.msra.mxu0 0.0
    %4577 = vmatprep.subr.mxu0 0.0
    %4578 = vmatpush1.msra.mxu0 0.0
    %4579 = vmatprep.subr.mxu0 0.0
    %4580 = vmatpush1.msra.mxu0 0.0
    %4581 = vmatprep.subr.mxu0 0.0
    %4582 = vmatpush1.msra.mxu0 0.0
    %4583 = vmatprep.subr.mxu0 0.0
    %4584 = vmatpush1.msra.mxu0 0.0
    %4585 = vmatprep.subr.mxu0 0.0
    %4586 = vmatpush1.msra.mxu0 0.0
    %4587 = vmatprep.subr.mxu0 0.0
    %4588 = vmatpush1.msra.mxu0 0.0
    %4589 = vmatprep.subr.mxu0 0.0
    %4590 = vmatpush1.msra.mxu0 0.0
    %4591 = vmatprep.subr.mxu0 0.0
    %4592 = vmatpush1.msra.mxu0 0.0
    %4593 = vmatprep.subr.mxu0 0.0
    %4594 = vmatpush1.msra.mxu0 0.0
    %4595 = vmatprep.subr.mxu0 0.0
    %4596 = vmatpush1.msra.mxu0 0.0
    %4597 = vmatprep.subr.mxu0 0.0
    %4598 = vmatpush1.msra.mxu0 0.0
    %4599 = vmatprep.subr.mxu0 0.0
    %4600 = vmatpush1.msra.mxu0 0.0
    %4601 = vmatprep.subr.mxu0 0.0
    %4602 = vmatpush1.msra.mxu0 0.0
    %4603 = vmatprep.subr.mxu0 0.0
    %4604 = vmatpush1.msra.mxu0 0.0
    %4605 = vmatprep.subr.mxu0 0.0
    %4606 = vmatpush1.msra.mxu0 0.0
    %4607 = vmatprep.subr.mxu0 0.0
    %4608 = vmatpush1.msra.mxu0 0.0
    %4609 = vmatprep.subr.mxu0 0.0
    %4610 = vmatpush1.msra.mxu0 0.0
    %4611 = vmatprep.subr.mxu0 0.0
    %4612 = vmatpush1.msra.mxu0 0.0
    %4613 = vmatprep.subr.mxu0 0.0
    %4614 = vmatpush1.msra.mxu0 0.0
    %4615 = vmatprep.subr.mxu0 0.0
    %4616 = vmatpush1.msra.mxu0 0.0
    %4617 = vmatprep.subr.mxu0 0.0
    %4618 = vmatpush1.msra.mxu0 0.0
    %4619 = vmatprep.subr.mxu0 0.0
    %4620 = vmatpush1.msra.mxu0 0.0
    %4621 = vmatprep.mubr.f32.mxu0 0.0
    %4622 = vmatmul.mubr.f32.gmra.mrb[0].mxu0 %v4312
    %v4623 = vpop.f32.mrb[0].mxu0
    %v4624 = vadd.f32 0.0, %v4623
    %v4625 = vpop.f32.mrb[0].mxu0
    %4626 = vdwg.mxu0
    %4627 = vmatprep.subr.mxu0 0.0
    %4628 = vmatpush1.msra.mxu0 %v2702
    %4629 = vmatprep.subr.mxu0 0.0
    %4630 = vmatpush1.msra.mxu0 0.0
    %4631 = vmatprep.subr.mxu0 0.0
    %4632 = vmatpush1.msra.mxu0 0.0
    %4633 = vmatprep.subr.mxu0 0.0
    %4634 = vmatpush1.msra.mxu0 0.0
    %4635 = vmatprep.subr.mxu0 0.0
    %4636 = vmatpush1.msra.mxu0 0.0
    %4637 = vmatprep.subr.mxu0 0.0
    %4638 = vmatpush1.msra.mxu0 0.0
    %4639 = vmatprep.subr.mxu0 0.0
    %4640 = vmatpush1.msra.mxu0 0.0
    %4641 = vmatprep.subr.mxu0 0.0
    %4642 = vmatpush1.msra.mxu0 0.0
    %4643 = vmatprep.subr.mxu0 0.0
    %4644 = vmatpush1.msra.mxu0 0.0
    %4645 = vmatprep.subr.mxu0 0.0
    %4646 = vmatpush1.msra.mxu0 0.0
    %4647 = vmatprep.subr.mxu0 0.0
    %4648 = vmatpush1.msra.mxu0 0.0
    %4649 = vmatprep.subr.mxu0 0.0
    %4650 = vmatpush1.msra.mxu0 0.0
    %4651 = vmatprep.subr.mxu0 0.0
    %4652 = vmatpush1.msra.mxu0 0.0
    %4653 = vmatprep.subr.mxu0 0.0
    %4654 = vmatpush1.msra.mxu0 0.0
    %4655 = vmatprep.subr.mxu0 0.0
    %4656 = vmatpush1.msra.mxu0 0.0
    %4657 = vmatprep.subr.mxu0 0.0
    %4658 = vmatpush1.msra.mxu0 0.0
    %4659 = vmatprep.subr.mxu0 0.0
    %4660 = vmatpush1.msra.mxu0 0.0
    %4661 = vmatprep.subr.mxu0 0.0
    %4662 = vmatpush1.msra.mxu0 0.0
    %4663 = vmatprep.subr.mxu0 0.0
    %4664 = vmatpush1.msra.mxu0 0.0
    %4665 = vmatprep.subr.mxu0 0.0
    %4666 = vmatpush1.msra.mxu0 0.0
    %4667 = vmatprep.subr.mxu0 0.0
    %4668 = vmatpush1.msra.mxu0 0.0
    %4669 = vmatprep.subr.mxu0 0.0
    %4670 = vmatpush1.msra.mxu0 0.0
    %4671 = vmatprep.subr.mxu0 0.0
    %4672 = vmatpush1.msra.mxu0 0.0
    %4673 = vmatprep.subr.mxu0 0.0
    %4674 = vmatpush1.msra.mxu0 0.0
    %4675 = vmatprep.subr.mxu0 0.0
    %4676 = vmatpush1.msra.mxu0 0.0
    %4677 = vmatprep.subr.mxu0 0.0
    %4678 = vmatpush1.msra.mxu0 0.0
    %4679 = vmatprep.subr.mxu0 0.0
    %4680 = vmatpush1.msra.mxu0 0.0
    %4681 = vmatprep.subr.mxu0 0.0
    %4682 = vmatpush1.msra.mxu0 0.0
    %4683 = vmatprep.subr.mxu0 0.0
    %4684 = vmatpush1.msra.mxu0 0.0
    %4685 = vmatprep.subr.mxu0 0.0
    %4686 = vmatpush1.msra.mxu0 0.0
    %4687 = vmatprep.subr.mxu0 0.0
    %4688 = vmatpush1.msra.mxu0 0.0
    %4689 = vmatprep.subr.mxu0 0.0
    %4690 = vmatpush1.msra.mxu0 0.0
    %4691 = vmatprep.mubr.f32.mxu0 0.0
    %4692 = vmatmul.mubr.f32.gmra.mrb[0].mxu0 %v4480
    %v4693 = vpop.f32.mrb[0].mxu0
    %v4694 = vadd.f32 %v4624, %v4693
    %v4695 = vpop.f32.mrb[0].mxu0
    %4696 = vdwg.mxu0
    %v4697 = vadd.f32 %v4694, %v3048
    %v4698 = vmul.f32 %v4697, 0.5
    %v4699 = vtanh.pop %v4698
    %v4700 = vmul.f32 %v4699, 0.5
    %v4701 = vadd.f32 %v4700, 0.5
    %4702 = vmatprep.subr.mxu0 0.0
    %4703 = vmatpush1.msra.mxu0 %v2703
    %4704 = vmatprep.subr.mxu0 0.0
    %4705 = vmatpush1.msra.mxu0 0.0
    %4706 = vmatprep.subr.mxu0 0.0
    %4707 = vmatpush1.msra.mxu0 0.0
    %4708 = vmatprep.subr.mxu0 0.0
    %4709 = vmatpush1.msra.mxu0 0.0
    %4710 = vmatprep.subr.mxu0 0.0
    %4711 = vmatpush1.msra.mxu0 0.0
    %4712 = vmatprep.subr.mxu0 0.0
    %4713 = vmatpush1.msra.mxu0 0.0
    %4714 = vmatprep.subr.mxu0 0.0
    %4715 = vmatpush1.msra.mxu0 0.0
    %4716 = vmatprep.subr.mxu0 0.0
    %4717 = vmatpush1.msra.mxu0 0.0
    %4718 = vmatprep.subr.mxu0 0.0
    %4719 = vmatpush1.msra.mxu0 0.0
    %4720 = vmatprep.subr.mxu0 0.0
    %4721 = vmatpush1.msra.mxu0 0.0
    %4722 = vmatprep.subr.mxu0 0.0
    %4723 = vmatpush1.msra.mxu0 0.0
    %4724 = vmatprep.subr.mxu0 0.0
    %4725 = vmatpush1.msra.mxu0 0.0
    %4726 = vmatprep.subr.mxu0 0.0
    %4727 = vmatpush1.msra.mxu0 0.0
    %4728 = vmatprep.subr.mxu0 0.0
    %4729 = vmatpush1.msra.mxu0 0.0
    %4730 = vmatprep.subr.mxu0 0.0
    %4731 = vmatpush1.msra.mxu0 0.0
    %4732 = vmatprep.subr.mxu0 0.0
    %4733 = vmatpush1.msra.mxu0 0.0
    %4734 = vmatprep.subr.mxu0 0.0
    %4735 = vmatpush1.msra.mxu0 0.0
    %4736 = vmatprep.subr.mxu0 0.0
    %4737 = vmatpush1.msra.mxu0 0.0
    %4738 = vmatprep.subr.mxu0 0.0
    %4739 = vmatpush1.msra.mxu0 0.0
    %4740 = vmatprep.subr.mxu0 0.0
    %4741 = vmatpush1.msra.mxu0 0.0
    %4742 = vmatprep.subr.mxu0 0.0
    %4743 = vmatpush1.msra.mxu0 0.0
    %4744 = vmatprep.subr.mxu0 0.0
    %4745 = vmatpush1.msra.mxu0 0.0
    %4746 = vmatprep.subr.mxu0 0.0
    %4747 = vmatpush1.msra.mxu0 0.0
    %4748 = vmatprep.subr.mxu0 0.0
    %4749 = vmatpush1.msra.mxu0 0.0
    %4750 = vmatprep.subr.mxu0 0.0
    %4751 = vmatpush1.msra.mxu0 0.0
    %4752 = vmatprep.subr.mxu0 0.0
    %4753 = vmatpush1.msra.mxu0 0.0
    %4754 = vmatprep.subr.mxu0 0.0
    %4755 = vmatpush1.msra.mxu0 0.0
    %4756 = vmatprep.subr.mxu0 0.0
    %4757 = vmatpush1.msra.mxu0 0.0
    %4758 = vmatprep.subr.mxu0 0.0
    %4759 = vmatpush1.msra.mxu0 0.0
    %4760 = vmatprep.subr.mxu0 0.0
    %4761 = vmatpush1.msra.mxu0 0.0
    %4762 = vmatprep.subr.mxu0 0.0
    %4763 = vmatpush1.msra.mxu0 0.0
    %4764 = vmatprep.subr.mxu0 0.0
    %4765 = vmatpush1.msra.mxu0 0.0
    %4766 = vmatprep.mubr.f32.mxu0 0.0
    %4767 = vmatmul.mubr.f32.gmra.mrb[0].mxu0 %v4480
    %v4768 = vpop.f32.mrb[0].mxu0
    %v4769 = vadd.f32 %v3059, %v4768
    %v4770 = vpop.f32.mrb[0].mxu0
    %4771 = vdwg.mxu0
    %4772 = vmatprep.subr.mxu0 0.0
    %4773 = vmatpush1.msra.mxu0 %v2712
    %4774 = vmatprep.subr.mxu0 0.0
    %4775 = vmatpush1.msra.mxu0 %v2713
    %4776 = vmatprep.subr.mxu0 0.0
    %4777 = vmatpush1.msra.mxu0 %v2714
    %4778 = vmatprep.subr.mxu0 0.0
    %4779 = vmatpush1.msra.mxu0 %v2715
    %4780 = vmatprep.subr.mxu0 0.0
    %4781 = vmatpush1.msra.mxu0 0.0
    %4782 = vmatprep.subr.mxu0 0.0
    %4783 = vmatpush1.msra.mxu0 0.0
    %4784 = vmatprep.subr.mxu0 0.0
    %4785 = vmatpush1.msra.mxu0 0.0
    %4786 = vmatprep.subr.mxu0 0.0
    %4787 = vmatpush1.msra.mxu0 0.0
    %4788 = vmatprep.subr.mxu0 0.0
    %4789 = vmatpush1.msra.mxu0 0.0
    %4790 = vmatprep.subr.mxu0 0.0
    %4791 = vmatpush1.msra.mxu0 0.0
    %4792 = vmatprep.subr.mxu0 0.0
    %4793 = vmatpush1.msra.mxu0 0.0
    %4794 = vmatprep.subr.mxu0 0.0
    %4795 = vmatpush1.msra.mxu0 0.0
    %4796 = vmatprep.subr.mxu0 0.0
    %4797 = vmatpush1.msra.mxu0 0.0
    %4798 = vmatprep.subr.mxu0 0.0
    %4799 = vmatpush1.msra.mxu0 0.0
    %4800 = vmatprep.subr.mxu0 0.0
    %4801 = vmatpush1.msra.mxu0 0.0
    %4802 = vmatprep.subr.mxu0 0.0
    %4803 = vmatpush1.msra.mxu0 0.0
    %4804 = vmatprep.subr.mxu0 0.0
    %4805 = vmatpush1.msra.mxu0 0.0
    %4806 = vmatprep.subr.mxu0 0.0
    %4807 = vmatpush1.msra.mxu0 0.0
    %4808 = vmatprep.subr.mxu0 0.0
    %4809 = vmatpush1.msra.mxu0 0.0
    %4810 = vmatprep.subr.mxu0 0.0
    %4811 = vmatpush1.msra.mxu0 0.0
    %4812 = vmatprep.subr.mxu0 0.0
    %4813 = vmatpush1.msra.mxu0 0.0
    %4814 = vmatprep.subr.mxu0 0.0
    %4815 = vmatpush1.msra.mxu0 0.0
    %4816 = vmatprep.subr.mxu0 0.0
    %4817 = vmatpush1.msra.mxu0 0.0
    %4818 = vmatprep.subr.mxu0 0.0
    %4819 = vmatpush1.msra.mxu0 0.0
    %4820 = vmatprep.subr.mxu0 0.0
    %4821 = vmatpush1.msra.mxu0 0.0
    %4822 = vmatprep.subr.mxu0 0.0
    %4823 = vmatpush1.msra.mxu0 0.0
    %4824 = vmatprep.subr.mxu0 0.0
    %4825 = vmatpush1.msra.mxu0 0.0
    %4826 = vmatprep.subr.mxu0 0.0
    %4827 = vmatpush1.msra.mxu0 0.0
    %4828 = vmatprep.subr.mxu0 0.0
    %4829 = vmatpush1.msra.mxu0 0.0
    %4830 = vmatprep.subr.mxu0 0.0
    %4831 = vmatpush1.msra.mxu0 0.0
    %4832 = vmatprep.subr.mxu0 0.0
    %4833 = vmatpush1.msra.mxu0 0.0
    %4834 = vmatprep.subr.mxu0 0.0
    %4835 = vmatpush1.msra.mxu0 0.0
    %4836 = vmatprep.mubr.f32.mxu0 0.0
    %4837 = vmatmul.mubr.f32.gmra.mrb[0].mxu0 %v4312
    %v4838 = vpop.f32.mrb[0].mxu0
    %v4839 = vadd.f32 %v3135, %v4838
    %v4840 = vpop.f32.mrb[0].mxu0
    %4841 = vdwg.mxu0
    %v4842 = vmul.f32 %v4556, %v4839
    %v4843 = vadd.f32 %v4769, %v4842
    %v4844 = vtanh.pop %v4843
    %v4845 = vsub.f32 %v4310, %v4844
    %v4846 = vmul.f32 %v4701, %v4845
    %v4847 = vadd.f32 %v4844, %v4846
    %v4849 = vsel %vm509, %v4847, 0
    %4851 = vmatprep.subr.mxu0 0.0
    %4852 = vmatpush1.msra.mxu0 %v2720
    %4853 = vmatprep.subr.mxu0 0.0
    %4854 = vmatpush1.msra.mxu0 %v2721
    %4855 = vmatprep.subr.mxu0 0.0
    %4856 = vmatpush1.msra.mxu0 %v2722
    %4857 = vmatprep.subr.mxu0 0.0
    %4858 = vmatpush1.msra.mxu0 %v2723
    %4859 = vmatprep.subr.mxu0 0.0
    %4860 = vmatpush1.msra.mxu0 0.0
    %4861 = vmatprep.subr.mxu0 0.0
    %4862 = vmatpush1.msra.mxu0 0.0
    %4863 = vmatprep.subr.mxu0 0.0
    %4864 = vmatpush1.msra.mxu0 0.0
    %4865 = vmatprep.subr.mxu0 0.0
    %4866 = vmatpush1.msra.mxu0 0.0
    %4867 = vmatprep.subr.mxu0 0.0
    %4868 = vmatpush1.msra.mxu0 0.0
    %4869 = vmatprep.subr.mxu0 0.0
    %4870 = vmatpush1.msra.mxu0 0.0
    %4871 = vmatprep.subr.mxu0 0.0
    %4872 = vmatpush1.msra.mxu0 0.0
    %4873 = vmatprep.subr.mxu0 0.0
    %4874 = vmatpush1.msra.mxu0 0.0
    %4875 = vmatprep.subr.mxu0 0.0
    %4876 = vmatpush1.msra.mxu0 0.0
    %4877 = vmatprep.subr.mxu0 0.0
    %4878 = vmatpush1.msra.mxu0 0.0
    %4879 = vmatprep.subr.mxu0 0.0
    %4880 = vmatpush1.msra.mxu0 0.0
    %4881 = vmatprep.subr.mxu0 0.0
    %4882 = vmatpush1.msra.mxu0 0.0
    %4883 = vmatprep.subr.mxu0 0.0
    %4884 = vmatpush1.msra.mxu0 0.0
    %4885 = vmatprep.subr.mxu0 0.0
    %4886 = vmatpush1.msra.mxu0 0.0
    %4887 = vmatprep.subr.mxu0 0.0
    %4888 = vmatpush1.msra.mxu0 0.0
    %4889 = vmatprep.subr.mxu0 0.0
    %4890 = vmatpush1.msra.mxu0 0.0
    %4891 = vmatprep.subr.mxu0 0.0
    %4892 = vmatpush1.msra.mxu0 0.0
    %4893 = vmatprep.subr.mxu0 0.0
    %4894 = vmatpush1.msra.mxu0 0.0
    %4895 = vmatprep.subr.mxu0 0.0
    %4896 = vmatpush1.msra.mxu0 0.0
    %4897 = vmatprep.subr.mxu0 0.0
    %4898 = vmatpush1.msra.mxu0 0.0
    %4899 = vmatprep.subr.mxu0 0.0
    %4900 = vmatpush1.msra.mxu0 0.0
    %4901 = vmatprep.subr.mxu0 0.0
    %4902 = vmatpush1.msra.mxu0 0.0
    %4903 = vmatprep.subr.mxu0 0.0
    %4904 = vmatpush1.msra.mxu0 0.0
    %4905 = vmatprep.subr.mxu0 0.0
    %4906 = vmatpush1.msra.mxu0 0.0
    %4907 = vmatprep.subr.mxu0 0.0
    %4908 = vmatpush1.msra.mxu0 0.0
    %4909 = vmatprep.subr.mxu0 0.0
    %4910 = vmatpush1.msra.mxu0 0.0
    %4911 = vmatprep.subr.mxu0 0.0
    %4912 = vmatpush1.msra.mxu0 0.0
    %4913 = vmatprep.subr.mxu0 0.0
    %4914 = vmatpush1.msra.mxu0 0.0
    %4915 = vmatprep.mubr.f32.mxu0 0.0
    %4916 = vmatmul.mubr.f32.gmra.mrb[0].mxu0 %v4849
    %v4917 = vpop.f32.mrb[0].mxu0
    %v4918 = vadd.f32 %v3229, %v4917
    %v4919 = vpop.f32.mrb[0].mxu0
    %4920 = vdwg.mxu0
    %v4921 = vmax.f32 %v4918, 0.0
    %4923 = vrot.lane.b32.xlu0 %v3847, 2
    %v4924 = vpop.permute.xlu0 %4923
    %4927 = vrot.lane.b32.xlu0 %v4384, 4
    %v4928 = vpop.permute.xlu0 %4927
    %4931 = vrot.lane.b32.xlu0 %v4921, 6
    %v4932 = vpop.permute.xlu0 %4931
    %vm4934 = vcmask 15360
    %v4935 = vsel %vm4934, %v3304, %v4924
    %v4936 = vsel %vm238, %v4935, %v4928
    %v4937 = vsel %vm3332, %v4936, %v4932
    %vm4938 = vcmask 58368
    %4939 = vst.msk [vmem:[#allocation24] sm:$0x3] %vm4938, %v4937
    // Predicated region
    $region146: #{tpu_custom_call.1} parent=1 // pred_check
      _
    $region147: #{tpu_custom_call.1} parent=1 // pred_check_branch
      %4941 = sbr.rel (0) target = $region149
    $region148: #{tpu_custom_call.1} parent=1 // pred_region
      %s4943 = ssub.s32 32, 32
      %4944 = vsyncadd [#allocation6], %s4943
      %s4946 = sshll.u32 [#allocation24], 4
      %s4947 = int_to_ptr.vmem [resolvable:$true] %s4946
      %4949 = dma.vmem_to_hbm [thread:$0]  %s4947, 32, %s25, [#allocation6]
    $region149: #{tpu_custom_call.1} parent=1 // pred_fallthru
      _
    // Predicated region
    $region150: #{tpu_custom_call.1} parent=1 // pred_check
      _
    $region151: #{tpu_custom_call.1} parent=1 // pred_check_branch
      %4951 = sbr.rel (0) target = $region153
    $region152: #{tpu_custom_call.1} parent=1 // pred_region
      %4952 = dma.done [#allocation6], 32
    $region153: #{tpu_custom_call.1} parent=1 // pred_fallthru
      _
    %4953 = vsyncpa [#allocation5], 1
    %4954 = vsyncpa [#allocation8], 1
    %4955 = vsyncpa [#allocation11], 1
    %4956 = vsyncpa [#allocation14], 1
    %4957 = vsyncpa [#allocation17], 1
    %4958 = vsyncpa [#allocation20], 1
    %4959 = vsyncpa [#allocation23], 1
    %4960 = vsyncpa [#allocation6], 1

</llo_original>
